<compile_context>
chip_gen: v5e
topology: v5e:2x2
jax: 0.10.0
libtpu: 0.0.40
codegen_flags: <defaults>
</compile_context>

<pallas_src>
import jax
import jax.numpy as jnp
from jax.experimental import pallas as pl
from jax.experimental.pallas import tpu as pltpu

NOISE_DIM = 100
DIGIT_DIM = 10
IN_PAD = 128           # 100 noise + 10 one-hot label + 18 zero lanes
H1, H2, H3, OUT = 256, 512, 1024, 784
OUT_PAD = 896          # 7 * 128: lane-dense output slab
BN_EPS = 1e-5


def _bn_relu(h):
    # BatchNorm1d (training mode, gamma=1/beta=0) collapsed to scale/shift,
    # then ReLU.  Stats in one pass: var = max(E[x^2] - E[x]^2, 0).
    mean = jnp.mean(h, axis=0, keepdims=True)
    ex2 = jnp.mean(h * h, axis=0, keepdims=True)
    var = jnp.maximum(ex2 - mean * mean, 0.0)
    a = jax.lax.rsqrt(var + BN_EPS)          # (1, N) per-feature scale
    c = -mean * a                            # (1, N) per-feature shift
    return jnp.maximum(h * a + c, 0.0)


def generator_kernel(
    x_ref,                       # (B, 128) bf16: [noise | labels | 0-pad]
    w1_ref, b1_ref,              # merged layer 1: (128, 256) bf16, (1, 256) f32
    w2_ref, b2_ref,              # Linear(256 -> 512)
    w3_ref, b3_ref,              # Linear(512 -> 1024)
    w4_ref, b4_ref,              # Linear(1024 -> 896 padded)
    out_ref,                     # (B, 896) f32
):
    bf16 = jnp.bfloat16

    h = jnp.dot(x_ref[...], w1_ref[...],
                preferred_element_type=jnp.float32) + b1_ref[...]
    h = _bn_relu(h)

    h = jnp.dot(h.astype(bf16), w2_ref[...],
                preferred_element_type=jnp.float32) + b2_ref[...]
    h = _bn_relu(h)

    h = jnp.dot(h.astype(bf16), w3_ref[...],
                preferred_element_type=jnp.float32) + b3_ref[...]
    h = _bn_relu(h)

    h = jnp.dot(h.astype(bf16), w4_ref[...],
                preferred_element_type=jnp.float32) + b4_ref[...]
    out_ref[...] = jnp.tanh(h)


# ------------------------------------------------------------------ params --

def init_params_f32(key):
    """Raw f32 parameters in the original (unfolded) PyTorch layout."""
    ks = jax.random.split(key, 5)
    scale = 0.02

    def lin(k, fan_in, fan_out):
        kw, kb = jax.random.split(k)
        w = scale * jax.random.normal(kw, (fan_in, fan_out), jnp.float32)
        b = scale * jax.random.normal(kb, (1, fan_out), jnp.float32)
        return w, b

    we, be = lin(ks[0], DIGIT_DIM, NOISE_DIM)
    w1, b1 = lin(ks[1], 2 * NOISE_DIM, H1)
    w2, b2 = lin(ks[2], H1, H2)
    w3, b3 = lin(ks[3], H2, H3)
    w4, b4 = lin(ks[4], H3, OUT)
    return dict(we=we, be=be, w1=w1, b1=b1, w2=w2, b2=b2,
                w3=w3, b3=b3, w4=w4, b4=b4)


def pack_params(p):
    """Fold the embedding into a single 128-row layer-1 weight, pad the last
    layer to 896 lanes, cast all weights to bf16 (biases stay f32)."""
    bf16 = jnp.bfloat16
    w1a = p["w1"][:NOISE_DIM]          # acts on noise            (100, 256)
    w1b = p["w1"][NOISE_DIM:]          # acts on label embedding  (100, 256)
    wlbl = p["we"] @ w1b               # embedding folded in       (10, 256)
    b1f = p["be"] @ w1b + p["b1"]      # folded bias                (1, 256)

    # one stacked, lane-padded layer-1 weight: [w1a ; wlbl ; zeros]
    w1 = jnp.zeros((IN_PAD, H1), jnp.float32)
    w1 = w1.at[:NOISE_DIM].set(w1a)
    w1 = w1.at[NOISE_DIM:NOISE_DIM + DIGIT_DIM].set(wlbl)

    # lane-pad the output layer 784 -> 896 with zero columns
    w4p = jnp.zeros((H3, OUT_PAD), jnp.float32).at[:, :OUT].set(p["w4"])
    b4p = jnp.zeros((1, OUT_PAD), jnp.float32).at[:, :OUT].set(p["b4"])

    return (w1.astype(bf16), b1f,
            p["w2"].astype(bf16), p["b2"],
            p["w3"].astype(bf16), p["b3"],
            w4p.astype(bf16), b4p)


def pack_inputs(noise, labels):
    """Concatenate [noise, labels] and zero-pad to 128 lanes, bf16."""
    B = noise.shape[0]
    pad = jnp.zeros((B, IN_PAD - NOISE_DIM - DIGIT_DIM), noise.dtype)
    return jnp.concatenate([noise, labels, pad], axis=1).astype(jnp.bfloat16)


# ----------------------------------------------------------------- wrapper --

def generator_forward(noise, labels, packed):
    B = noise.shape[0]
    x = pack_inputs(noise, labels)
    vmem = pl.BlockSpec(memory_space=pltpu.MemorySpace.VMEM)

    flops = 2 * B * (IN_PAD * H1 + H1 * H2 + H2 * H3 + H3 * OUT_PAD)
    weight_bytes = 2 * (IN_PAD * H1 + H1 * H2 + H2 * H3 + H3 * OUT_PAD)  # bf16
    bias_bytes = 4 * (H1 + H2 + H3 + OUT_PAD)
    io_bytes = 2 * B * IN_PAD + 4 * B * OUT_PAD
    cost = pl.CostEstimate(
        flops=flops,
        transcendentals=B * OUT_PAD + (H1 + H2 + H3),
        bytes_accessed=weight_bytes + bias_bytes + io_bytes,
    )

    # Explicit VMEM budget (v5e's default scoped limit is only 16 MiB):
    # weights + biases + I/O + generous activation headroom, capped well below
    # v7x's 64 MiB physical VMEM.
    act_bytes = 4 * B * (H1 + H2 + H3 + 2 * OUT_PAD)
    vmem_limit = min((weight_bytes + bias_bytes + io_bytes + act_bytes) * 2
                     + (4 << 20), 48 << 20)

    out = pl.pallas_call(
        generator_kernel,
        out_shape=jax.ShapeDtypeStruct((B, OUT_PAD), jnp.float32),
        in_specs=[vmem] * (1 + len(packed)),
        out_specs=vmem,
        compiler_params=pltpu.CompilerParams(vmem_limit_bytes=vmem_limit),
        cost_estimate=cost,
    )(x, *packed)
    return out[:, :OUT].reshape(B, 1, 28, 28)


# -------------------------------------------------------------- references --

def generator_ref_f32(noise, labels, p):
    """Original module semantics, f32 end to end (PyTorch-equivalent math)."""
    def bn_relu(h):
        m = jnp.mean(h, axis=0, keepdims=True)
        v = jnp.mean((h - m) ** 2, axis=0, keepdims=True)
        return jnp.maximum((h - m) / jnp.sqrt(v + BN_EPS), 0.0)

    emb = labels @ p["we"] + p["be"]
    x = jnp.concatenate([noise, emb], axis=1)
    h = bn_relu(x @ p["w1"] + p["b1"])
    h = bn_relu(h @ p["w2"] + p["b2"])
    h = bn_relu(h @ p["w3"] + p["b3"])
    h = jnp.tanh(h @ p["w4"] + p["b4"])
    return h.reshape(-1, 1, 28, 28)


def generator_ref_bf16(noise, labels, packed):
    """Pure-JAX replica of the kernel's exact (bf16-weight, merged) math."""
    w1, b1, w2, b2, w3, b3, w4, b4 = packed
    bf16 = jnp.bfloat16
    x = pack_inputs(noise, labels)

    def bn_relu(h):
        m = jnp.mean(h, axis=0, keepdims=True)
        v = jnp.maximum(jnp.mean(h * h, axis=0, keepdims=True) - m * m, 0.0)
        a = jax.lax.rsqrt(v + BN_EPS)
        return jnp.maximum(h * a + (-m * a), 0.0)

    h = bn_relu(jnp.dot(x, w1, preferred_element_type=jnp.float32) + b1)
    h = bn_relu(jnp.dot(h.astype(bf16), w2,
                        preferred_element_type=jnp.float32) + b2)
    h = bn_relu(jnp.dot(h.astype(bf16), w3,
                        preferred_element_type=jnp.float32) + b3)
    h = jnp.tanh(jnp.dot(h.astype(bf16), w4,
                         preferred_element_type=jnp.float32) + b4)
    return h[:, :OUT].reshape(-1, 1, 28, 28)


# ------------------------------------------------------------------- main ---

if __name__ == "__main__":
    key = jax.random.PRNGKey(0)
    k_noise, k_lab, k_param = jax.random.split(key, 3)

    B = 8
    noise = jax.random.normal(k_noise, (B, NOISE_DIM), jnp.float32)
    digits = jax.random.randint(k_lab, (B,), 0, DIGIT_DIM)
    labels = jax.nn.one_hot(digits, DIGIT_DIM, dtype=jnp.float32)

    raw = init_params_f32(k_param)
    packed = pack_params(raw)

    img = generator_forward(noise, labels, packed)
    img = jax.block_until_ready(img)
    assert img.shape == (B, 1, 28, 28), img.shape

    # 1) strict check against a pure-JAX replica of the same bf16-weight math
    ref_bf16 = generator_ref_bf16(noise, labels, packed)
    err_bf16 = float(jnp.max(jnp.abs(img - ref_bf16)))
    assert jnp.allclose(img, ref_bf16, atol=1e-2, rtol=1e-2), err_bf16

    # 2) semantics check against the original f32 PyTorch-equivalent math
    #    (looser tolerance: only difference is bf16 weight/input quantization)
    ref_f32 = generator_ref_f32(noise, labels, raw)
    err_f32 = float(jnp.max(jnp.abs(img - ref_f32)))
    assert jnp.allclose(img, ref_f32, atol=1e-1, rtol=1e-1), err_f32

    print("KERNEL_OK")
</pallas_src>

<mosaic_0001>
module attributes {stable_mosaic.version = 11 : i64} {
  func.func @generator_kernel(%arg0: memref<8x128xbf16, #tpu.memory_space<vmem>>, %arg1: memref<128x256xbf16, #tpu.memory_space<vmem>>, %arg2: memref<1x256xf32, #tpu.memory_space<vmem>>, %arg3: memref<256x512xbf16, #tpu.memory_space<vmem>>, %arg4: memref<1x512xf32, #tpu.memory_space<vmem>>, %arg5: memref<512x1024xbf16, #tpu.memory_space<vmem>>, %arg6: memref<1x1024xf32, #tpu.memory_space<vmem>>, %arg7: memref<1024x896xbf16, #tpu.memory_space<vmem>>, %arg8: memref<1x896xf32, #tpu.memory_space<vmem>>, %arg9: memref<8x896xf32, #tpu.memory_space<vmem>>) attributes {dimension_semantics = [], scalar_prefetch = 0 : i64, scratch_operands = 0 : i64, tpu.core_type = #tpu.core_type<tc>} {
    %c0 = arith.constant 0 : index
    %c0_0 = arith.constant 0 : index
    %0 = vector.load %arg0[%c0, %c0_0] : memref<8x128xbf16, #tpu.memory_space<vmem>>, vector<8x128xbf16>
    %c0_1 = arith.constant 0 : index
    %c0_2 = arith.constant 0 : index
    %1 = vector.load %arg1[%c0_1, %c0_2] : memref<128x256xbf16, #tpu.memory_space<vmem>>, vector<128x256xbf16>
    %cst = arith.constant dense<0.000000e+00> : vector<8x256xf32>
    %2 = tpu.matmul %0, %1, %cst {dimension_numbers = #tpu.dot_dimension_numbers<[1], [0], [0], [1], [0, 0, 1, 1], [], []>} : vector<8x128xbf16>, vector<128x256xbf16>, vector<8x256xf32> -> vector<8x256xf32>
    %c0_3 = arith.constant 0 : index
    %c0_4 = arith.constant 0 : index
    %3 = vector.load %arg2[%c0_3, %c0_4] : memref<1x256xf32, #tpu.memory_space<vmem>>, vector<1x256xf32>
    %4 = vector.broadcast %3 : vector<1x256xf32> to vector<8x256xf32>
    %5 = arith.addf %2, %4 : vector<8x256xf32>
    %cst_5 = arith.constant dense<0.000000e+00> : vector<256xf32>
    %6 = vector.multi_reduction <add>, %5, %cst_5 [0] : vector<8x256xf32> to vector<256xf32>
    %7 = vector.shape_cast %6 : vector<256xf32> to vector<1x256xf32>
    %cst_6 = arith.constant 8.000000e+00 : f32
    %8 = vector.broadcast %cst_6 : f32 to vector<1x256xf32>
    %9 = arith.divf %7, %8 : vector<1x256xf32>
    %10 = arith.mulf %5, %5 : vector<8x256xf32>
    %cst_7 = arith.constant dense<0.000000e+00> : vector<256xf32>
    %11 = vector.multi_reduction <add>, %10, %cst_7 [0] : vector<8x256xf32> to vector<256xf32>
    %12 = vector.shape_cast %11 : vector<256xf32> to vector<1x256xf32>
    %cst_8 = arith.constant 8.000000e+00 : f32
    %13 = vector.broadcast %cst_8 : f32 to vector<1x256xf32>
    %14 = arith.divf %12, %13 : vector<1x256xf32>
    %15 = arith.mulf %9, %9 : vector<1x256xf32>
    %16 = arith.subf %14, %15 : vector<1x256xf32>
    %cst_9 = arith.constant 0.000000e+00 : f32
    %17 = vector.broadcast %cst_9 : f32 to vector<1x256xf32>
    %18 = arith.maximumf %16, %17 : vector<1x256xf32>
    %cst_10 = arith.constant 9.99999974E-6 : f32
    %19 = vector.broadcast %cst_10 : f32 to vector<1x256xf32>
    %20 = arith.addf %18, %19 : vector<1x256xf32>
    %21 = math.rsqrt %20 : vector<1x256xf32>
    %cst_11 = arith.constant 0.000000e+00 : f32
    %22 = vector.broadcast %cst_11 : f32 to vector<1x256xf32>
    %23 = arith.subf %22, %9 : vector<1x256xf32>
    %24 = arith.mulf %23, %21 : vector<1x256xf32>
    %25 = vector.broadcast %21 : vector<1x256xf32> to vector<8x256xf32>
    %26 = arith.mulf %5, %25 : vector<8x256xf32>
    %27 = vector.broadcast %24 : vector<1x256xf32> to vector<8x256xf32>
    %28 = arith.addf %26, %27 : vector<8x256xf32>
    %cst_12 = arith.constant 0.000000e+00 : f32
    %29 = vector.broadcast %cst_12 : f32 to vector<8x256xf32>
    %30 = arith.maximumf %28, %29 : vector<8x256xf32>
    %31 = arith.truncf %30 : vector<8x256xf32> to vector<8x256xbf16>
    %c0_13 = arith.constant 0 : index
    %c0_14 = arith.constant 0 : index
    %32 = vector.load %arg3[%c0_13, %c0_14] : memref<256x512xbf16, #tpu.memory_space<vmem>>, vector<256x512xbf16>
    %cst_15 = arith.constant dense<0.000000e+00> : vector<8x512xf32>
    %33 = tpu.matmul %31, %32, %cst_15 {dimension_numbers = #tpu.dot_dimension_numbers<[1], [0], [0], [1], [0, 0, 1, 1], [], []>} : vector<8x256xbf16>, vector<256x512xbf16>, vector<8x512xf32> -> vector<8x512xf32>
    %c0_16 = arith.constant 0 : index
    %c0_17 = arith.constant 0 : index
    %34 = vector.load %arg4[%c0_16, %c0_17] : memref<1x512xf32, #tpu.memory_space<vmem>>, vector<1x512xf32>
    %35 = vector.broadcast %34 : vector<1x512xf32> to vector<8x512xf32>
    %36 = arith.addf %33, %35 : vector<8x512xf32>
    %cst_18 = arith.constant dense<0.000000e+00> : vector<512xf32>
    %37 = vector.multi_reduction <add>, %36, %cst_18 [0] : vector<8x512xf32> to vector<512xf32>
    %38 = vector.shape_cast %37 : vector<512xf32> to vector<1x512xf32>
    %cst_19 = arith.constant 8.000000e+00 : f32
    %39 = vector.broadcast %cst_19 : f32 to vector<1x512xf32>
    %40 = arith.divf %38, %39 : vector<1x512xf32>
    %41 = arith.mulf %36, %36 : vector<8x512xf32>
    %cst_20 = arith.constant dense<0.000000e+00> : vector<512xf32>
    %42 = vector.multi_reduction <add>, %41, %cst_20 [0] : vector<8x512xf32> to vector<512xf32>
    %43 = vector.shape_cast %42 : vector<512xf32> to vector<1x512xf32>
    %cst_21 = arith.constant 8.000000e+00 : f32
    %44 = vector.broadcast %cst_21 : f32 to vector<1x512xf32>
    %45 = arith.divf %43, %44 : vector<1x512xf32>
    %46 = arith.mulf %40, %40 : vector<1x512xf32>
    %47 = arith.subf %45, %46 : vector<1x512xf32>
    %cst_22 = arith.constant 0.000000e+00 : f32
    %48 = vector.broadcast %cst_22 : f32 to vector<1x512xf32>
    %49 = arith.maximumf %47, %48 : vector<1x512xf32>
    %cst_23 = arith.constant 9.99999974E-6 : f32
    %50 = vector.broadcast %cst_23 : f32 to vector<1x512xf32>
    %51 = arith.addf %49, %50 : vector<1x512xf32>
    %52 = math.rsqrt %51 : vector<1x512xf32>
    %cst_24 = arith.constant 0.000000e+00 : f32
    %53 = vector.broadcast %cst_24 : f32 to vector<1x512xf32>
    %54 = arith.subf %53, %40 : vector<1x512xf32>
    %55 = arith.mulf %54, %52 : vector<1x512xf32>
    %56 = vector.broadcast %52 : vector<1x512xf32> to vector<8x512xf32>
    %57 = arith.mulf %36, %56 : vector<8x512xf32>
    %58 = vector.broadcast %55 : vector<1x512xf32> to vector<8x512xf32>
    %59 = arith.addf %57, %58 : vector<8x512xf32>
    %cst_25 = arith.constant 0.000000e+00 : f32
    %60 = vector.broadcast %cst_25 : f32 to vector<8x512xf32>
    %61 = arith.maximumf %59, %60 : vector<8x512xf32>
    %62 = arith.truncf %61 : vector<8x512xf32> to vector<8x512xbf16>
    %c0_26 = arith.constant 0 : index
    %c0_27 = arith.constant 0 : index
    %63 = vector.load %arg5[%c0_26, %c0_27] : memref<512x1024xbf16, #tpu.memory_space<vmem>>, vector<512x1024xbf16>
    %cst_28 = arith.constant dense<0.000000e+00> : vector<8x1024xf32>
    %64 = tpu.matmul %62, %63, %cst_28 {dimension_numbers = #tpu.dot_dimension_numbers<[1], [0], [0], [1], [0, 0, 1, 1], [], []>} : vector<8x512xbf16>, vector<512x1024xbf16>, vector<8x1024xf32> -> vector<8x1024xf32>
    %c0_29 = arith.constant 0 : index
    %c0_30 = arith.constant 0 : index
    %65 = vector.load %arg6[%c0_29, %c0_30] : memref<1x1024xf32, #tpu.memory_space<vmem>>, vector<1x1024xf32>
    %66 = vector.broadcast %65 : vector<1x1024xf32> to vector<8x1024xf32>
    %67 = arith.addf %64, %66 : vector<8x1024xf32>
    %cst_31 = arith.constant dense<0.000000e+00> : vector<1024xf32>
    %68 = vector.multi_reduction <add>, %67, %cst_31 [0] : vector<8x1024xf32> to vector<1024xf32>
    %69 = vector.shape_cast %68 : vector<1024xf32> to vector<1x1024xf32>
    %cst_32 = arith.constant 8.000000e+00 : f32
    %70 = vector.broadcast %cst_32 : f32 to vector<1x1024xf32>
    %71 = arith.divf %69, %70 : vector<1x1024xf32>
    %72 = arith.mulf %67, %67 : vector<8x1024xf32>
    %cst_33 = arith.constant dense<0.000000e+00> : vector<1024xf32>
    %73 = vector.multi_reduction <add>, %72, %cst_33 [0] : vector<8x1024xf32> to vector<1024xf32>
    %74 = vector.shape_cast %73 : vector<1024xf32> to vector<1x1024xf32>
    %cst_34 = arith.constant 8.000000e+00 : f32
    %75 = vector.broadcast %cst_34 : f32 to vector<1x1024xf32>
    %76 = arith.divf %74, %75 : vector<1x1024xf32>
    %77 = arith.mulf %71, %71 : vector<1x1024xf32>
    %78 = arith.subf %76, %77 : vector<1x1024xf32>
    %cst_35 = arith.constant 0.000000e+00 : f32
    %79 = vector.broadcast %cst_35 : f32 to vector<1x1024xf32>
    %80 = arith.maximumf %78, %79 : vector<1x1024xf32>
    %cst_36 = arith.constant 9.99999974E-6 : f32
    %81 = vector.broadcast %cst_36 : f32 to vector<1x1024xf32>
    %82 = arith.addf %80, %81 : vector<1x1024xf32>
    %83 = math.rsqrt %82 : vector<1x1024xf32>
    %cst_37 = arith.constant 0.000000e+00 : f32
    %84 = vector.broadcast %cst_37 : f32 to vector<1x1024xf32>
    %85 = arith.subf %84, %71 : vector<1x1024xf32>
    %86 = arith.mulf %85, %83 : vector<1x1024xf32>
    %87 = vector.broadcast %83 : vector<1x1024xf32> to vector<8x1024xf32>
    %88 = arith.mulf %67, %87 : vector<8x1024xf32>
    %89 = vector.broadcast %86 : vector<1x1024xf32> to vector<8x1024xf32>
    %90 = arith.addf %88, %89 : vector<8x1024xf32>
    %cst_38 = arith.constant 0.000000e+00 : f32
    %91 = vector.broadcast %cst_38 : f32 to vector<8x1024xf32>
    %92 = arith.maximumf %90, %91 : vector<8x1024xf32>
    %93 = arith.truncf %92 : vector<8x1024xf32> to vector<8x1024xbf16>
    %c0_39 = arith.constant 0 : index
    %c0_40 = arith.constant 0 : index
    %94 = vector.load %arg7[%c0_39, %c0_40] : memref<1024x896xbf16, #tpu.memory_space<vmem>>, vector<1024x896xbf16>
    %cst_41 = arith.constant dense<0.000000e+00> : vector<8x896xf32>
    %95 = tpu.matmul %93, %94, %cst_41 {dimension_numbers = #tpu.dot_dimension_numbers<[1], [0], [0], [1], [0, 0, 1, 1], [], []>} : vector<8x1024xbf16>, vector<1024x896xbf16>, vector<8x896xf32> -> vector<8x896xf32>
    %c0_42 = arith.constant 0 : index
    %c0_43 = arith.constant 0 : index
    %96 = vector.load %arg8[%c0_42, %c0_43] : memref<1x896xf32, #tpu.memory_space<vmem>>, vector<1x896xf32>
    %97 = vector.broadcast %96 : vector<1x896xf32> to vector<8x896xf32>
    %98 = arith.addf %95, %97 : vector<8x896xf32>
    %99 = math.tanh %98 : vector<8x896xf32>
    %c0_44 = arith.constant 0 : index
    %c0_45 = arith.constant 0 : index
    %100 = vector.load %arg9[%c0_44, %c0_45] : memref<8x896xf32, #tpu.memory_space<vmem>>, vector<8x896xf32>
    tpu.vector_store %arg9[%c0_44, %c0_45], %99 {strides = array<i32>} : memref<8x896xf32, #tpu.memory_space<vmem>>, vector<8x896xf32>,
    return
  }
}

</mosaic_0001>

<llo_original>
// kernel: tpu_custom_call.1
$region0: #{tpu_custom_call.1}
  #allocation0 [shape = 'u32[]', space=smem, size = 0x4, offset = 0x4, fixed_abs, tag = 'smem constant byte address 0x4 - core index']
  #allocation1 [shape = 'u32[72,128]{1,0:T(1,128)}', space=vmem, size = 0x9000, scoped, tag = 'internal scratch']
  %s0 = inlined_call_operand.hbm [shape: bf16[8,128], index: 0, kind: input, shape index: {}]
  %s1 = inlined_call_operand.hbm [shape: bf16[128,256], index: 1, kind: input, shape index: {}]
  %s2 = inlined_call_operand.hbm [shape: f32[1,256], index: 2, kind: input, shape index: {}]
  %s3 = inlined_call_operand.hbm [shape: bf16[256,512], index: 3, kind: input, shape index: {}]
  %s4 = inlined_call_operand.hbm [shape: f32[1,512], index: 4, kind: input, shape index: {}]
  %s5 = inlined_call_operand.hbm [shape: bf16[512,1024], index: 5, kind: input, shape index: {}]
  %s6 = inlined_call_operand.hbm [shape: f32[1,1024], index: 6, kind: input, shape index: {}]
  %s7 = inlined_call_operand.hbm [shape: bf16[1024,896], index: 7, kind: input, shape index: {}]
  %s8 = inlined_call_operand.hbm [shape: f32[1,896], index: 8, kind: input, shape index: {}]
  %s9 = inlined_call_operand.hbm [shape: f32[8,896], index: 9, kind: output, shape index: {}]
  %s10 = sld [smem:[#allocation0]]
  $region82: #{tpu_custom_call.1} parent=0
    _
  %s12 = ssub.s32 1, %s10
  %s13 = scalar_select 0, %s12, %s10
  $region1: #{tpu_custom_call.1} parent=0
    #allocation2 [shape = 'u8[2048]{0}', space=vmem, size = 0x800, scoped, tag = 'input window, operand 0, single buffered']
    #allocation3 [shape = 's32[1]{0}', space=sflag, size = 0x4, scoped, tag = 'scoped memory for tpu_custom_call.1']
    #allocation4 [shape = 's32[1]{0}', space=sflag, size = 0x4, scoped, tag = 'scoped memory for tpu_custom_call.1']
    #allocation5 [shape = 'u8[65536]{0}', space=vmem, size = 0x10000, scoped, tag = 'input window, operand 1, single buffered']
    #allocation6 [shape = 's32[1]{0}', space=sflag, size = 0x4, scoped, tag = 'scoped memory for tpu_custom_call.1']
    #allocation7 [shape = 'u8[1024]{0}', space=vmem, size = 0x400, scoped, tag = 'input window, operand 2, single buffered']
    #allocation8 [shape = 'u8[262144]{0}', space=vmem, size = 0x40000, scoped, tag = 'input window, operand 3, single buffered']
    #allocation9 [shape = 's32[1]{0}', space=sflag, size = 0x4, scoped, tag = 'scoped memory for tpu_custom_call.1']
    #allocation10 [shape = 'u8[2048]{0}', space=vmem, size = 0x800, scoped, tag = 'input window, operand 4, single buffered']
    #allocation11 [shape = 'u8[1048576]{0}', space=vmem, size = 0x100000, scoped, tag = 'input window, operand 5, single buffered']
    #allocation12 [shape = 's32[1]{0}', space=sflag, size = 0x4, scoped, tag = 'scoped memory for tpu_custom_call.1']
    #allocation13 [shape = 'u8[4096]{0}', space=vmem, size = 0x1000, scoped, tag = 'input window, operand 6, single buffered']
    #allocation14 [shape = 'u8[1835008]{0}', space=vmem, size = 0x1c0000, scoped, tag = 'input window, operand 7, single buffered']
    #allocation15 [shape = 's32[1]{0}', space=sflag, size = 0x4, scoped, tag = 'scoped memory for tpu_custom_call.1']
    #allocation16 [shape = 'u8[3584]{0}', space=vmem, size = 0x1000, scoped, tag = 'input window, operand 8, single buffered']
    #allocation17 [shape = 'u8[28672]{0}', space=vmem, size = 0x7000, scoped, tag = 'output window, operand 0, single buffered']
    %14 = vsyncpa [#allocation3], 0
    %15 = vsyncpa [#allocation6], 0
    %16 = vsyncpa [#allocation9], 0
    %17 = vsyncpa [#allocation12], 0
    %18 = vsyncpa [#allocation15], 0
    %19 = vsyncpa [#allocation4], 0
    // Predicated region
    $region2: #{tpu_custom_call.1} parent=1 // pred_check
      _
    $region3: #{tpu_custom_call.1} parent=1 // pred_check_branch
      %21 = sbr.rel (0) target = $region5
    $region4: #{tpu_custom_call.1} parent=1 // pred_region
      %23 = vsyncadd [#allocation3], 0
      %s25 = sshll.u32 %s0, 4
      %s26 = int_to_ptr.hbm [resolvable:$true] %s25
      %s27 = sshll.u32 [#allocation2], 4
      %s28 = int_to_ptr.vmem [resolvable:$true] %s27
      %30 = dma.hbm_to_vmem [thread:$0]  %s26, 64, %s28, [#allocation3]
    $region5: #{tpu_custom_call.1} parent=1 // pred_fallthru
      _
    // Predicated region
    $region6: #{tpu_custom_call.1} parent=1 // pred_check
      _
    $region7: #{tpu_custom_call.1} parent=1 // pred_check_branch
      %32 = sbr.rel (0) target = $region9
    $region8: #{tpu_custom_call.1} parent=1 // pred_region
      %34 = vsyncadd [#allocation6], 0
      %s35 = sshll.u32 %s1, 4
      %s36 = int_to_ptr.hbm [resolvable:$true] %s35
      %s37 = sshll.u32 [#allocation5], 4
      %s38 = int_to_ptr.vmem [resolvable:$true] %s37
      %43 = dma.hbm_to_vmem [thread:$0]  %s36, 2048, %s38, [#allocation6], 128, 128, 8
    $region9: #{tpu_custom_call.1} parent=1 // pred_fallthru
      _
    // Predicated region
    $region10: #{tpu_custom_call.1} parent=1 // pred_check
      _
    $region11: #{tpu_custom_call.1} parent=1 // pred_check_branch
      %45 = sbr.rel (0) target = $region13
    $region12: #{tpu_custom_call.1} parent=1 // pred_region
      %47 = vsyncadd [#allocation6], 0
      %s49 = sshll.u32 %s2, 4
      %s50 = int_to_ptr.hbm [resolvable:$true] %s49
      %s51 = sshll.u32 [#allocation7], 4
      %s52 = int_to_ptr.vmem [resolvable:$true] %s51
      %54 = dma.hbm_to_vmem [thread:$0]  %s50, 32, %s52, [#allocation6]
    $region13: #{tpu_custom_call.1} parent=1 // pred_fallthru
      _
    // Predicated region
    $region14: #{tpu_custom_call.1} parent=1 // pred_check
      _
    $region15: #{tpu_custom_call.1} parent=1 // pred_check_branch
      %56 = sbr.rel (0) target = $region17
    $region16: #{tpu_custom_call.1} parent=1 // pred_region
      %58 = vsyncadd [#allocation9], 0
      %s59 = sshll.u32 %s3, 4
      %s60 = int_to_ptr.hbm [resolvable:$true] %s59
      %s61 = sshll.u32 [#allocation8], 4
      %s62 = int_to_ptr.vmem [resolvable:$true] %s61
      %67 = dma.hbm_to_vmem [thread:$0]  %s60, 8192, %s62, [#allocation9], 256, 256, 16
    $region17: #{tpu_custom_call.1} parent=1 // pred_fallthru
      _
    // Predicated region
    $region18: #{tpu_custom_call.1} parent=1 // pred_check
      _
    $region19: #{tpu_custom_call.1} parent=1 // pred_check_branch
      %69 = sbr.rel (0) target = $region21
    $region20: #{tpu_custom_call.1} parent=1 // pred_region
      %71 = vsyncadd [#allocation9], 0
      %s73 = sshll.u32 %s4, 4
      %s74 = int_to_ptr.hbm [resolvable:$true] %s73
      %s75 = sshll.u32 [#allocation10], 4
      %s76 = int_to_ptr.vmem [resolvable:$true] %s75
      %78 = dma.hbm_to_vmem [thread:$0]  %s74, 64, %s76, [#allocation9]
    $region21: #{tpu_custom_call.1} parent=1 // pred_fallthru
      _
    // Predicated region
    $region22: #{tpu_custom_call.1} parent=1 // pred_check
      _
    $region23: #{tpu_custom_call.1} parent=1 // pred_check_branch
      %80 = sbr.rel (0) target = $region25
    $region24: #{tpu_custom_call.1} parent=1 // pred_region
      %82 = vsyncadd [#allocation12], 0
      %s83 = sshll.u32 %s5, 4
      %s84 = int_to_ptr.hbm [resolvable:$true] %s83
      %s85 = sshll.u32 [#allocation11], 4
      %s86 = int_to_ptr.vmem [resolvable:$true] %s85
      %91 = dma.hbm_to_vmem [thread:$0]  %s84, 32768, %s86, [#allocation12], 512, 512, 32
    $region25: #{tpu_custom_call.1} parent=1 // pred_fallthru
      _
    // Predicated region
    $region26: #{tpu_custom_call.1} parent=1 // pred_check
      _
    $region27: #{tpu_custom_call.1} parent=1 // pred_check_branch
      %93 = sbr.rel (0) target = $region29
    $region28: #{tpu_custom_call.1} parent=1 // pred_region
      %95 = vsyncadd [#allocation12], 0
      %s97 = sshll.u32 %s6, 4
      %s98 = int_to_ptr.hbm [resolvable:$true] %s97
      %s99 = sshll.u32 [#allocation13], 4
      %s100 = int_to_ptr.vmem [resolvable:$true] %s99
      %102 = dma.hbm_to_vmem [thread:$0]  %s98, 128, %s100, [#allocation12]
    $region29: #{tpu_custom_call.1} parent=1 // pred_fallthru
      _
    // Predicated region
    $region30: #{tpu_custom_call.1} parent=1 // pred_check
      _
    $region31: #{tpu_custom_call.1} parent=1 // pred_check_branch
      %104 = sbr.rel (0) target = $region33
    $region32: #{tpu_custom_call.1} parent=1 // pred_region
      %106 = vsyncadd [#allocation15], 0
      %s107 = sshll.u32 %s7, 4
      %s108 = int_to_ptr.hbm [resolvable:$true] %s107
      %s109 = sshll.u32 [#allocation14], 4
      %s110 = int_to_ptr.vmem [resolvable:$true] %s109
      %115 = dma.hbm_to_vmem [thread:$0]  %s108, 57344, %s110, [#allocation15], 448, 448, 28
    $region33: #{tpu_custom_call.1} parent=1 // pred_fallthru
      _
    // Predicated region
    $region34: #{tpu_custom_call.1} parent=1 // pred_check
      _
    $region35: #{tpu_custom_call.1} parent=1 // pred_check_branch
      %117 = sbr.rel (0) target = $region37
    $region36: #{tpu_custom_call.1} parent=1 // pred_region
      %119 = vsyncadd [#allocation15], 0
      %s121 = sshll.u32 %s8, 4
      %s122 = int_to_ptr.hbm [resolvable:$true] %s121
      %s123 = sshll.u32 [#allocation16], 4
      %s124 = int_to_ptr.vmem [resolvable:$true] %s123
      %126 = dma.hbm_to_vmem [thread:$0]  %s122, 112, %s124, [#allocation15]
    $region37: #{tpu_custom_call.1} parent=1 // pred_fallthru
      _
    // Predicated region
    $region38: #{tpu_custom_call.1} parent=1 // pred_check
      _
    $region39: #{tpu_custom_call.1} parent=1 // pred_check_branch
      %128 = sbr.rel (0) target = $region41
    $region40: #{tpu_custom_call.1} parent=1 // pred_region
      %130 = dma.done [#allocation3], 64
    $region41: #{tpu_custom_call.1} parent=1 // pred_fallthru
      _
    // Predicated region
    $region42: #{tpu_custom_call.1} parent=1 // pred_check
      _
    $region43: #{tpu_custom_call.1} parent=1 // pred_check_branch
      %132 = sbr.rel (0) target = $region45
    $region44: #{tpu_custom_call.1} parent=1 // pred_region
      %134 = dma.done [#allocation6], 2048
    $region45: #{tpu_custom_call.1} parent=1 // pred_fallthru
      _
    // Predicated region
    $region46: #{tpu_custom_call.1} parent=1 // pred_check
      _
    $region47: #{tpu_custom_call.1} parent=1 // pred_check_branch
      %136 = sbr.rel (0) target = $region49
    $region48: #{tpu_custom_call.1} parent=1 // pred_region
      %138 = dma.done [#allocation6], 32
    $region49: #{tpu_custom_call.1} parent=1 // pred_fallthru
      _
    // Predicated region
    $region50: #{tpu_custom_call.1} parent=1 // pred_check
      _
    $region51: #{tpu_custom_call.1} parent=1 // pred_check_branch
      %140 = sbr.rel (0) target = $region53
    $region52: #{tpu_custom_call.1} parent=1 // pred_region
      %142 = dma.done [#allocation9], 8192
    $region53: #{tpu_custom_call.1} parent=1 // pred_fallthru
      _
    // Predicated region
    $region54: #{tpu_custom_call.1} parent=1 // pred_check
      _
    $region55: #{tpu_custom_call.1} parent=1 // pred_check_branch
      %144 = sbr.rel (0) target = $region57
    $region56: #{tpu_custom_call.1} parent=1 // pred_region
      %146 = dma.done [#allocation9], 64
    $region57: #{tpu_custom_call.1} parent=1 // pred_fallthru
      _
    // Predicated region
    $region58: #{tpu_custom_call.1} parent=1 // pred_check
      _
    $region59: #{tpu_custom_call.1} parent=1 // pred_check_branch
      %148 = sbr.rel (0) target = $region61
    $region60: #{tpu_custom_call.1} parent=1 // pred_region
      %150 = dma.done [#allocation12], 32768
    $region61: #{tpu_custom_call.1} parent=1 // pred_fallthru
      _
    // Predicated region
    $region62: #{tpu_custom_call.1} parent=1 // pred_check
      _
    $region63: #{tpu_custom_call.1} parent=1 // pred_check_branch
      %152 = sbr.rel (0) target = $region65
    $region64: #{tpu_custom_call.1} parent=1 // pred_region
      %154 = dma.done [#allocation12], 128
    $region65: #{tpu_custom_call.1} parent=1 // pred_fallthru
      _
    // Predicated region
    $region66: #{tpu_custom_call.1} parent=1 // pred_check
      _
    $region67: #{tpu_custom_call.1} parent=1 // pred_check_branch
      %156 = sbr.rel (0) target = $region69
    $region68: #{tpu_custom_call.1} parent=1 // pred_region
      %158 = dma.done [#allocation15], 57344
    $region69: #{tpu_custom_call.1} parent=1 // pred_fallthru
      _
    // Predicated region
    $region70: #{tpu_custom_call.1} parent=1 // pred_check
      _
    $region71: #{tpu_custom_call.1} parent=1 // pred_check_branch
      %160 = sbr.rel (0) target = $region73
    $region72: #{tpu_custom_call.1} parent=1 // pred_region
      %162 = dma.done [#allocation15], 112
    $region73: #{tpu_custom_call.1} parent=1 // pred_fallthru
      _
    %v163 = vld [vmem:[#allocation2] sm:$0xf]
    %v164 = vld [vmem:[#allocation5] sm:$0xff]
    %v165 = vld [vmem:[#allocation5 + $0x8] sm:$0xff]
    %v166 = vld [vmem:[#allocation5 + $0x10] sm:$0xff]
    %v167 = vld [vmem:[#allocation5 + $0x18] sm:$0xff]
    %v168 = vld [vmem:[#allocation5 + $0x20] sm:$0xff]
    %v169 = vld [vmem:[#allocation5 + $0x28] sm:$0xff]
    %v170 = vld [vmem:[#allocation5 + $0x30] sm:$0xff]
    %v171 = vld [vmem:[#allocation5 + $0x38] sm:$0xff]
    %v172 = vld [vmem:[#allocation5 + $0x40] sm:$0xff]
    %v173 = vld [vmem:[#allocation5 + $0x48] sm:$0xff]
    %v174 = vld [vmem:[#allocation5 + $0x50] sm:$0xff]
    %v175 = vld [vmem:[#allocation5 + $0x58] sm:$0xff]
    %v176 = vld [vmem:[#allocation5 + $0x60] sm:$0xff]
    %v177 = vld [vmem:[#allocation5 + $0x68] sm:$0xff]
    %v178 = vld [vmem:[#allocation5 + $0x70] sm:$0xff]
    %v179 = vld [vmem:[#allocation5 + $0x78] sm:$0xff]
    %v180 = vld [vmem:[#allocation7] sm:$0x3]
    %v182 = vperm.slane %v180, 0
    %v183 = vperm.slane %v180, 1
    %v202 = vunpack.c.l.b16 %v164
    %v203 = vunpack.c.h.b16 %v164
    %v204 = vunpack.c.l.b16 %v165
    %v205 = vunpack.c.h.b16 %v165
    %v206 = vunpack.c.l.b16 %v166
    %v207 = vunpack.c.h.b16 %v166
    %v208 = vunpack.c.l.b16 %v167
    %v209 = vunpack.c.h.b16 %v167
    %v210 = vunpack.c.l.b16 %v168
    %v211 = vunpack.c.h.b16 %v168
    %v212 = vunpack.c.l.b16 %v169
    %v213 = vunpack.c.h.b16 %v169
    %v214 = vunpack.c.l.b16 %v170
    %v215 = vunpack.c.h.b16 %v170
    %v216 = vunpack.c.l.b16 %v171
    %v217 = vunpack.c.h.b16 %v171
    %v218 = vunpack.c.l.b16 %v172
    %v219 = vunpack.c.h.b16 %v172
    %v220 = vunpack.c.l.b16 %v173
    %v221 = vunpack.c.h.b16 %v173
    %v222 = vunpack.c.l.b16 %v174
    %v223 = vunpack.c.h.b16 %v174
    %v224 = vunpack.c.l.b16 %v175
    %v225 = vunpack.c.h.b16 %v175
    %v226 = vunpack.c.l.b16 %v176
    %v227 = vunpack.c.h.b16 %v176
    %v228 = vunpack.c.l.b16 %v177
    %v229 = vunpack.c.h.b16 %v177
    %v230 = vunpack.c.l.b16 %v178
    %v231 = vunpack.c.h.b16 %v178
    %v232 = vunpack.c.l.b16 %v179
    %v233 = vunpack.c.h.b16 %v179
    %v234 = vpack.c.b16 %v204, %v202
    %v235 = vpack.c.b16 %v205, %v203
    %v236 = vpack.c.b16 %v208, %v206
    %v237 = vpack.c.b16 %v209, %v207
    %v238 = vpack.c.b16 %v212, %v210
    %v239 = vpack.c.b16 %v213, %v211
    %v240 = vpack.c.b16 %v216, %v214
    %v241 = vpack.c.b16 %v217, %v215
    %v242 = vpack.c.b16 %v220, %v218
    %v243 = vpack.c.b16 %v221, %v219
    %v244 = vpack.c.b16 %v224, %v222
    %v245 = vpack.c.b16 %v225, %v223
    %v246 = vpack.c.b16 %v228, %v226
    %v247 = vpack.c.b16 %v229, %v227
    %v248 = vpack.c.b16 %v232, %v230
    %v249 = vpack.c.b16 %v233, %v231
    %266 = vmatpush.bf16.msra.mxu0 %v248
    %267 = vmatpush.bf16.msra.mxu0 %v246
    %268 = vmatpush.bf16.msra.mxu0 %v244
    %269 = vmatpush.bf16.msra.mxu0 %v242
    %270 = vmatpush.bf16.msra.mxu0 %v240
    %271 = vmatpush.bf16.msra.mxu0 %v238
    %272 = vmatpush.bf16.msra.mxu0 %v236
    %273 = vmatpush.bf16.msra.mxu0 %v234
    %274 = vmatmul.bf16.gmra.mxu0 %v163
    %v275 = vpop.f32.mrf.mxu0
    %v276 = vadd.f32 %v182, %v275
    %v277 = vpop.f32.mrf.mxu0
    %278 = vdwg.mxu0
    %279 = vmatpush.bf16.msra.mxu0 %v249
    %280 = vmatpush.bf16.msra.mxu0 %v247
    %281 = vmatpush.bf16.msra.mxu0 %v245
    %282 = vmatpush.bf16.msra.mxu0 %v243
    %283 = vmatpush.bf16.msra.mxu0 %v241
    %284 = vmatpush.bf16.msra.mxu0 %v239
    %285 = vmatpush.bf16.msra.mxu0 %v237
    %286 = vmatpush.bf16.msra.mxu0 %v235
    %287 = vmatmul.bf16.gmra.mxu0 %v163
    %v288 = vpop.f32.mrf.mxu0
    %v289 = vadd.f32 %v183, %v288
    %v290 = vpop.f32.mrf.mxu0
    %291 = vdwg.mxu0
    %v292 = vrot.slane %v276, 4
    %v293 = vadd.f32 %v276, %v292
    %v294 = vrot.slane %v293, 2
    %v295 = vadd.f32 %v293, %v294
    %v296 = vrot.slane %v295, 1
    %v297 = vadd.f32 %v295, %v296
    %v298 = vrot.slane %v289, 4
    %v299 = vadd.f32 %v289, %v298
    %v300 = vrot.slane %v299, 2
    %v301 = vadd.f32 %v299, %v300
    %v302 = vrot.slane %v301, 1
    %v303 = vadd.f32 %v301, %v302
    %v304 = vrcp.pop 8.0
    %v305 = vmul.f32 8.0, %v304
    %v306 = vsub.f32 1.0, %v305
    %v307 = vmul.f32 %v304, %v306
    %v308 = vadd.f32 %v304, %v307
    %vm309 = vweird.f32 %v304
    %v310 = vsel %vm309, %v304, %v308
    %v311 = vmul.f32 %v297, %v310
    %v312 = vmul.f32 %v303, %v310
    %v313 = vmul.f32 %v276, %v276
    %v314 = vmul.f32 %v289, %v289
    %v315 = vrot.slane %v313, 4
    %v316 = vadd.f32 %v313, %v315
    %v317 = vrot.slane %v316, 2
    %v318 = vadd.f32 %v316, %v317
    %v319 = vrot.slane %v318, 1
    %v320 = vadd.f32 %v318, %v319
    %v321 = vrot.slane %v314, 4
    %v322 = vadd.f32 %v314, %v321
    %v323 = vrot.slane %v322, 2
    %v324 = vadd.f32 %v322, %v323
    %v325 = vrot.slane %v324, 1
    %v326 = vadd.f32 %v324, %v325
    %v327 = vmul.f32 %v320, %v310
    %v328 = vmul.f32 %v326, %v310
    %v329 = vmul.f32 %v311, %v311
    %v330 = vmul.f32 %v312, %v312
    %v331 = vsub.f32 %v327, %v329
    %v332 = vsub.f32 %v328, %v330
    %v333 = vmax.f32 %v331, 0.0
    %v334 = vmax.f32 %v332, 0.0
    %v335 = vadd.f32 %v333, 1e-05
    %v336 = vadd.f32 %v334, 1e-05
    %v337 = vrsqrt.pop %v335
    %v338 = vmul.f32 %v337, %v335
    %v339 = vmul.f32 %v338, %v337
    %v340 = vmul.f32 0.5, %v339
    %v341 = vsub.f32 1.5, %v340
    %v342 = vmul.f32 %v337, %v341
    %vm343 = vweird.f32 %v335
    %vm344 = vweird.f32 %v337
    %vm345 = vmor %vm343, %vm344
    %v346 = vsel %vm345, %v337, %v342
    %v347 = vrsqrt.pop %v336
    %v348 = vmul.f32 %v347, %v336
    %v349 = vmul.f32 %v348, %v347
    %v350 = vmul.f32 0.5, %v349
    %v351 = vsub.f32 1.5, %v350
    %v352 = vmul.f32 %v347, %v351
    %vm353 = vweird.f32 %v336
    %vm354 = vweird.f32 %v347
    %vm355 = vmor %vm353, %vm354
    %v356 = vsel %vm355, %v347, %v352
    %v357 = vsub.f32 0.0, %v311
    %v358 = vsub.f32 0.0, %v312
    %v359 = vmul.f32 %v357, %v346
    %v360 = vmul.f32 %v358, %v356
    %v361 = vmul.f32 %v276, %v346
    %v362 = vmul.f32 %v289, %v356
    %v363 = vadd.f32 %v361, %v359
    %v364 = vadd.f32 %v362, %v360
    %v365 = vmax.f32 %v363, 0.0
    %v366 = vmax.f32 %v364, 0.0
    %v367 = vpack.c.bf16 %v365, %v365
    %v368 = vpack.c.bf16 %v366, %v366
    %v369 = vld [vmem:[#allocation8] sm:$0xff]
    %v370 = vld [vmem:[#allocation8 + $0x8] sm:$0xff]
    %v371 = vld [vmem:[#allocation8 + $0x10] sm:$0xff]
    %v372 = vld [vmem:[#allocation8 + $0x18] sm:$0xff]
    %v373 = vld [vmem:[#allocation8 + $0x20] sm:$0xff]
    %v374 = vld [vmem:[#allocation8 + $0x28] sm:$0xff]
    %v375 = vld [vmem:[#allocation8 + $0x30] sm:$0xff]
    %v376 = vld [vmem:[#allocation8 + $0x38] sm:$0xff]
    %v377 = vld [vmem:[#allocation8 + $0x40] sm:$0xff]
    %v378 = vld [vmem:[#allocation8 + $0x48] sm:$0xff]
    %v379 = vld [vmem:[#allocation8 + $0x50] sm:$0xff]
    %v380 = vld [vmem:[#allocation8 + $0x58] sm:$0xff]
    %v381 = vld [vmem:[#allocation8 + $0x60] sm:$0xff]
    %v382 = vld [vmem:[#allocation8 + $0x68] sm:$0xff]
    %v383 = vld [vmem:[#allocation8 + $0x70] sm:$0xff]
    %v384 = vld [vmem:[#allocation8 + $0x78] sm:$0xff]
    %v385 = vld [vmem:[#allocation8 + $0x80] sm:$0xff]
    %v386 = vld [vmem:[#allocation8 + $0x88] sm:$0xff]
    %v387 = vld [vmem:[#allocation8 + $0x90] sm:$0xff]
    %v388 = vld [vmem:[#allocation8 + $0x98] sm:$0xff]
    %v389 = vld [vmem:[#allocation8 + $0xa0] sm:$0xff]
    %v390 = vld [vmem:[#allocation8 + $0xa8] sm:$0xff]
    %v391 = vld [vmem:[#allocation8 + $0xb0] sm:$0xff]
    %v392 = vld [vmem:[#allocation8 + $0xb8] sm:$0xff]
    %v393 = vld [vmem:[#allocation8 + $0xc0] sm:$0xff]
    %v394 = vld [vmem:[#allocation8 + $0xc8] sm:$0xff]
    %v395 = vld [vmem:[#allocation8 + $0xd0] sm:$0xff]
    %v396 = vld [vmem:[#allocation8 + $0xd8] sm:$0xff]
    %v397 = vld [vmem:[#allocation8 + $0xe0] sm:$0xff]
    %v398 = vld [vmem:[#allocation8 + $0xe8] sm:$0xff]
    %v399 = vld [vmem:[#allocation8 + $0xf0] sm:$0xff]
    %v400 = vld [vmem:[#allocation8 + $0xf8] sm:$0xff]
    %v401 = vld [vmem:[#allocation8 + $0x100] sm:$0xff]
    %v402 = vld [vmem:[#allocation8 + $0x108] sm:$0xff]
    %v403 = vld [vmem:[#allocation8 + $0x110] sm:$0xff]
    %v404 = vld [vmem:[#allocation8 + $0x118] sm:$0xff]
    %v405 = vld [vmem:[#allocation8 + $0x120] sm:$0xff]
    %v406 = vld [vmem:[#allocation8 + $0x128] sm:$0xff]
    %v407 = vld [vmem:[#allocation8 + $0x130] sm:$0xff]
    %v408 = vld [vmem:[#allocation8 + $0x138] sm:$0xff]
    %v409 = vld [vmem:[#allocation8 + $0x140] sm:$0xff]
    %v410 = vld [vmem:[#allocation8 + $0x148] sm:$0xff]
    %v411 = vld [vmem:[#allocation8 + $0x150] sm:$0xff]
    %v412 = vld [vmem:[#allocation8 + $0x158] sm:$0xff]
    %v413 = vld [vmem:[#allocation8 + $0x160] sm:$0xff]
    %v414 = vld [vmem:[#allocation8 + $0x168] sm:$0xff]
    %v415 = vld [vmem:[#allocation8 + $0x170] sm:$0xff]
    %v416 = vld [vmem:[#allocation8 + $0x178] sm:$0xff]
    %v417 = vld [vmem:[#allocation8 + $0x180] sm:$0xff]
    %v418 = vld [vmem:[#allocation8 + $0x188] sm:$0xff]
    %v419 = vld [vmem:[#allocation8 + $0x190] sm:$0xff]
    %v420 = vld [vmem:[#allocation8 + $0x198] sm:$0xff]
    %v421 = vld [vmem:[#allocation8 + $0x1a0] sm:$0xff]
    %v422 = vld [vmem:[#allocation8 + $0x1a8] sm:$0xff]
    %v423 = vld [vmem:[#allocation8 + $0x1b0] sm:$0xff]
    %v424 = vld [vmem:[#allocation8 + $0x1b8] sm:$0xff]
    %v425 = vld [vmem:[#allocation8 + $0x1c0] sm:$0xff]
    %v426 = vld [vmem:[#allocation8 + $0x1c8] sm:$0xff]
    %v427 = vld [vmem:[#allocation8 + $0x1d0] sm:$0xff]
    %v428 = vld [vmem:[#allocation8 + $0x1d8] sm:$0xff]
    %v429 = vld [vmem:[#allocation8 + $0x1e0] sm:$0xff]
    %v430 = vld [vmem:[#allocation8 + $0x1e8] sm:$0xff]
    %v431 = vld [vmem:[#allocation8 + $0x1f0] sm:$0xff]
    %v432 = vld [vmem:[#allocation8 + $0x1f8] sm:$0xff]
    %v433 = vld [vmem:[#allocation10] sm:$0xf]
    %v435 = vperm.slane %v433, 0
    %v436 = vperm.slane %v433, 1
    %v437 = vperm.slane %v433, 2
    %v438 = vperm.slane %v433, 3
    %v507 = vunpack.c.l.b16 %v369
    %v508 = vunpack.c.h.b16 %v369
    %v509 = vunpack.c.l.b16 %v370
    %v510 = vunpack.c.h.b16 %v370
    %v511 = vunpack.c.l.b16 %v371
    %v512 = vunpack.c.h.b16 %v371
    %v513 = vunpack.c.l.b16 %v372
    %v514 = vunpack.c.h.b16 %v372
    %v515 = vunpack.c.l.b16 %v373
    %v516 = vunpack.c.h.b16 %v373
    %v517 = vunpack.c.l.b16 %v374
    %v518 = vunpack.c.h.b16 %v374
    %v519 = vunpack.c.l.b16 %v375
    %v520 = vunpack.c.h.b16 %v375
    %v521 = vunpack.c.l.b16 %v376
    %v522 = vunpack.c.h.b16 %v376
    %v523 = vunpack.c.l.b16 %v377
    %v524 = vunpack.c.h.b16 %v377
    %v525 = vunpack.c.l.b16 %v378
    %v526 = vunpack.c.h.b16 %v378
    %v527 = vunpack.c.l.b16 %v379
    %v528 = vunpack.c.h.b16 %v379
    %v529 = vunpack.c.l.b16 %v380
    %v530 = vunpack.c.h.b16 %v380
    %v531 = vunpack.c.l.b16 %v381
    %v532 = vunpack.c.h.b16 %v381
    %v533 = vunpack.c.l.b16 %v382
    %v534 = vunpack.c.h.b16 %v382
    %v535 = vunpack.c.l.b16 %v383
    %v536 = vunpack.c.h.b16 %v383
    %v537 = vunpack.c.l.b16 %v384
    %v538 = vunpack.c.h.b16 %v384
    %v539 = vunpack.c.l.b16 %v385
    %v540 = vunpack.c.h.b16 %v385
    %v541 = vunpack.c.l.b16 %v386
    %v542 = vunpack.c.h.b16 %v386
    %v543 = vunpack.c.l.b16 %v387
    %v544 = vunpack.c.h.b16 %v387
    %v545 = vunpack.c.l.b16 %v388
    %v546 = vunpack.c.h.b16 %v388
    %v547 = vunpack.c.l.b16 %v389
    %v548 = vunpack.c.h.b16 %v389
    %v549 = vunpack.c.l.b16 %v390
    %v550 = vunpack.c.h.b16 %v390
    %v551 = vunpack.c.l.b16 %v391
    %v552 = vunpack.c.h.b16 %v391
    %v553 = vunpack.c.l.b16 %v392
    %v554 = vunpack.c.h.b16 %v392
    %v555 = vunpack.c.l.b16 %v393
    %v556 = vunpack.c.h.b16 %v393
    %v557 = vunpack.c.l.b16 %v394
    %v558 = vunpack.c.h.b16 %v394
    %v559 = vunpack.c.l.b16 %v395
    %v560 = vunpack.c.h.b16 %v395
    %v561 = vunpack.c.l.b16 %v396
    %v562 = vunpack.c.h.b16 %v396
    %v563 = vunpack.c.l.b16 %v397
    %v564 = vunpack.c.h.b16 %v397
    %v565 = vunpack.c.l.b16 %v398
    %v566 = vunpack.c.h.b16 %v398
    %v567 = vunpack.c.l.b16 %v399
    %v568 = vunpack.c.h.b16 %v399
    %v569 = vunpack.c.l.b16 %v400
    %v570 = vunpack.c.h.b16 %v400
    %v571 = vunpack.c.l.b16 %v401
    %v572 = vunpack.c.h.b16 %v401
    %v573 = vunpack.c.l.b16 %v402
    %v574 = vunpack.c.h.b16 %v402
    %v575 = vunpack.c.l.b16 %v403
    %v576 = vunpack.c.h.b16 %v403
    %v577 = vunpack.c.l.b16 %v404
    %v578 = vunpack.c.h.b16 %v404
    %v579 = vunpack.c.l.b16 %v405
    %v580 = vunpack.c.h.b16 %v405
    %v581 = vunpack.c.l.b16 %v406
    %v582 = vunpack.c.h.b16 %v406
    %v583 = vunpack.c.l.b16 %v407
    %v584 = vunpack.c.h.b16 %v407
    %v585 = vunpack.c.l.b16 %v408
    %v586 = vunpack.c.h.b16 %v408
    %v587 = vunpack.c.l.b16 %v409
    %v588 = vunpack.c.h.b16 %v409
    %v589 = vunpack.c.l.b16 %v410
    %v590 = vunpack.c.h.b16 %v410
    %v591 = vunpack.c.l.b16 %v411
    %v592 = vunpack.c.h.b16 %v411
    %v593 = vunpack.c.l.b16 %v412
    %v594 = vunpack.c.h.b16 %v412
    %v595 = vunpack.c.l.b16 %v413
    %v596 = vunpack.c.h.b16 %v413
    %v597 = vunpack.c.l.b16 %v414
    %v598 = vunpack.c.h.b16 %v414
    %v599 = vunpack.c.l.b16 %v415
    %v600 = vunpack.c.h.b16 %v415
    %v601 = vunpack.c.l.b16 %v416
    %v602 = vunpack.c.h.b16 %v416
    %v603 = vunpack.c.l.b16 %v417
    %v604 = vunpack.c.h.b16 %v417
    %v605 = vunpack.c.l.b16 %v418
    %v606 = vunpack.c.h.b16 %v418
    %v607 = vunpack.c.l.b16 %v419
    %v608 = vunpack.c.h.b16 %v419
    %v609 = vunpack.c.l.b16 %v420
    %v610 = vunpack.c.h.b16 %v420
    %v611 = vunpack.c.l.b16 %v421
    %v612 = vunpack.c.h.b16 %v421
    %v613 = vunpack.c.l.b16 %v422
    %v614 = vunpack.c.h.b16 %v422
    %v615 = vunpack.c.l.b16 %v423
    %v616 = vunpack.c.h.b16 %v423
    %v617 = vunpack.c.l.b16 %v424
    %v618 = vunpack.c.h.b16 %v424
    %v619 = vunpack.c.l.b16 %v425
    %v620 = vunpack.c.h.b16 %v425
    %v621 = vunpack.c.l.b16 %v426
    %v622 = vunpack.c.h.b16 %v426
    %v623 = vunpack.c.l.b16 %v427
    %v624 = vunpack.c.h.b16 %v427
    %v625 = vunpack.c.l.b16 %v428
    %v626 = vunpack.c.h.b16 %v428
    %v627 = vunpack.c.l.b16 %v429
    %v628 = vunpack.c.h.b16 %v429
    %v629 = vunpack.c.l.b16 %v430
    %v630 = vunpack.c.h.b16 %v430
    %v631 = vunpack.c.l.b16 %v431
    %v632 = vunpack.c.h.b16 %v431
    %v633 = vunpack.c.l.b16 %v432
    %v634 = vunpack.c.h.b16 %v432
    %v635 = vpack.c.b16 %v511, %v507
    %v636 = vpack.c.b16 %v512, %v508
    %v637 = vpack.c.b16 %v513, %v509
    %v638 = vpack.c.b16 %v514, %v510
    %v639 = vpack.c.b16 %v519, %v515
    %v640 = vpack.c.b16 %v520, %v516
    %v641 = vpack.c.b16 %v521, %v517
    %v642 = vpack.c.b16 %v522, %v518
    %v643 = vpack.c.b16 %v527, %v523
    %v644 = vpack.c.b16 %v528, %v524
    %v645 = vpack.c.b16 %v529, %v525
    %v646 = vpack.c.b16 %v530, %v526
    %v647 = vpack.c.b16 %v535, %v531
    %v648 = vpack.c.b16 %v536, %v532
    %v649 = vpack.c.b16 %v537, %v533
    %v650 = vpack.c.b16 %v538, %v534
    %v651 = vpack.c.b16 %v543, %v539
    %v652 = vpack.c.b16 %v544, %v540
    %v653 = vpack.c.b16 %v545, %v541
    %v654 = vpack.c.b16 %v546, %v542
    %v655 = vpack.c.b16 %v551, %v547
    %v656 = vpack.c.b16 %v552, %v548
    %v657 = vpack.c.b16 %v553, %v549
    %v658 = vpack.c.b16 %v554, %v550
    %v659 = vpack.c.b16 %v559, %v555
    %v660 = vpack.c.b16 %v560, %v556
    %v661 = vpack.c.b16 %v561, %v557
    %v662 = vpack.c.b16 %v562, %v558
    %v663 = vpack.c.b16 %v567, %v563
    %v664 = vpack.c.b16 %v568, %v564
    %v665 = vpack.c.b16 %v569, %v565
    %v666 = vpack.c.b16 %v570, %v566
    %v667 = vpack.c.b16 %v575, %v571
    %v668 = vpack.c.b16 %v576, %v572
    %v669 = vpack.c.b16 %v577, %v573
    %v670 = vpack.c.b16 %v578, %v574
    %v671 = vpack.c.b16 %v583, %v579
    %v672 = vpack.c.b16 %v584, %v580
    %v673 = vpack.c.b16 %v585, %v581
    %v674 = vpack.c.b16 %v586, %v582
    %v675 = vpack.c.b16 %v591, %v587
    %v676 = vpack.c.b16 %v592, %v588
    %v677 = vpack.c.b16 %v593, %v589
    %v678 = vpack.c.b16 %v594, %v590
    %v679 = vpack.c.b16 %v599, %v595
    %v680 = vpack.c.b16 %v600, %v596
    %v681 = vpack.c.b16 %v601, %v597
    %v682 = vpack.c.b16 %v602, %v598
    %v683 = vpack.c.b16 %v607, %v603
    %v684 = vpack.c.b16 %v608, %v604
    %v685 = vpack.c.b16 %v609, %v605
    %v686 = vpack.c.b16 %v610, %v606
    %v687 = vpack.c.b16 %v615, %v611
    %v688 = vpack.c.b16 %v616, %v612
    %v689 = vpack.c.b16 %v617, %v613
    %v690 = vpack.c.b16 %v618, %v614
    %v691 = vpack.c.b16 %v623, %v619
    %v692 = vpack.c.b16 %v624, %v620
    %v693 = vpack.c.b16 %v625, %v621
    %v694 = vpack.c.b16 %v626, %v622
    %v695 = vpack.c.b16 %v631, %v627
    %v696 = vpack.c.b16 %v632, %v628
    %v697 = vpack.c.b16 %v633, %v629
    %v698 = vpack.c.b16 %v634, %v630
    %763 = vmatpush.bf16.msra.mxu0 %v663
    %764 = vmatpush.bf16.msra.mxu0 %v659
    %765 = vmatpush.bf16.msra.mxu0 %v655
    %766 = vmatpush.bf16.msra.mxu0 %v651
    %767 = vmatpush.bf16.msra.mxu0 %v647
    %768 = vmatpush.bf16.msra.mxu0 %v643
    %769 = vmatpush.bf16.msra.mxu0 %v639
    %770 = vmatpush.bf16.msra.mxu0 %v635
    %771 = vmatmul.bf16.gmra.mxu0 %v367
    %v772 = vpop.f32.mrf.mxu0
    %v773 = vadd.f32 %v435, %v772
    %v774 = vpop.f32.mrf.mxu0
    %775 = vdwg.mxu0
    %776 = vmatpush.bf16.msra.mxu0 %v695
    %777 = vmatpush.bf16.msra.mxu0 %v691
    %778 = vmatpush.bf16.msra.mxu0 %v687
    %779 = vmatpush.bf16.msra.mxu0 %v683
    %780 = vmatpush.bf16.msra.mxu0 %v679
    %781 = vmatpush.bf16.msra.mxu0 %v675
    %782 = vmatpush.bf16.msra.mxu0 %v671
    %783 = vmatpush.bf16.msra.mxu0 %v667
    %784 = vmatmul.bf16.gmra.mxu0 %v368
    %v785 = vpop.f32.mrf.mxu0
    %v786 = vadd.f32 %v773, %v785
    %v787 = vpop.f32.mrf.mxu0
    %788 = vdwg.mxu0
    %789 = vmatpush.bf16.msra.mxu0 %v664
    %790 = vmatpush.bf16.msra.mxu0 %v660
    %791 = vmatpush.bf16.msra.mxu0 %v656
    %792 = vmatpush.bf16.msra.mxu0 %v652
    %793 = vmatpush.bf16.msra.mxu0 %v648
    %794 = vmatpush.bf16.msra.mxu0 %v644
    %795 = vmatpush.bf16.msra.mxu0 %v640
    %796 = vmatpush.bf16.msra.mxu0 %v636
    %797 = vmatmul.bf16.gmra.mxu0 %v367
    %v798 = vpop.f32.mrf.mxu0
    %v799 = vadd.f32 %v436, %v798
    %v800 = vpop.f32.mrf.mxu0
    %801 = vdwg.mxu0
    %802 = vmatpush.bf16.msra.mxu0 %v696
    %803 = vmatpush.bf16.msra.mxu0 %v692
    %804 = vmatpush.bf16.msra.mxu0 %v688
    %805 = vmatpush.bf16.msra.mxu0 %v684
    %806 = vmatpush.bf16.msra.mxu0 %v680
    %807 = vmatpush.bf16.msra.mxu0 %v676
    %808 = vmatpush.bf16.msra.mxu0 %v672
    %809 = vmatpush.bf16.msra.mxu0 %v668
    %810 = vmatmul.bf16.gmra.mxu0 %v368
    %v811 = vpop.f32.mrf.mxu0
    %v812 = vadd.f32 %v799, %v811
    %v813 = vpop.f32.mrf.mxu0
    %814 = vdwg.mxu0
    %815 = vmatpush.bf16.msra.mxu0 %v665
    %816 = vmatpush.bf16.msra.mxu0 %v661
    %817 = vmatpush.bf16.msra.mxu0 %v657
    %818 = vmatpush.bf16.msra.mxu0 %v653
    %819 = vmatpush.bf16.msra.mxu0 %v649
    %820 = vmatpush.bf16.msra.mxu0 %v645
    %821 = vmatpush.bf16.msra.mxu0 %v641
    %822 = vmatpush.bf16.msra.mxu0 %v637
    %823 = vmatmul.bf16.gmra.mxu0 %v367
    %v824 = vpop.f32.mrf.mxu0
    %v825 = vadd.f32 %v437, %v824
    %v826 = vpop.f32.mrf.mxu0
    %827 = vdwg.mxu0
    %828 = vmatpush.bf16.msra.mxu0 %v697
    %829 = vmatpush.bf16.msra.mxu0 %v693
    %830 = vmatpush.bf16.msra.mxu0 %v689
    %831 = vmatpush.bf16.msra.mxu0 %v685
    %832 = vmatpush.bf16.msra.mxu0 %v681
    %833 = vmatpush.bf16.msra.mxu0 %v677
    %834 = vmatpush.bf16.msra.mxu0 %v673
    %835 = vmatpush.bf16.msra.mxu0 %v669
    %836 = vmatmul.bf16.gmra.mxu0 %v368
    %v837 = vpop.f32.mrf.mxu0
    %v838 = vadd.f32 %v825, %v837
    %v839 = vpop.f32.mrf.mxu0
    %840 = vdwg.mxu0
    %841 = vmatpush.bf16.msra.mxu0 %v666
    %842 = vmatpush.bf16.msra.mxu0 %v662
    %843 = vmatpush.bf16.msra.mxu0 %v658
    %844 = vmatpush.bf16.msra.mxu0 %v654
    %845 = vmatpush.bf16.msra.mxu0 %v650
    %846 = vmatpush.bf16.msra.mxu0 %v646
    %847 = vmatpush.bf16.msra.mxu0 %v642
    %848 = vmatpush.bf16.msra.mxu0 %v638
    %849 = vmatmul.bf16.gmra.mxu0 %v367
    %v850 = vpop.f32.mrf.mxu0
    %v851 = vadd.f32 %v438, %v850
    %v852 = vpop.f32.mrf.mxu0
    %853 = vdwg.mxu0
    %854 = vmatpush.bf16.msra.mxu0 %v698
    %855 = vmatpush.bf16.msra.mxu0 %v694
    %856 = vmatpush.bf16.msra.mxu0 %v690
    %857 = vmatpush.bf16.msra.mxu0 %v686
    %858 = vmatpush.bf16.msra.mxu0 %v682
    %859 = vmatpush.bf16.msra.mxu0 %v678
    %860 = vmatpush.bf16.msra.mxu0 %v674
    %861 = vmatpush.bf16.msra.mxu0 %v670
    %862 = vmatmul.bf16.gmra.mxu0 %v368
    %v863 = vpop.f32.mrf.mxu0
    %v864 = vadd.f32 %v851, %v863
    %v865 = vpop.f32.mrf.mxu0
    %866 = vdwg.mxu0
    %v867 = vrot.slane %v786, 4
    %v868 = vadd.f32 %v786, %v867
    %v869 = vrot.slane %v868, 2
    %v870 = vadd.f32 %v868, %v869
    %v871 = vrot.slane %v870, 1
    %v872 = vadd.f32 %v870, %v871
    %v873 = vrot.slane %v812, 4
    %v874 = vadd.f32 %v812, %v873
    %v875 = vrot.slane %v874, 2
    %v876 = vadd.f32 %v874, %v875
    %v877 = vrot.slane %v876, 1
    %v878 = vadd.f32 %v876, %v877
    %v879 = vrot.slane %v838, 4
    %v880 = vadd.f32 %v838, %v879
    %v881 = vrot.slane %v880, 2
    %v882 = vadd.f32 %v880, %v881
    %v883 = vrot.slane %v882, 1
    %v884 = vadd.f32 %v882, %v883
    %v885 = vrot.slane %v864, 4
    %v886 = vadd.f32 %v864, %v885
    %v887 = vrot.slane %v886, 2
    %v888 = vadd.f32 %v886, %v887
    %v889 = vrot.slane %v888, 1
    %v890 = vadd.f32 %v888, %v889
    %v891 = vmul.f32 %v872, %v310
    %v892 = vmul.f32 %v878, %v310
    %v893 = vmul.f32 %v884, %v310
    %v894 = vmul.f32 %v890, %v310
    %v895 = vmul.f32 %v786, %v786
    %v896 = vmul.f32 %v812, %v812
    %v897 = vmul.f32 %v838, %v838
    %v898 = vmul.f32 %v864, %v864
    %v899 = vrot.slane %v895, 4
    %v900 = vadd.f32 %v895, %v899
    %v901 = vrot.slane %v900, 2
    %v902 = vadd.f32 %v900, %v901
    %v903 = vrot.slane %v902, 1
    %v904 = vadd.f32 %v902, %v903
    %v905 = vrot.slane %v896, 4
    %v906 = vadd.f32 %v896, %v905
    %v907 = vrot.slane %v906, 2
    %v908 = vadd.f32 %v906, %v907
    %v909 = vrot.slane %v908, 1
    %v910 = vadd.f32 %v908, %v909
    %v911 = vrot.slane %v897, 4
    %v912 = vadd.f32 %v897, %v911
    %v913 = vrot.slane %v912, 2
    %v914 = vadd.f32 %v912, %v913
    %v915 = vrot.slane %v914, 1
    %v916 = vadd.f32 %v914, %v915
    %v917 = vrot.slane %v898, 4
    %v918 = vadd.f32 %v898, %v917
    %v919 = vrot.slane %v918, 2
    %v920 = vadd.f32 %v918, %v919
    %v921 = vrot.slane %v920, 1
    %v922 = vadd.f32 %v920, %v921
    %v923 = vmul.f32 %v904, %v310
    %v924 = vmul.f32 %v910, %v310
    %v925 = vmul.f32 %v916, %v310
    %v926 = vmul.f32 %v922, %v310
    %v927 = vmul.f32 %v891, %v891
    %v928 = vmul.f32 %v892, %v892
    %v929 = vmul.f32 %v893, %v893
    %v930 = vmul.f32 %v894, %v894
    %v931 = vsub.f32 %v923, %v927
    %v932 = vsub.f32 %v924, %v928
    %v933 = vsub.f32 %v925, %v929
    %v934 = vsub.f32 %v926, %v930
    %v935 = vmax.f32 %v931, 0.0
    %v936 = vmax.f32 %v932, 0.0
    %v937 = vmax.f32 %v933, 0.0
    %v938 = vmax.f32 %v934, 0.0
    %v939 = vadd.f32 %v935, 1e-05
    %v940 = vadd.f32 %v936, 1e-05
    %v941 = vadd.f32 %v937, 1e-05
    %v942 = vadd.f32 %v938, 1e-05
    %v943 = vrsqrt.pop %v939
    %v944 = vmul.f32 %v943, %v939
    %v945 = vmul.f32 %v944, %v943
    %v946 = vmul.f32 0.5, %v945
    %v947 = vsub.f32 1.5, %v946
    %v948 = vmul.f32 %v943, %v947
    %vm949 = vweird.f32 %v939
    %vm950 = vweird.f32 %v943
    %vm951 = vmor %vm949, %vm950
    %v952 = vsel %vm951, %v943, %v948
    %v953 = vrsqrt.pop %v940
    %v954 = vmul.f32 %v953, %v940
    %v955 = vmul.f32 %v954, %v953
    %v956 = vmul.f32 0.5, %v955
    %v957 = vsub.f32 1.5, %v956
    %v958 = vmul.f32 %v953, %v957
    %vm959 = vweird.f32 %v940
    %vm960 = vweird.f32 %v953
    %vm961 = vmor %vm959, %vm960
    %v962 = vsel %vm961, %v953, %v958
    %v963 = vrsqrt.pop %v941
    %v964 = vmul.f32 %v963, %v941
    %v965 = vmul.f32 %v964, %v963
    %v966 = vmul.f32 0.5, %v965
    %v967 = vsub.f32 1.5, %v966
    %v968 = vmul.f32 %v963, %v967
    %vm969 = vweird.f32 %v941
    %vm970 = vweird.f32 %v963
    %vm971 = vmor %vm969, %vm970
    %v972 = vsel %vm971, %v963, %v968
    %v973 = vrsqrt.pop %v942
    %v974 = vmul.f32 %v973, %v942
    %v975 = vmul.f32 %v974, %v973
    %v976 = vmul.f32 0.5, %v975
    %v977 = vsub.f32 1.5, %v976
    %v978 = vmul.f32 %v973, %v977
    %vm979 = vweird.f32 %v942
    %vm980 = vweird.f32 %v973
    %vm981 = vmor %vm979, %vm980
    %v982 = vsel %vm981, %v973, %v978
    %v983 = vsub.f32 0.0, %v891
    %v984 = vsub.f32 0.0, %v892
    %v985 = vsub.f32 0.0, %v893
    %v986 = vsub.f32 0.0, %v894
    %v987 = vmul.f32 %v983, %v952
    %v988 = vmul.f32 %v984, %v962
    %v989 = vmul.f32 %v985, %v972
    %v990 = vmul.f32 %v986, %v982
    %v991 = vmul.f32 %v786, %v952
    %v992 = vmul.f32 %v812, %v962
    %v993 = vmul.f32 %v838, %v972
    %v994 = vmul.f32 %v864, %v982
    %v995 = vadd.f32 %v991, %v987
    %v996 = vadd.f32 %v992, %v988
    %v997 = vadd.f32 %v993, %v989
    %v998 = vadd.f32 %v994, %v990
    %v999 = vmax.f32 %v995, 0.0
    %v1000 = vmax.f32 %v996, 0.0
    %v1001 = vmax.f32 %v997, 0.0
    %v1002 = vmax.f32 %v998, 0.0
    %v1003 = vpack.c.bf16 %v999, %v999
    %v1004 = vpack.c.bf16 %v1000, %v1000
    %v1005 = vpack.c.bf16 %v1001, %v1001
    %v1006 = vpack.c.bf16 %v1002, %v1002
    %v1007 = vld [vmem:[#allocation11] sm:$0xff]
    %v1008 = vld [vmem:[#allocation11 + $0x8] sm:$0xff]
    %v1009 = vld [vmem:[#allocation11 + $0x10] sm:$0xff]
    %v1010 = vld [vmem:[#allocation11 + $0x18] sm:$0xff]
    %v1011 = vld [vmem:[#allocation11 + $0x20] sm:$0xff]
    %v1012 = vld [vmem:[#allocation11 + $0x28] sm:$0xff]
    %v1013 = vld [vmem:[#allocation11 + $0x30] sm:$0xff]
    %v1014 = vld [vmem:[#allocation11 + $0x38] sm:$0xff]
    %v1015 = vld [vmem:[#allocation11 + $0x40] sm:$0xff]
    %v1016 = vld [vmem:[#allocation11 + $0x48] sm:$0xff]
    %v1017 = vld [vmem:[#allocation11 + $0x50] sm:$0xff]
    %v1018 = vld [vmem:[#allocation11 + $0x58] sm:$0xff]
    %v1019 = vld [vmem:[#allocation11 + $0x60] sm:$0xff]
    %v1020 = vld [vmem:[#allocation11 + $0x68] sm:$0xff]
    %v1021 = vld [vmem:[#allocation11 + $0x70] sm:$0xff]
    %v1022 = vld [vmem:[#allocation11 + $0x78] sm:$0xff]
    %v1023 = vld [vmem:[#allocation11 + $0x80] sm:$0xff]
    %v1024 = vld [vmem:[#allocation11 + $0x88] sm:$0xff]
    %v1025 = vld [vmem:[#allocation11 + $0x90] sm:$0xff]
    %v1026 = vld [vmem:[#allocation11 + $0x98] sm:$0xff]
    %v1027 = vld [vmem:[#allocation11 + $0xa0] sm:$0xff]
    %v1028 = vld [vmem:[#allocation11 + $0xa8] sm:$0xff]
    %v1029 = vld [vmem:[#allocation11 + $0xb0] sm:$0xff]
    %v1030 = vld [vmem:[#allocation11 + $0xb8] sm:$0xff]
    %v1031 = vld [vmem:[#allocation11 + $0xc0] sm:$0xff]
    %v1032 = vld [vmem:[#allocation11 + $0xc8] sm:$0xff]
    %v1033 = vld [vmem:[#allocation11 + $0xd0] sm:$0xff]
    %v1034 = vld [vmem:[#allocation11 + $0xd8] sm:$0xff]
    %v1035 = vld [vmem:[#allocation11 + $0xe0] sm:$0xff]
    %v1036 = vld [vmem:[#allocation11 + $0xe8] sm:$0xff]
    %v1037 = vld [vmem:[#allocation11 + $0xf0] sm:$0xff]
    %v1038 = vld [vmem:[#allocation11 + $0xf8] sm:$0xff]
    %v1039 = vld [vmem:[#allocation11 + $0x100] sm:$0xff]
    %v1040 = vld [vmem:[#allocation11 + $0x108] sm:$0xff]
    %v1041 = vld [vmem:[#allocation11 + $0x110] sm:$0xff]
    %v1042 = vld [vmem:[#allocation11 + $0x118] sm:$0xff]
    %v1043 = vld [vmem:[#allocation11 + $0x120] sm:$0xff]
    %v1044 = vld [vmem:[#allocation11 + $0x128] sm:$0xff]
    %v1045 = vld [vmem:[#allocation11 + $0x130] sm:$0xff]
    %v1046 = vld [vmem:[#allocation11 + $0x138] sm:$0xff]
    %v1047 = vld [vmem:[#allocation11 + $0x140] sm:$0xff]
    %v1048 = vld [vmem:[#allocation11 + $0x148] sm:$0xff]
    %v1049 = vld [vmem:[#allocation11 + $0x150] sm:$0xff]
    %v1050 = vld [vmem:[#allocation11 + $0x158] sm:$0xff]
    %v1051 = vld [vmem:[#allocation11 + $0x160] sm:$0xff]
    %v1052 = vld [vmem:[#allocation11 + $0x168] sm:$0xff]
    %v1053 = vld [vmem:[#allocation11 + $0x170] sm:$0xff]
    %v1054 = vld [vmem:[#allocation11 + $0x178] sm:$0xff]
    %v1055 = vld [vmem:[#allocation11 + $0x180] sm:$0xff]
    %v1056 = vld [vmem:[#allocation11 + $0x188] sm:$0xff]
    %v1057 = vld [vmem:[#allocation11 + $0x190] sm:$0xff]
    %v1058 = vld [vmem:[#allocation11 + $0x198] sm:$0xff]
    %v1059 = vld [vmem:[#allocation11 + $0x1a0] sm:$0xff]
    %v1060 = vld [vmem:[#allocation11 + $0x1a8] sm:$0xff]
    %v1061 = vld [vmem:[#allocation11 + $0x1b0] sm:$0xff]
    %v1062 = vld [vmem:[#allocation11 + $0x1b8] sm:$0xff]
    %v1063 = vld [vmem:[#allocation11 + $0x1c0] sm:$0xff]
    %v1064 = vld [vmem:[#allocation11 + $0x1c8] sm:$0xff]
    %v1065 = vld [vmem:[#allocation11 + $0x1d0] sm:$0xff]
    %v1066 = vld [vmem:[#allocation11 + $0x1d8] sm:$0xff]
    %v1067 = vld [vmem:[#allocation11 + $0x1e0] sm:$0xff]
    %v1068 = vld [vmem:[#allocation11 + $0x1e8] sm:$0xff]
    %v1069 = vld [vmem:[#allocation11 + $0x1f0] sm:$0xff]
    %v1070 = vld [vmem:[#allocation11 + $0x1f8] sm:$0xff]
    %v1071 = vld [vmem:[#allocation11 + $0x200] sm:$0xff]
    %v1072 = vld [vmem:[#allocation11 + $0x208] sm:$0xff]
    %v1073 = vld [vmem:[#allocation11 + $0x210] sm:$0xff]
    %v1074 = vld [vmem:[#allocation11 + $0x218] sm:$0xff]
    %v1075 = vld [vmem:[#allocation11 + $0x220] sm:$0xff]
    %v1076 = vld [vmem:[#allocation11 + $0x228] sm:$0xff]
    %v1077 = vld [vmem:[#allocation11 + $0x230] sm:$0xff]
    %v1078 = vld [vmem:[#allocation11 + $0x238] sm:$0xff]
    %v1079 = vld [vmem:[#allocation11 + $0x240] sm:$0xff]
    %v1080 = vld [vmem:[#allocation11 + $0x248] sm:$0xff]
    %v1081 = vld [vmem:[#allocation11 + $0x250] sm:$0xff]
    %v1082 = vld [vmem:[#allocation11 + $0x258] sm:$0xff]
    %v1083 = vld [vmem:[#allocation11 + $0x260] sm:$0xff]
    %v1084 = vld [vmem:[#allocation11 + $0x268] sm:$0xff]
    %v1085 = vld [vmem:[#allocation11 + $0x270] sm:$0xff]
    %v1086 = vld [vmem:[#allocation11 + $0x278] sm:$0xff]
    %v1087 = vld [vmem:[#allocation11 + $0x280] sm:$0xff]
    %v1088 = vld [vmem:[#allocation11 + $0x288] sm:$0xff]
    %v1089 = vld [vmem:[#allocation11 + $0x290] sm:$0xff]
    %v1090 = vld [vmem:[#allocation11 + $0x298] sm:$0xff]
    %v1091 = vld [vmem:[#allocation11 + $0x2a0] sm:$0xff]
    %v1092 = vld [vmem:[#allocation11 + $0x2a8] sm:$0xff]
    %v1093 = vld [vmem:[#allocation11 + $0x2b0] sm:$0xff]
    %v1094 = vld [vmem:[#allocation11 + $0x2b8] sm:$0xff]
    %v1095 = vld [vmem:[#allocation11 + $0x2c0] sm:$0xff]
    %v1096 = vld [vmem:[#allocation11 + $0x2c8] sm:$0xff]
    %v1097 = vld [vmem:[#allocation11 + $0x2d0] sm:$0xff]
    %v1098 = vld [vmem:[#allocation11 + $0x2d8] sm:$0xff]
    %v1099 = vld [vmem:[#allocation11 + $0x2e0] sm:$0xff]
    %v1100 = vld [vmem:[#allocation11 + $0x2e8] sm:$0xff]
    %v1101 = vld [vmem:[#allocation11 + $0x2f0] sm:$0xff]
    %v1102 = vld [vmem:[#allocation11 + $0x2f8] sm:$0xff]
    %v1103 = vld [vmem:[#allocation11 + $0x300] sm:$0xff]
    %v1104 = vld [vmem:[#allocation11 + $0x308] sm:$0xff]
    %v1105 = vld [vmem:[#allocation11 + $0x310] sm:$0xff]
    %v1106 = vld [vmem:[#allocation11 + $0x318] sm:$0xff]
    %v1107 = vld [vmem:[#allocation11 + $0x320] sm:$0xff]
    %v1108 = vld [vmem:[#allocation11 + $0x328] sm:$0xff]
    %v1109 = vld [vmem:[#allocation11 + $0x330] sm:$0xff]
    %v1110 = vld [vmem:[#allocation11 + $0x338] sm:$0xff]
    %v1111 = vld [vmem:[#allocation11 + $0x340] sm:$0xff]
    %v1112 = vld [vmem:[#allocation11 + $0x348] sm:$0xff]
    %v1113 = vld [vmem:[#allocation11 + $0x350] sm:$0xff]
    %v1114 = vld [vmem:[#allocation11 + $0x358] sm:$0xff]
    %v1115 = vld [vmem:[#allocation11 + $0x360] sm:$0xff]
    %v1116 = vld [vmem:[#allocation11 + $0x368] sm:$0xff]
    %v1117 = vld [vmem:[#allocation11 + $0x370] sm:$0xff]
    %v1118 = vld [vmem:[#allocation11 + $0x378] sm:$0xff]
    %v1119 = vld [vmem:[#allocation11 + $0x380] sm:$0xff]
    %v1120 = vld [vmem:[#allocation11 + $0x388] sm:$0xff]
    %v1121 = vld [vmem:[#allocation11 + $0x390] sm:$0xff]
    %v1122 = vld [vmem:[#allocation11 + $0x398] sm:$0xff]
    %v1123 = vld [vmem:[#allocation11 + $0x3a0] sm:$0xff]
    %v1124 = vld [vmem:[#allocation11 + $0x3a8] sm:$0xff]
    %v1125 = vld [vmem:[#allocation11 + $0x3b0] sm:$0xff]
    %v1126 = vld [vmem:[#allocation11 + $0x3b8] sm:$0xff]
    %v1127 = vld [vmem:[#allocation11 + $0x3c0] sm:$0xff]
    %v1128 = vld [vmem:[#allocation11 + $0x3c8] sm:$0xff]
    %v1129 = vld [vmem:[#allocation11 + $0x3d0] sm:$0xff]
    %v1130 = vld [vmem:[#allocation11 + $0x3d8] sm:$0xff]
    %v1131 = vld [vmem:[#allocation11 + $0x3e0] sm:$0xff]
    %v1132 = vld [vmem:[#allocation11 + $0x3e8] sm:$0xff]
    %v1133 = vld [vmem:[#allocation11 + $0x3f0] sm:$0xff]
    %v1134 = vld [vmem:[#allocation11 + $0x3f8] sm:$0xff]
    %v1135 = vld [vmem:[#allocation11 + $0x400] sm:$0xff]
    %v1136 = vld [vmem:[#allocation11 + $0x408] sm:$0xff]
    %v1137 = vld [vmem:[#allocation11 + $0x410] sm:$0xff]
    %v1138 = vld [vmem:[#allocation11 + $0x418] sm:$0xff]
    %v1139 = vld [vmem:[#allocation11 + $0x420] sm:$0xff]
    %v1140 = vld [vmem:[#allocation11 + $0x428] sm:$0xff]
    %v1141 = vld [vmem:[#allocation11 + $0x430] sm:$0xff]
    %v1142 = vld [vmem:[#allocation11 + $0x438] sm:$0xff]
    %v1143 = vld [vmem:[#allocation11 + $0x440] sm:$0xff]
    %v1144 = vld [vmem:[#allocation11 + $0x448] sm:$0xff]
    %v1145 = vld [vmem:[#allocation11 + $0x450] sm:$0xff]
    %v1146 = vld [vmem:[#allocation11 + $0x458] sm:$0xff]
    %v1147 = vld [vmem:[#allocation11 + $0x460] sm:$0xff]
    %v1148 = vld [vmem:[#allocation11 + $0x468] sm:$0xff]
    %v1149 = vld [vmem:[#allocation11 + $0x470] sm:$0xff]
    %v1150 = vld [vmem:[#allocation11 + $0x478] sm:$0xff]
    %v1151 = vld [vmem:[#allocation11 + $0x480] sm:$0xff]
    %v1152 = vld [vmem:[#allocation11 + $0x488] sm:$0xff]
    %v1153 = vld [vmem:[#allocation11 + $0x490] sm:$0xff]
    %v1154 = vld [vmem:[#allocation11 + $0x498] sm:$0xff]
    %v1155 = vld [vmem:[#allocation11 + $0x4a0] sm:$0xff]
    %v1156 = vld [vmem:[#allocation11 + $0x4a8] sm:$0xff]
    %v1157 = vld [vmem:[#allocation11 + $0x4b0] sm:$0xff]
    %v1158 = vld [vmem:[#allocation11 + $0x4b8] sm:$0xff]
    %v1159 = vld [vmem:[#allocation11 + $0x4c0] sm:$0xff]
    %v1160 = vld [vmem:[#allocation11 + $0x4c8] sm:$0xff]
    %v1161 = vld [vmem:[#allocation11 + $0x4d0] sm:$0xff]
    %v1162 = vld [vmem:[#allocation11 + $0x4d8] sm:$0xff]
    %v1163 = vld [vmem:[#allocation11 + $0x4e0] sm:$0xff]
    %v1164 = vld [vmem:[#allocation11 + $0x4e8] sm:$0xff]
    %v1165 = vld [vmem:[#allocation11 + $0x4f0] sm:$0xff]
    %v1166 = vld [vmem:[#allocation11 + $0x4f8] sm:$0xff]
    %v1167 = vld [vmem:[#allocation11 + $0x500] sm:$0xff]
    %v1168 = vld [vmem:[#allocation11 + $0x508] sm:$0xff]
    %v1169 = vld [vmem:[#allocation11 + $0x510] sm:$0xff]
    %v1170 = vld [vmem:[#allocation11 + $0x518] sm:$0xff]
    %v1171 = vld [vmem:[#allocation11 + $0x520] sm:$0xff]
    %v1172 = vld [vmem:[#allocation11 + $0x528] sm:$0xff]
    %v1173 = vld [vmem:[#allocation11 + $0x530] sm:$0xff]
    %v1174 = vld [vmem:[#allocation11 + $0x538] sm:$0xff]
    %v1175 = vld [vmem:[#allocation11 + $0x540] sm:$0xff]
    %v1176 = vld [vmem:[#allocation11 + $0x548] sm:$0xff]
    %v1177 = vld [vmem:[#allocation11 + $0x550] sm:$0xff]
    %v1178 = vld [vmem:[#allocation11 + $0x558] sm:$0xff]
    %v1179 = vld [vmem:[#allocation11 + $0x560] sm:$0xff]
    %v1180 = vld [vmem:[#allocation11 + $0x568] sm:$0xff]
    %v1181 = vld [vmem:[#allocation11 + $0x570] sm:$0xff]
    %v1182 = vld [vmem:[#allocation11 + $0x578] sm:$0xff]
    %v1183 = vld [vmem:[#allocation11 + $0x580] sm:$0xff]
    %v1184 = vld [vmem:[#allocation11 + $0x588] sm:$0xff]
    %v1185 = vld [vmem:[#allocation11 + $0x590] sm:$0xff]
    %v1186 = vld [vmem:[#allocation11 + $0x598] sm:$0xff]
    %v1187 = vld [vmem:[#allocation11 + $0x5a0] sm:$0xff]
    %v1188 = vld [vmem:[#allocation11 + $0x5a8] sm:$0xff]
    %v1189 = vld [vmem:[#allocation11 + $0x5b0] sm:$0xff]
    %v1190 = vld [vmem:[#allocation11 + $0x5b8] sm:$0xff]
    %v1191 = vld [vmem:[#allocation11 + $0x5c0] sm:$0xff]
    %v1192 = vld [vmem:[#allocation11 + $0x5c8] sm:$0xff]
    %v1193 = vld [vmem:[#allocation11 + $0x5d0] sm:$0xff]
    %v1194 = vld [vmem:[#allocation11 + $0x5d8] sm:$0xff]
    %v1195 = vld [vmem:[#allocation11 + $0x5e0] sm:$0xff]
    %v1196 = vld [vmem:[#allocation11 + $0x5e8] sm:$0xff]
    %v1197 = vld [vmem:[#allocation11 + $0x5f0] sm:$0xff]
    %v1198 = vld [vmem:[#allocation11 + $0x5f8] sm:$0xff]
    %v1199 = vld [vmem:[#allocation11 + $0x600] sm:$0xff]
    %v1200 = vld [vmem:[#allocation11 + $0x608] sm:$0xff]
    %v1201 = vld [vmem:[#allocation11 + $0x610] sm:$0xff]
    %v1202 = vld [vmem:[#allocation11 + $0x618] sm:$0xff]
    %v1203 = vld [vmem:[#allocation11 + $0x620] sm:$0xff]
    %v1204 = vld [vmem:[#allocation11 + $0x628] sm:$0xff]
    %v1205 = vld [vmem:[#allocation11 + $0x630] sm:$0xff]
    %v1206 = vld [vmem:[#allocation11 + $0x638] sm:$0xff]
    %v1207 = vld [vmem:[#allocation11 + $0x640] sm:$0xff]
    %v1208 = vld [vmem:[#allocation11 + $0x648] sm:$0xff]
    %v1209 = vld [vmem:[#allocation11 + $0x650] sm:$0xff]
    %v1210 = vld [vmem:[#allocation11 + $0x658] sm:$0xff]
    %v1211 = vld [vmem:[#allocation11 + $0x660] sm:$0xff]
    %v1212 = vld [vmem:[#allocation11 + $0x668] sm:$0xff]
    %v1213 = vld [vmem:[#allocation11 + $0x670] sm:$0xff]
    %v1214 = vld [vmem:[#allocation11 + $0x678] sm:$0xff]
    %v1215 = vld [vmem:[#allocation11 + $0x680] sm:$0xff]
    %v1216 = vld [vmem:[#allocation11 + $0x688] sm:$0xff]
    %v1217 = vld [vmem:[#allocation11 + $0x690] sm:$0xff]
    %v1218 = vld [vmem:[#allocation11 + $0x698] sm:$0xff]
    %v1219 = vld [vmem:[#allocation11 + $0x6a0] sm:$0xff]
    %v1220 = vld [vmem:[#allocation11 + $0x6a8] sm:$0xff]
    %v1221 = vld [vmem:[#allocation11 + $0x6b0] sm:$0xff]
    %v1222 = vld [vmem:[#allocation11 + $0x6b8] sm:$0xff]
    %v1223 = vld [vmem:[#allocation11 + $0x6c0] sm:$0xff]
    %v1224 = vld [vmem:[#allocation11 + $0x6c8] sm:$0xff]
    %v1225 = vld [vmem:[#allocation11 + $0x6d0] sm:$0xff]
    %v1226 = vld [vmem:[#allocation11 + $0x6d8] sm:$0xff]
    %v1227 = vld [vmem:[#allocation11 + $0x6e0] sm:$0xff]
    %v1228 = vld [vmem:[#allocation11 + $0x6e8] sm:$0xff]
    %v1229 = vld [vmem:[#allocation11 + $0x6f0] sm:$0xff]
    %v1230 = vld [vmem:[#allocation11 + $0x6f8] sm:$0xff]
    %v1231 = vld [vmem:[#allocation11 + $0x700] sm:$0xff]
    %v1232 = vld [vmem:[#allocation11 + $0x708] sm:$0xff]
    %v1233 = vld [vmem:[#allocation11 + $0x710] sm:$0xff]
    %v1234 = vld [vmem:[#allocation11 + $0x718] sm:$0xff]
    %v1235 = vld [vmem:[#allocation11 + $0x720] sm:$0xff]
    %v1236 = vld [vmem:[#allocation11 + $0x728] sm:$0xff]
    %v1237 = vld [vmem:[#allocation11 + $0x730] sm:$0xff]
    %v1238 = vld [vmem:[#allocation11 + $0x738] sm:$0xff]
    %v1239 = vld [vmem:[#allocation11 + $0x740] sm:$0xff]
    %v1240 = vld [vmem:[#allocation11 + $0x748] sm:$0xff]
    %v1241 = vld [vmem:[#allocation11 + $0x750] sm:$0xff]
    %v1242 = vld [vmem:[#allocation11 + $0x758] sm:$0xff]
    %v1243 = vld [vmem:[#allocation11 + $0x760] sm:$0xff]
    %v1244 = vld [vmem:[#allocation11 + $0x768] sm:$0xff]
    %v1245 = vld [vmem:[#allocation11 + $0x770] sm:$0xff]
    %v1246 = vld [vmem:[#allocation11 + $0x778] sm:$0xff]
    %v1247 = vld [vmem:[#allocation11 + $0x780] sm:$0xff]
    %v1248 = vld [vmem:[#allocation11 + $0x788] sm:$0xff]
    %v1249 = vld [vmem:[#allocation11 + $0x790] sm:$0xff]
    %v1250 = vld [vmem:[#allocation11 + $0x798] sm:$0xff]
    %v1251 = vld [vmem:[#allocation11 + $0x7a0] sm:$0xff]
    %v1252 = vld [vmem:[#allocation11 + $0x7a8] sm:$0xff]
    %v1253 = vld [vmem:[#allocation11 + $0x7b0] sm:$0xff]
    %v1254 = vld [vmem:[#allocation11 + $0x7b8] sm:$0xff]
    %v1255 = vld [vmem:[#allocation11 + $0x7c0] sm:$0xff]
    %v1256 = vld [vmem:[#allocation11 + $0x7c8] sm:$0xff]
    %v1257 = vld [vmem:[#allocation11 + $0x7d0] sm:$0xff]
    %v1258 = vld [vmem:[#allocation11 + $0x7d8] sm:$0xff]
    %v1259 = vld [vmem:[#allocation11 + $0x7e0] sm:$0xff]
    %v1260 = vld [vmem:[#allocation11 + $0x7e8] sm:$0xff]
    %v1261 = vld [vmem:[#allocation11 + $0x7f0] sm:$0xff]
    %v1262 = vld [vmem:[#allocation11 + $0x7f8] sm:$0xff]
    %v1263 = vld [vmem:[#allocation13] sm:$0xff]
    %v1265 = vperm.slane %v1263, 0
    %v1266 = vperm.slane %v1263, 1
    %v1267 = vperm.slane %v1263, 2
    %v1268 = vperm.slane %v1263, 3
    %v1269 = vperm.slane %v1263, 4
    %v1270 = vperm.slane %v1263, 5
    %v1271 = vperm.slane %v1263, 6
    %v1272 = vperm.slane %v1263, 7
    %v1537 = vunpack.c.l.b16 %v1007
    %v1538 = vunpack.c.h.b16 %v1007
    %v1539 = vunpack.c.l.b16 %v1008
    %v1540 = vunpack.c.h.b16 %v1008
    %v1541 = vunpack.c.l.b16 %v1009
    %v1542 = vunpack.c.h.b16 %v1009
    %v1543 = vunpack.c.l.b16 %v1010
    %v1544 = vunpack.c.h.b16 %v1010
    %v1545 = vunpack.c.l.b16 %v1011
    %v1546 = vunpack.c.h.b16 %v1011
    %v1547 = vunpack.c.l.b16 %v1012
    %v1548 = vunpack.c.h.b16 %v1012
    %v1549 = vunpack.c.l.b16 %v1013
    %v1550 = vunpack.c.h.b16 %v1013
    %v1551 = vunpack.c.l.b16 %v1014
    %v1552 = vunpack.c.h.b16 %v1014
    %v1553 = vunpack.c.l.b16 %v1015
    %v1554 = vunpack.c.h.b16 %v1015
    %v1555 = vunpack.c.l.b16 %v1016
    %v1556 = vunpack.c.h.b16 %v1016
    %v1557 = vunpack.c.l.b16 %v1017
    %v1558 = vunpack.c.h.b16 %v1017
    %v1559 = vunpack.c.l.b16 %v1018
    %v1560 = vunpack.c.h.b16 %v1018
    %v1561 = vunpack.c.l.b16 %v1019
    %v1562 = vunpack.c.h.b16 %v1019
    %v1563 = vunpack.c.l.b16 %v1020
    %v1564 = vunpack.c.h.b16 %v1020
    %v1565 = vunpack.c.l.b16 %v1021
    %v1566 = vunpack.c.h.b16 %v1021
    %v1567 = vunpack.c.l.b16 %v1022
    %v1568 = vunpack.c.h.b16 %v1022
    %v1569 = vunpack.c.l.b16 %v1023
    %v1570 = vunpack.c.h.b16 %v1023
    %v1571 = vunpack.c.l.b16 %v1024
    %v1572 = vunpack.c.h.b16 %v1024
    %v1573 = vunpack.c.l.b16 %v1025
    %v1574 = vunpack.c.h.b16 %v1025
    %v1575 = vunpack.c.l.b16 %v1026
    %v1576 = vunpack.c.h.b16 %v1026
    %v1577 = vunpack.c.l.b16 %v1027
    %v1578 = vunpack.c.h.b16 %v1027
    %v1579 = vunpack.c.l.b16 %v1028
    %v1580 = vunpack.c.h.b16 %v1028
    %v1581 = vunpack.c.l.b16 %v1029
    %v1582 = vunpack.c.h.b16 %v1029
    %v1583 = vunpack.c.l.b16 %v1030
    %v1584 = vunpack.c.h.b16 %v1030
    %v1585 = vunpack.c.l.b16 %v1031
    %v1586 = vunpack.c.h.b16 %v1031
    %v1587 = vunpack.c.l.b16 %v1032
    %v1588 = vunpack.c.h.b16 %v1032
    %v1589 = vunpack.c.l.b16 %v1033
    %v1590 = vunpack.c.h.b16 %v1033
    %v1591 = vunpack.c.l.b16 %v1034
    %v1592 = vunpack.c.h.b16 %v1034
    %v1593 = vunpack.c.l.b16 %v1035
    %v1594 = vunpack.c.h.b16 %v1035
    %v1595 = vunpack.c.l.b16 %v1036
    %v1596 = vunpack.c.h.b16 %v1036
    %v1597 = vunpack.c.l.b16 %v1037
    %v1598 = vunpack.c.h.b16 %v1037
    %v1599 = vunpack.c.l.b16 %v1038
    %v1600 = vunpack.c.h.b16 %v1038
    %v1601 = vunpack.c.l.b16 %v1039
    %v1602 = vunpack.c.h.b16 %v1039
    %v1603 = vunpack.c.l.b16 %v1040
    %v1604 = vunpack.c.h.b16 %v1040
    %v1605 = vunpack.c.l.b16 %v1041
    %v1606 = vunpack.c.h.b16 %v1041
    %v1607 = vunpack.c.l.b16 %v1042
    %v1608 = vunpack.c.h.b16 %v1042
    %v1609 = vunpack.c.l.b16 %v1043
    %v1610 = vunpack.c.h.b16 %v1043
    %v1611 = vunpack.c.l.b16 %v1044
    %v1612 = vunpack.c.h.b16 %v1044
    %v1613 = vunpack.c.l.b16 %v1045
    %v1614 = vunpack.c.h.b16 %v1045
    %v1615 = vunpack.c.l.b16 %v1046
    %v1616 = vunpack.c.h.b16 %v1046
    %v1617 = vunpack.c.l.b16 %v1047
    %v1618 = vunpack.c.h.b16 %v1047
    %v1619 = vunpack.c.l.b16 %v1048
    %v1620 = vunpack.c.h.b16 %v1048
    %v1621 = vunpack.c.l.b16 %v1049
    %v1622 = vunpack.c.h.b16 %v1049
    %v1623 = vunpack.c.l.b16 %v1050
    %v1624 = vunpack.c.h.b16 %v1050
    %v1625 = vunpack.c.l.b16 %v1051
    %v1626 = vunpack.c.h.b16 %v1051
    %v1627 = vunpack.c.l.b16 %v1052
    %v1628 = vunpack.c.h.b16 %v1052
    %v1629 = vunpack.c.l.b16 %v1053
    %v1630 = vunpack.c.h.b16 %v1053
    %v1631 = vunpack.c.l.b16 %v1054
    %v1632 = vunpack.c.h.b16 %v1054
    %v1633 = vunpack.c.l.b16 %v1055
    %v1634 = vunpack.c.h.b16 %v1055
    %v1635 = vunpack.c.l.b16 %v1056
    %v1636 = vunpack.c.h.b16 %v1056
    %v1637 = vunpack.c.l.b16 %v1057
    %v1638 = vunpack.c.h.b16 %v1057
    %v1639 = vunpack.c.l.b16 %v1058
    %v1640 = vunpack.c.h.b16 %v1058
    %v1641 = vunpack.c.l.b16 %v1059
    %v1642 = vunpack.c.h.b16 %v1059
    %v1643 = vunpack.c.l.b16 %v1060
    %v1644 = vunpack.c.h.b16 %v1060
    %v1645 = vunpack.c.l.b16 %v1061
    %v1646 = vunpack.c.h.b16 %v1061
    %v1647 = vunpack.c.l.b16 %v1062
    %v1648 = vunpack.c.h.b16 %v1062
    %v1649 = vunpack.c.l.b16 %v1063
    %v1650 = vunpack.c.h.b16 %v1063
    %v1651 = vunpack.c.l.b16 %v1064
    %v1652 = vunpack.c.h.b16 %v1064
    %v1653 = vunpack.c.l.b16 %v1065
    %v1654 = vunpack.c.h.b16 %v1065
    %v1655 = vunpack.c.l.b16 %v1066
    %v1656 = vunpack.c.h.b16 %v1066
    %v1657 = vunpack.c.l.b16 %v1067
    %v1658 = vunpack.c.h.b16 %v1067
    %v1659 = vunpack.c.l.b16 %v1068
    %v1660 = vunpack.c.h.b16 %v1068
    %v1661 = vunpack.c.l.b16 %v1069
    %v1662 = vunpack.c.h.b16 %v1069
    %v1663 = vunpack.c.l.b16 %v1070
    %v1664 = vunpack.c.h.b16 %v1070
    %v1665 = vunpack.c.l.b16 %v1071
    %v1666 = vunpack.c.h.b16 %v1071
    %v1667 = vunpack.c.l.b16 %v1072
    %v1668 = vunpack.c.h.b16 %v1072
    %v1669 = vunpack.c.l.b16 %v1073
    %v1670 = vunpack.c.h.b16 %v1073
    %v1671 = vunpack.c.l.b16 %v1074
    %v1672 = vunpack.c.h.b16 %v1074
    %v1673 = vunpack.c.l.b16 %v1075
    %v1674 = vunpack.c.h.b16 %v1075
    %v1675 = vunpack.c.l.b16 %v1076
    %v1676 = vunpack.c.h.b16 %v1076
    %v1677 = vunpack.c.l.b16 %v1077
    %v1678 = vunpack.c.h.b16 %v1077
    %v1679 = vunpack.c.l.b16 %v1078
    %v1680 = vunpack.c.h.b16 %v1078
    %v1681 = vunpack.c.l.b16 %v1079
    %v1682 = vunpack.c.h.b16 %v1079
    %v1683 = vunpack.c.l.b16 %v1080
    %v1684 = vunpack.c.h.b16 %v1080
    %v1685 = vunpack.c.l.b16 %v1081
    %v1686 = vunpack.c.h.b16 %v1081
    %v1687 = vunpack.c.l.b16 %v1082
    %v1688 = vunpack.c.h.b16 %v1082
    %v1689 = vunpack.c.l.b16 %v1083
    %v1690 = vunpack.c.h.b16 %v1083
    %v1691 = vunpack.c.l.b16 %v1084
    %v1692 = vunpack.c.h.b16 %v1084
    %v1693 = vunpack.c.l.b16 %v1085
    %v1694 = vunpack.c.h.b16 %v1085
    %v1695 = vunpack.c.l.b16 %v1086
    %v1696 = vunpack.c.h.b16 %v1086
    %v1697 = vunpack.c.l.b16 %v1087
    %v1698 = vunpack.c.h.b16 %v1087
    %v1699 = vunpack.c.l.b16 %v1088
    %v1700 = vunpack.c.h.b16 %v1088
    %v1701 = vunpack.c.l.b16 %v1089
    %v1702 = vunpack.c.h.b16 %v1089
    %v1703 = vunpack.c.l.b16 %v1090
    %v1704 = vunpack.c.h.b16 %v1090
    %v1705 = vunpack.c.l.b16 %v1091
    %v1706 = vunpack.c.h.b16 %v1091
    %v1707 = vunpack.c.l.b16 %v1092
    %v1708 = vunpack.c.h.b16 %v1092
    %v1709 = vunpack.c.l.b16 %v1093
    %v1710 = vunpack.c.h.b16 %v1093
    %v1711 = vunpack.c.l.b16 %v1094
    %v1712 = vunpack.c.h.b16 %v1094
    %v1713 = vunpack.c.l.b16 %v1095
    %v1714 = vunpack.c.h.b16 %v1095
    %v1715 = vunpack.c.l.b16 %v1096
    %v1716 = vunpack.c.h.b16 %v1096
    %v1717 = vunpack.c.l.b16 %v1097
    %v1718 = vunpack.c.h.b16 %v1097
    %v1719 = vunpack.c.l.b16 %v1098
    %v1720 = vunpack.c.h.b16 %v1098
    %v1721 = vunpack.c.l.b16 %v1099
    %v1722 = vunpack.c.h.b16 %v1099
    %v1723 = vunpack.c.l.b16 %v1100
    %v1724 = vunpack.c.h.b16 %v1100
    %v1725 = vunpack.c.l.b16 %v1101
    %v1726 = vunpack.c.h.b16 %v1101
    %v1727 = vunpack.c.l.b16 %v1102
    %v1728 = vunpack.c.h.b16 %v1102
    %v1729 = vunpack.c.l.b16 %v1103
    %v1730 = vunpack.c.h.b16 %v1103
    %v1731 = vunpack.c.l.b16 %v1104
    %v1732 = vunpack.c.h.b16 %v1104
    %v1733 = vunpack.c.l.b16 %v1105
    %v1734 = vunpack.c.h.b16 %v1105
    %v1735 = vunpack.c.l.b16 %v1106
    %v1736 = vunpack.c.h.b16 %v1106
    %v1737 = vunpack.c.l.b16 %v1107
    %v1738 = vunpack.c.h.b16 %v1107
    %v1739 = vunpack.c.l.b16 %v1108
    %v1740 = vunpack.c.h.b16 %v1108
    %v1741 = vunpack.c.l.b16 %v1109
    %v1742 = vunpack.c.h.b16 %v1109
    %v1743 = vunpack.c.l.b16 %v1110
    %v1744 = vunpack.c.h.b16 %v1110
    %v1745 = vunpack.c.l.b16 %v1111
    %v1746 = vunpack.c.h.b16 %v1111
    %v1747 = vunpack.c.l.b16 %v1112
    %v1748 = vunpack.c.h.b16 %v1112
    %v1749 = vunpack.c.l.b16 %v1113
    %v1750 = vunpack.c.h.b16 %v1113
    %v1751 = vunpack.c.l.b16 %v1114
    %v1752 = vunpack.c.h.b16 %v1114
    %v1753 = vunpack.c.l.b16 %v1115
    %v1754 = vunpack.c.h.b16 %v1115
    %v1755 = vunpack.c.l.b16 %v1116
    %v1756 = vunpack.c.h.b16 %v1116
    %v1757 = vunpack.c.l.b16 %v1117
    %v1758 = vunpack.c.h.b16 %v1117
    %v1759 = vunpack.c.l.b16 %v1118
    %v1760 = vunpack.c.h.b16 %v1118
    %v1761 = vunpack.c.l.b16 %v1119
    %v1762 = vunpack.c.h.b16 %v1119
    %v1763 = vunpack.c.l.b16 %v1120
    %v1764 = vunpack.c.h.b16 %v1120
    %v1765 = vunpack.c.l.b16 %v1121
    %v1766 = vunpack.c.h.b16 %v1121
    %v1767 = vunpack.c.l.b16 %v1122
    %v1768 = vunpack.c.h.b16 %v1122
    %v1769 = vunpack.c.l.b16 %v1123
    %v1770 = vunpack.c.h.b16 %v1123
    %v1771 = vunpack.c.l.b16 %v1124
    %v1772 = vunpack.c.h.b16 %v1124
    %v1773 = vunpack.c.l.b16 %v1125
    %v1774 = vunpack.c.h.b16 %v1125
    %v1775 = vunpack.c.l.b16 %v1126
    %v1776 = vunpack.c.h.b16 %v1126
    %v1777 = vunpack.c.l.b16 %v1127
    %v1778 = vunpack.c.h.b16 %v1127
    %v1779 = vunpack.c.l.b16 %v1128
    %v1780 = vunpack.c.h.b16 %v1128
    %v1781 = vunpack.c.l.b16 %v1129
    %v1782 = vunpack.c.h.b16 %v1129
    %v1783 = vunpack.c.l.b16 %v1130
    %v1784 = vunpack.c.h.b16 %v1130
    %v1785 = vunpack.c.l.b16 %v1131
    %v1786 = vunpack.c.h.b16 %v1131
    %v1787 = vunpack.c.l.b16 %v1132
    %v1788 = vunpack.c.h.b16 %v1132
    %v1789 = vunpack.c.l.b16 %v1133
    %v1790 = vunpack.c.h.b16 %v1133
    %v1791 = vunpack.c.l.b16 %v1134
    %v1792 = vunpack.c.h.b16 %v1134
    %v1793 = vunpack.c.l.b16 %v1135
    %v1794 = vunpack.c.h.b16 %v1135
    %v1795 = vunpack.c.l.b16 %v1136
    %v1796 = vunpack.c.h.b16 %v1136
    %v1797 = vunpack.c.l.b16 %v1137
    %v1798 = vunpack.c.h.b16 %v1137
    %v1799 = vunpack.c.l.b16 %v1138
    %v1800 = vunpack.c.h.b16 %v1138
    %v1801 = vunpack.c.l.b16 %v1139
    %v1802 = vunpack.c.h.b16 %v1139
    %v1803 = vunpack.c.l.b16 %v1140
    %v1804 = vunpack.c.h.b16 %v1140
    %v1805 = vunpack.c.l.b16 %v1141
    %v1806 = vunpack.c.h.b16 %v1141
    %v1807 = vunpack.c.l.b16 %v1142
    %v1808 = vunpack.c.h.b16 %v1142
    %v1809 = vunpack.c.l.b16 %v1143
    %v1810 = vunpack.c.h.b16 %v1143
    %v1811 = vunpack.c.l.b16 %v1144
    %v1812 = vunpack.c.h.b16 %v1144
    %v1813 = vunpack.c.l.b16 %v1145
    %v1814 = vunpack.c.h.b16 %v1145
    %v1815 = vunpack.c.l.b16 %v1146
    %v1816 = vunpack.c.h.b16 %v1146
    %v1817 = vunpack.c.l.b16 %v1147
    %v1818 = vunpack.c.h.b16 %v1147
    %v1819 = vunpack.c.l.b16 %v1148
    %v1820 = vunpack.c.h.b16 %v1148
    %v1821 = vunpack.c.l.b16 %v1149
    %v1822 = vunpack.c.h.b16 %v1149
    %v1823 = vunpack.c.l.b16 %v1150
    %v1824 = vunpack.c.h.b16 %v1150
    %v1825 = vunpack.c.l.b16 %v1151
    %v1826 = vunpack.c.h.b16 %v1151
    %v1827 = vunpack.c.l.b16 %v1152
    %v1828 = vunpack.c.h.b16 %v1152
    %v1829 = vunpack.c.l.b16 %v1153
    %v1830 = vunpack.c.h.b16 %v1153
    %v1831 = vunpack.c.l.b16 %v1154
    %v1832 = vunpack.c.h.b16 %v1154
    %v1833 = vunpack.c.l.b16 %v1155
    %v1834 = vunpack.c.h.b16 %v1155
    %v1835 = vunpack.c.l.b16 %v1156
    %v1836 = vunpack.c.h.b16 %v1156
    %v1837 = vunpack.c.l.b16 %v1157
    %v1838 = vunpack.c.h.b16 %v1157
    %v1839 = vunpack.c.l.b16 %v1158
    %v1840 = vunpack.c.h.b16 %v1158
    %v1841 = vunpack.c.l.b16 %v1159
    %v1842 = vunpack.c.h.b16 %v1159
    %v1843 = vunpack.c.l.b16 %v1160
    %v1844 = vunpack.c.h.b16 %v1160
    %v1845 = vunpack.c.l.b16 %v1161
    %v1846 = vunpack.c.h.b16 %v1161
    %v1847 = vunpack.c.l.b16 %v1162
    %v1848 = vunpack.c.h.b16 %v1162
    %v1849 = vunpack.c.l.b16 %v1163
    %v1850 = vunpack.c.h.b16 %v1163
    %v1851 = vunpack.c.l.b16 %v1164
    %v1852 = vunpack.c.h.b16 %v1164
    %v1853 = vunpack.c.l.b16 %v1165
    %v1854 = vunpack.c.h.b16 %v1165
    %v1855 = vunpack.c.l.b16 %v1166
    %v1856 = vunpack.c.h.b16 %v1166
    %v1857 = vunpack.c.l.b16 %v1167
    %v1858 = vunpack.c.h.b16 %v1167
    %v1859 = vunpack.c.l.b16 %v1168
    %v1860 = vunpack.c.h.b16 %v1168
    %v1861 = vunpack.c.l.b16 %v1169
    %v1862 = vunpack.c.h.b16 %v1169
    %v1863 = vunpack.c.l.b16 %v1170
    %v1864 = vunpack.c.h.b16 %v1170
    %v1865 = vunpack.c.l.b16 %v1171
    %v1866 = vunpack.c.h.b16 %v1171
    %v1867 = vunpack.c.l.b16 %v1172
    %v1868 = vunpack.c.h.b16 %v1172
    %v1869 = vunpack.c.l.b16 %v1173
    %v1870 = vunpack.c.h.b16 %v1173
    %v1871 = vunpack.c.l.b16 %v1174
    %v1872 = vunpack.c.h.b16 %v1174
    %v1873 = vunpack.c.l.b16 %v1175
    %v1874 = vunpack.c.h.b16 %v1175
    %v1875 = vunpack.c.l.b16 %v1176
    %v1876 = vunpack.c.h.b16 %v1176
    %v1877 = vunpack.c.l.b16 %v1177
    %v1878 = vunpack.c.h.b16 %v1177
    %v1879 = vunpack.c.l.b16 %v1178
    %v1880 = vunpack.c.h.b16 %v1178
    %v1881 = vunpack.c.l.b16 %v1179
    %v1882 = vunpack.c.h.b16 %v1179
    %v1883 = vunpack.c.l.b16 %v1180
    %v1884 = vunpack.c.h.b16 %v1180
    %v1885 = vunpack.c.l.b16 %v1181
    %v1886 = vunpack.c.h.b16 %v1181
    %v1887 = vunpack.c.l.b16 %v1182
    %v1888 = vunpack.c.h.b16 %v1182
    %v1889 = vunpack.c.l.b16 %v1183
    %v1890 = vunpack.c.h.b16 %v1183
    %v1891 = vunpack.c.l.b16 %v1184
    %v1892 = vunpack.c.h.b16 %v1184
    %v1893 = vunpack.c.l.b16 %v1185
    %v1894 = vunpack.c.h.b16 %v1185
    %v1895 = vunpack.c.l.b16 %v1186
    %v1896 = vunpack.c.h.b16 %v1186
    %v1897 = vunpack.c.l.b16 %v1187
    %v1898 = vunpack.c.h.b16 %v1187
    %v1899 = vunpack.c.l.b16 %v1188
    %v1900 = vunpack.c.h.b16 %v1188
    %v1901 = vunpack.c.l.b16 %v1189
    %v1902 = vunpack.c.h.b16 %v1189
    %v1903 = vunpack.c.l.b16 %v1190
    %v1904 = vunpack.c.h.b16 %v1190
    %v1905 = vunpack.c.l.b16 %v1191
    %v1906 = vunpack.c.h.b16 %v1191
    %v1907 = vunpack.c.l.b16 %v1192
    %v1908 = vunpack.c.h.b16 %v1192
    %v1909 = vunpack.c.l.b16 %v1193
    %v1910 = vunpack.c.h.b16 %v1193
    %v1911 = vunpack.c.l.b16 %v1194
    %v1912 = vunpack.c.h.b16 %v1194
    %v1913 = vunpack.c.l.b16 %v1195
    %v1914 = vunpack.c.h.b16 %v1195
    %v1915 = vunpack.c.l.b16 %v1196
    %v1916 = vunpack.c.h.b16 %v1196
    %v1917 = vunpack.c.l.b16 %v1197
    %v1918 = vunpack.c.h.b16 %v1197
    %v1919 = vunpack.c.l.b16 %v1198
    %v1920 = vunpack.c.h.b16 %v1198
    %v1921 = vunpack.c.l.b16 %v1199
    %v1922 = vunpack.c.h.b16 %v1199
    %v1923 = vunpack.c.l.b16 %v1200
    %v1924 = vunpack.c.h.b16 %v1200
    %v1925 = vunpack.c.l.b16 %v1201
    %v1926 = vunpack.c.h.b16 %v1201
    %v1927 = vunpack.c.l.b16 %v1202
    %v1928 = vunpack.c.h.b16 %v1202
    %v1929 = vunpack.c.l.b16 %v1203
    %v1930 = vunpack.c.h.b16 %v1203
    %v1931 = vunpack.c.l.b16 %v1204
    %v1932 = vunpack.c.h.b16 %v1204
    %v1933 = vunpack.c.l.b16 %v1205
    %v1934 = vunpack.c.h.b16 %v1205
    %v1935 = vunpack.c.l.b16 %v1206
    %v1936 = vunpack.c.h.b16 %v1206
    %v1937 = vunpack.c.l.b16 %v1207
    %v1938 = vunpack.c.h.b16 %v1207
    %v1939 = vunpack.c.l.b16 %v1208
    %v1940 = vunpack.c.h.b16 %v1208
    %v1941 = vunpack.c.l.b16 %v1209
    %v1942 = vunpack.c.h.b16 %v1209
    %v1943 = vunpack.c.l.b16 %v1210
    %v1944 = vunpack.c.h.b16 %v1210
    %v1945 = vunpack.c.l.b16 %v1211
    %v1946 = vunpack.c.h.b16 %v1211
    %v1947 = vunpack.c.l.b16 %v1212
    %v1948 = vunpack.c.h.b16 %v1212
    %v1949 = vunpack.c.l.b16 %v1213
    %v1950 = vunpack.c.h.b16 %v1213
    %v1951 = vunpack.c.l.b16 %v1214
    %v1952 = vunpack.c.h.b16 %v1214
    %v1953 = vunpack.c.l.b16 %v1215
    %v1954 = vunpack.c.h.b16 %v1215
    %v1955 = vunpack.c.l.b16 %v1216
    %v1956 = vunpack.c.h.b16 %v1216
    %v1957 = vunpack.c.l.b16 %v1217
    %v1958 = vunpack.c.h.b16 %v1217
    %v1959 = vunpack.c.l.b16 %v1218
    %v1960 = vunpack.c.h.b16 %v1218
    %v1961 = vunpack.c.l.b16 %v1219
    %v1962 = vunpack.c.h.b16 %v1219
    %v1963 = vunpack.c.l.b16 %v1220
    %v1964 = vunpack.c.h.b16 %v1220
    %v1965 = vunpack.c.l.b16 %v1221
    %v1966 = vunpack.c.h.b16 %v1221
    %v1967 = vunpack.c.l.b16 %v1222
    %v1968 = vunpack.c.h.b16 %v1222
    %v1969 = vunpack.c.l.b16 %v1223
    %v1970 = vunpack.c.h.b16 %v1223
    %v1971 = vunpack.c.l.b16 %v1224
    %v1972 = vunpack.c.h.b16 %v1224
    %v1973 = vunpack.c.l.b16 %v1225
    %v1974 = vunpack.c.h.b16 %v1225
    %v1975 = vunpack.c.l.b16 %v1226
    %v1976 = vunpack.c.h.b16 %v1226
    %v1977 = vunpack.c.l.b16 %v1227
    %v1978 = vunpack.c.h.b16 %v1227
    %v1979 = vunpack.c.l.b16 %v1228
    %v1980 = vunpack.c.h.b16 %v1228
    %v1981 = vunpack.c.l.b16 %v1229
    %v1982 = vunpack.c.h.b16 %v1229
    %v1983 = vunpack.c.l.b16 %v1230
    %v1984 = vunpack.c.h.b16 %v1230
    %v1985 = vunpack.c.l.b16 %v1231
    %v1986 = vunpack.c.h.b16 %v1231
    %v1987 = vunpack.c.l.b16 %v1232
    %v1988 = vunpack.c.h.b16 %v1232
    %v1989 = vunpack.c.l.b16 %v1233
    %v1990 = vunpack.c.h.b16 %v1233
    %v1991 = vunpack.c.l.b16 %v1234
    %v1992 = vunpack.c.h.b16 %v1234
    %v1993 = vunpack.c.l.b16 %v1235
    %v1994 = vunpack.c.h.b16 %v1235
    %v1995 = vunpack.c.l.b16 %v1236
    %v1996 = vunpack.c.h.b16 %v1236
    %v1997 = vunpack.c.l.b16 %v1237
    %v1998 = vunpack.c.h.b16 %v1237
    %v1999 = vunpack.c.l.b16 %v1238
    %v2000 = vunpack.c.h.b16 %v1238
    %v2001 = vunpack.c.l.b16 %v1239
    %v2002 = vunpack.c.h.b16 %v1239
    %v2003 = vunpack.c.l.b16 %v1240
    %v2004 = vunpack.c.h.b16 %v1240
    %v2005 = vunpack.c.l.b16 %v1241
    %v2006 = vunpack.c.h.b16 %v1241
    %v2007 = vunpack.c.l.b16 %v1242
    %v2008 = vunpack.c.h.b16 %v1242
    %v2009 = vunpack.c.l.b16 %v1243
    %v2010 = vunpack.c.h.b16 %v1243
    %v2011 = vunpack.c.l.b16 %v1244
    %v2012 = vunpack.c.h.b16 %v1244
    %v2013 = vunpack.c.l.b16 %v1245
    %v2014 = vunpack.c.h.b16 %v1245
    %v2015 = vunpack.c.l.b16 %v1246
    %v2016 = vunpack.c.h.b16 %v1246
    %v2017 = vunpack.c.l.b16 %v1247
    %v2018 = vunpack.c.h.b16 %v1247
    %v2019 = vunpack.c.l.b16 %v1248
    %v2020 = vunpack.c.h.b16 %v1248
    %v2021 = vunpack.c.l.b16 %v1249
    %v2022 = vunpack.c.h.b16 %v1249
    %v2023 = vunpack.c.l.b16 %v1250
    %v2024 = vunpack.c.h.b16 %v1250
    %v2025 = vunpack.c.l.b16 %v1251
    %v2026 = vunpack.c.h.b16 %v1251
    %v2027 = vunpack.c.l.b16 %v1252
    %v2028 = vunpack.c.h.b16 %v1252
    %v2029 = vunpack.c.l.b16 %v1253
    %v2030 = vunpack.c.h.b16 %v1253
    %v2031 = vunpack.c.l.b16 %v1254
    %v2032 = vunpack.c.h.b16 %v1254
    %v2033 = vunpack.c.l.b16 %v1255
    %v2034 = vunpack.c.h.b16 %v1255
    %v2035 = vunpack.c.l.b16 %v1256
    %v2036 = vunpack.c.h.b16 %v1256
    %v2037 = vunpack.c.l.b16 %v1257
    %v2038 = vunpack.c.h.b16 %v1257
    %v2039 = vunpack.c.l.b16 %v1258
    %v2040 = vunpack.c.h.b16 %v1258
    %v2041 = vunpack.c.l.b16 %v1259
    %v2042 = vunpack.c.h.b16 %v1259
    %v2043 = vunpack.c.l.b16 %v1260
    %v2044 = vunpack.c.h.b16 %v1260
    %v2045 = vunpack.c.l.b16 %v1261
    %v2046 = vunpack.c.h.b16 %v1261
    %v2047 = vunpack.c.l.b16 %v1262
    %v2048 = vunpack.c.h.b16 %v1262
    %v2049 = vpack.c.b16 %v1545, %v1537
    %v2050 = vpack.c.b16 %v1546, %v1538
    %v2051 = vpack.c.b16 %v1547, %v1539
    %v2052 = vpack.c.b16 %v1548, %v1540
    %v2053 = vpack.c.b16 %v1549, %v1541
    %v2054 = vpack.c.b16 %v1550, %v1542
    %v2055 = vpack.c.b16 %v1551, %v1543
    %v2056 = vpack.c.b16 %v1552, %v1544
    %v2057 = vpack.c.b16 %v1561, %v1553
    %v2058 = vpack.c.b16 %v1562, %v1554
    %v2059 = vpack.c.b16 %v1563, %v1555
    %v2060 = vpack.c.b16 %v1564, %v1556
    %v2061 = vpack.c.b16 %v1565, %v1557
    %v2062 = vpack.c.b16 %v1566, %v1558
    %v2063 = vpack.c.b16 %v1567, %v1559
    %v2064 = vpack.c.b16 %v1568, %v1560
    %v2065 = vpack.c.b16 %v1577, %v1569
    %v2066 = vpack.c.b16 %v1578, %v1570
    %v2067 = vpack.c.b16 %v1579, %v1571
    %v2068 = vpack.c.b16 %v1580, %v1572
    %v2069 = vpack.c.b16 %v1581, %v1573
    %v2070 = vpack.c.b16 %v1582, %v1574
    %v2071 = vpack.c.b16 %v1583, %v1575
    %v2072 = vpack.c.b16 %v1584, %v1576
    %v2073 = vpack.c.b16 %v1593, %v1585
    %v2074 = vpack.c.b16 %v1594, %v1586
    %v2075 = vpack.c.b16 %v1595, %v1587
    %v2076 = vpack.c.b16 %v1596, %v1588
    %v2077 = vpack.c.b16 %v1597, %v1589
    %v2078 = vpack.c.b16 %v1598, %v1590
    %v2079 = vpack.c.b16 %v1599, %v1591
    %v2080 = vpack.c.b16 %v1600, %v1592
    %v2081 = vpack.c.b16 %v1609, %v1601
    %v2082 = vpack.c.b16 %v1610, %v1602
    %v2083 = vpack.c.b16 %v1611, %v1603
    %v2084 = vpack.c.b16 %v1612, %v1604
    %v2085 = vpack.c.b16 %v1613, %v1605
    %v2086 = vpack.c.b16 %v1614, %v1606
    %v2087 = vpack.c.b16 %v1615, %v1607
    %v2088 = vpack.c.b16 %v1616, %v1608
    %v2089 = vpack.c.b16 %v1625, %v1617
    %v2090 = vpack.c.b16 %v1626, %v1618
    %v2091 = vpack.c.b16 %v1627, %v1619
    %v2092 = vpack.c.b16 %v1628, %v1620
    %v2093 = vpack.c.b16 %v1629, %v1621
    %v2094 = vpack.c.b16 %v1630, %v1622
    %v2095 = vpack.c.b16 %v1631, %v1623
    %v2096 = vpack.c.b16 %v1632, %v1624
    %v2097 = vpack.c.b16 %v1641, %v1633
    %v2098 = vpack.c.b16 %v1642, %v1634
    %v2099 = vpack.c.b16 %v1643, %v1635
    %v2100 = vpack.c.b16 %v1644, %v1636
    %v2101 = vpack.c.b16 %v1645, %v1637
    %v2102 = vpack.c.b16 %v1646, %v1638
    %v2103 = vpack.c.b16 %v1647, %v1639
    %v2104 = vpack.c.b16 %v1648, %v1640
    %v2105 = vpack.c.b16 %v1657, %v1649
    %v2106 = vpack.c.b16 %v1658, %v1650
    %v2107 = vpack.c.b16 %v1659, %v1651
    %v2108 = vpack.c.b16 %v1660, %v1652
    %v2109 = vpack.c.b16 %v1661, %v1653
    %v2110 = vpack.c.b16 %v1662, %v1654
    %v2111 = vpack.c.b16 %v1663, %v1655
    %v2112 = vpack.c.b16 %v1664, %v1656
    %v2113 = vpack.c.b16 %v1673, %v1665
    %v2114 = vpack.c.b16 %v1674, %v1666
    %v2115 = vpack.c.b16 %v1675, %v1667
    %v2116 = vpack.c.b16 %v1676, %v1668
    %v2117 = vpack.c.b16 %v1677, %v1669
    %v2118 = vpack.c.b16 %v1678, %v1670
    %v2119 = vpack.c.b16 %v1679, %v1671
    %v2120 = vpack.c.b16 %v1680, %v1672
    %v2121 = vpack.c.b16 %v1689, %v1681
    %v2122 = vpack.c.b16 %v1690, %v1682
    %v2123 = vpack.c.b16 %v1691, %v1683
    %v2124 = vpack.c.b16 %v1692, %v1684
    %v2125 = vpack.c.b16 %v1693, %v1685
    %v2126 = vpack.c.b16 %v1694, %v1686
    %v2127 = vpack.c.b16 %v1695, %v1687
    %v2128 = vpack.c.b16 %v1696, %v1688
    %v2129 = vpack.c.b16 %v1705, %v1697
    %v2130 = vpack.c.b16 %v1706, %v1698
    %v2131 = vpack.c.b16 %v1707, %v1699
    %v2132 = vpack.c.b16 %v1708, %v1700
    %v2133 = vpack.c.b16 %v1709, %v1701
    %v2134 = vpack.c.b16 %v1710, %v1702
    %v2135 = vpack.c.b16 %v1711, %v1703
    %v2136 = vpack.c.b16 %v1712, %v1704
    %v2137 = vpack.c.b16 %v1721, %v1713
    %v2138 = vpack.c.b16 %v1722, %v1714
    %v2139 = vpack.c.b16 %v1723, %v1715
    %v2140 = vpack.c.b16 %v1724, %v1716
    %v2141 = vpack.c.b16 %v1725, %v1717
    %v2142 = vpack.c.b16 %v1726, %v1718
    %v2143 = vpack.c.b16 %v1727, %v1719
    %v2144 = vpack.c.b16 %v1728, %v1720
    %v2145 = vpack.c.b16 %v1737, %v1729
    %v2146 = vpack.c.b16 %v1738, %v1730
    %v2147 = vpack.c.b16 %v1739, %v1731
    %v2148 = vpack.c.b16 %v1740, %v1732
    %v2149 = vpack.c.b16 %v1741, %v1733
    %v2150 = vpack.c.b16 %v1742, %v1734
    %v2151 = vpack.c.b16 %v1743, %v1735
    %v2152 = vpack.c.b16 %v1744, %v1736
    %v2153 = vpack.c.b16 %v1753, %v1745
    %v2154 = vpack.c.b16 %v1754, %v1746
    %v2155 = vpack.c.b16 %v1755, %v1747
    %v2156 = vpack.c.b16 %v1756, %v1748
    %v2157 = vpack.c.b16 %v1757, %v1749
    %v2158 = vpack.c.b16 %v1758, %v1750
    %v2159 = vpack.c.b16 %v1759, %v1751
    %v2160 = vpack.c.b16 %v1760, %v1752
    %v2161 = vpack.c.b16 %v1769, %v1761
    %v2162 = vpack.c.b16 %v1770, %v1762
    %v2163 = vpack.c.b16 %v1771, %v1763
    %v2164 = vpack.c.b16 %v1772, %v1764
    %v2165 = vpack.c.b16 %v1773, %v1765
    %v2166 = vpack.c.b16 %v1774, %v1766
    %v2167 = vpack.c.b16 %v1775, %v1767
    %v2168 = vpack.c.b16 %v1776, %v1768
    %v2169 = vpack.c.b16 %v1785, %v1777
    %v2170 = vpack.c.b16 %v1786, %v1778
    %v2171 = vpack.c.b16 %v1787, %v1779
    %v2172 = vpack.c.b16 %v1788, %v1780
    %v2173 = vpack.c.b16 %v1789, %v1781
    %v2174 = vpack.c.b16 %v1790, %v1782
    %v2175 = vpack.c.b16 %v1791, %v1783
    %v2176 = vpack.c.b16 %v1792, %v1784
    %v2177 = vpack.c.b16 %v1801, %v1793
    %v2178 = vpack.c.b16 %v1802, %v1794
    %v2179 = vpack.c.b16 %v1803, %v1795
    %v2180 = vpack.c.b16 %v1804, %v1796
    %v2181 = vpack.c.b16 %v1805, %v1797
    %v2182 = vpack.c.b16 %v1806, %v1798
    %v2183 = vpack.c.b16 %v1807, %v1799
    %v2184 = vpack.c.b16 %v1808, %v1800
    %v2185 = vpack.c.b16 %v1817, %v1809
    %v2186 = vpack.c.b16 %v1818, %v1810
    %v2187 = vpack.c.b16 %v1819, %v1811
    %v2188 = vpack.c.b16 %v1820, %v1812
    %v2189 = vpack.c.b16 %v1821, %v1813
    %v2190 = vpack.c.b16 %v1822, %v1814
    %v2191 = vpack.c.b16 %v1823, %v1815
    %v2192 = vpack.c.b16 %v1824, %v1816
    %v2193 = vpack.c.b16 %v1833, %v1825
    %v2194 = vpack.c.b16 %v1834, %v1826
    %v2195 = vpack.c.b16 %v1835, %v1827
    %v2196 = vpack.c.b16 %v1836, %v1828
    %v2197 = vpack.c.b16 %v1837, %v1829
    %v2198 = vpack.c.b16 %v1838, %v1830
    %v2199 = vpack.c.b16 %v1839, %v1831
    %v2200 = vpack.c.b16 %v1840, %v1832
    %v2201 = vpack.c.b16 %v1849, %v1841
    %v2202 = vpack.c.b16 %v1850, %v1842
    %v2203 = vpack.c.b16 %v1851, %v1843
    %v2204 = vpack.c.b16 %v1852, %v1844
    %v2205 = vpack.c.b16 %v1853, %v1845
    %v2206 = vpack.c.b16 %v1854, %v1846
    %v2207 = vpack.c.b16 %v1855, %v1847
    %v2208 = vpack.c.b16 %v1856, %v1848
    %v2209 = vpack.c.b16 %v1865, %v1857
    %v2210 = vpack.c.b16 %v1866, %v1858
    %v2211 = vpack.c.b16 %v1867, %v1859
    %v2212 = vpack.c.b16 %v1868, %v1860
    %v2213 = vpack.c.b16 %v1869, %v1861
    %v2214 = vpack.c.b16 %v1870, %v1862
    %v2215 = vpack.c.b16 %v1871, %v1863
    %v2216 = vpack.c.b16 %v1872, %v1864
    %v2217 = vpack.c.b16 %v1881, %v1873
    %v2218 = vpack.c.b16 %v1882, %v1874
    %v2219 = vpack.c.b16 %v1883, %v1875
    %v2220 = vpack.c.b16 %v1884, %v1876
    %v2221 = vpack.c.b16 %v1885, %v1877
    %v2222 = vpack.c.b16 %v1886, %v1878
    %v2223 = vpack.c.b16 %v1887, %v1879
    %v2224 = vpack.c.b16 %v1888, %v1880
    %v2225 = vpack.c.b16 %v1897, %v1889
    %v2226 = vpack.c.b16 %v1898, %v1890
    %v2227 = vpack.c.b16 %v1899, %v1891
    %v2228 = vpack.c.b16 %v1900, %v1892
    %v2229 = vpack.c.b16 %v1901, %v1893
    %v2230 = vpack.c.b16 %v1902, %v1894
    %v2231 = vpack.c.b16 %v1903, %v1895
    %v2232 = vpack.c.b16 %v1904, %v1896
    %v2233 = vpack.c.b16 %v1913, %v1905
    %v2234 = vpack.c.b16 %v1914, %v1906
    %v2235 = vpack.c.b16 %v1915, %v1907
    %v2236 = vpack.c.b16 %v1916, %v1908
    %v2237 = vpack.c.b16 %v1917, %v1909
    %v2238 = vpack.c.b16 %v1918, %v1910
    %v2239 = vpack.c.b16 %v1919, %v1911
    %v2240 = vpack.c.b16 %v1920, %v1912
    %v2241 = vpack.c.b16 %v1929, %v1921
    %v2242 = vpack.c.b16 %v1930, %v1922
    %v2243 = vpack.c.b16 %v1931, %v1923
    %v2244 = vpack.c.b16 %v1932, %v1924
    %v2245 = vpack.c.b16 %v1933, %v1925
    %v2246 = vpack.c.b16 %v1934, %v1926
    %v2247 = vpack.c.b16 %v1935, %v1927
    %v2248 = vpack.c.b16 %v1936, %v1928
    %v2249 = vpack.c.b16 %v1945, %v1937
    %v2250 = vpack.c.b16 %v1946, %v1938
    %v2251 = vpack.c.b16 %v1947, %v1939
    %v2252 = vpack.c.b16 %v1948, %v1940
    %v2253 = vpack.c.b16 %v1949, %v1941
    %v2254 = vpack.c.b16 %v1950, %v1942
    %v2255 = vpack.c.b16 %v1951, %v1943
    %v2256 = vpack.c.b16 %v1952, %v1944
    %v2257 = vpack.c.b16 %v1961, %v1953
    %v2258 = vpack.c.b16 %v1962, %v1954
    %v2259 = vpack.c.b16 %v1963, %v1955
    %v2260 = vpack.c.b16 %v1964, %v1956
    %v2261 = vpack.c.b16 %v1965, %v1957
    %v2262 = vpack.c.b16 %v1966, %v1958
    %v2263 = vpack.c.b16 %v1967, %v1959
    %v2264 = vpack.c.b16 %v1968, %v1960
    %v2265 = vpack.c.b16 %v1977, %v1969
    %v2266 = vpack.c.b16 %v1978, %v1970
    %v2267 = vpack.c.b16 %v1979, %v1971
    %v2268 = vpack.c.b16 %v1980, %v1972
    %v2269 = vpack.c.b16 %v1981, %v1973
    %v2270 = vpack.c.b16 %v1982, %v1974
    %v2271 = vpack.c.b16 %v1983, %v1975
    %v2272 = vpack.c.b16 %v1984, %v1976
    %v2273 = vpack.c.b16 %v1993, %v1985
    %v2274 = vpack.c.b16 %v1994, %v1986
    %v2275 = vpack.c.b16 %v1995, %v1987
    %v2276 = vpack.c.b16 %v1996, %v1988
    %v2277 = vpack.c.b16 %v1997, %v1989
    %v2278 = vpack.c.b16 %v1998, %v1990
    %v2279 = vpack.c.b16 %v1999, %v1991
    %v2280 = vpack.c.b16 %v2000, %v1992
    %v2281 = vpack.c.b16 %v2009, %v2001
    %v2282 = vpack.c.b16 %v2010, %v2002
    %v2283 = vpack.c.b16 %v2011, %v2003
    %v2284 = vpack.c.b16 %v2012, %v2004
    %v2285 = vpack.c.b16 %v2013, %v2005
    %v2286 = vpack.c.b16 %v2014, %v2006
    %v2287 = vpack.c.b16 %v2015, %v2007
    %v2288 = vpack.c.b16 %v2016, %v2008
    %v2289 = vpack.c.b16 %v2025, %v2017
    %v2290 = vpack.c.b16 %v2026, %v2018
    %v2291 = vpack.c.b16 %v2027, %v2019
    %v2292 = vpack.c.b16 %v2028, %v2020
    %v2293 = vpack.c.b16 %v2029, %v2021
    %v2294 = vpack.c.b16 %v2030, %v2022
    %v2295 = vpack.c.b16 %v2031, %v2023
    %v2296 = vpack.c.b16 %v2032, %v2024
    %v2297 = vpack.c.b16 %v2041, %v2033
    %v2298 = vpack.c.b16 %v2042, %v2034
    %v2299 = vpack.c.b16 %v2043, %v2035
    %v2300 = vpack.c.b16 %v2044, %v2036
    %v2301 = vpack.c.b16 %v2045, %v2037
    %v2302 = vpack.c.b16 %v2046, %v2038
    %v2303 = vpack.c.b16 %v2047, %v2039
    %v2304 = vpack.c.b16 %v2048, %v2040
    %2561 = vmatpush.bf16.msra.mxu0 %v2105
    %2562 = vmatpush.bf16.msra.mxu0 %v2097
    %2563 = vmatpush.bf16.msra.mxu0 %v2089
    %2564 = vmatpush.bf16.msra.mxu0 %v2081
    %2565 = vmatpush.bf16.msra.mxu0 %v2073
    %2566 = vmatpush.bf16.msra.mxu0 %v2065
    %2567 = vmatpush.bf16.msra.mxu0 %v2057
    %2568 = vmatpush.bf16.msra.mxu0 %v2049
    %2569 = vmatmul.bf16.gmra.mxu0 %v1003
    %v2570 = vpop.f32.mrf.mxu0
    %v2571 = vadd.f32 %v1265, %v2570
    %v2572 = vpop.f32.mrf.mxu0
    %2573 = vdwg.mxu0
    %2574 = vmatpush.bf16.msra.mxu0 %v2169
    %2575 = vmatpush.bf16.msra.mxu0 %v2161
    %2576 = vmatpush.bf16.msra.mxu0 %v2153
    %2577 = vmatpush.bf16.msra.mxu0 %v2145
    %2578 = vmatpush.bf16.msra.mxu0 %v2137
    %2579 = vmatpush.bf16.msra.mxu0 %v2129
    %2580 = vmatpush.bf16.msra.mxu0 %v2121
    %2581 = vmatpush.bf16.msra.mxu0 %v2113
    %2582 = vmatmul.bf16.gmra.mxu0 %v1004
    %v2583 = vpop.f32.mrf.mxu0
    %v2584 = vadd.f32 %v2571, %v2583
    %v2585 = vpop.f32.mrf.mxu0
    %2586 = vdwg.mxu0
    %2587 = vmatpush.bf16.msra.mxu0 %v2233
    %2588 = vmatpush.bf16.msra.mxu0 %v2225
    %2589 = vmatpush.bf16.msra.mxu0 %v2217
    %2590 = vmatpush.bf16.msra.mxu0 %v2209
    %2591 = vmatpush.bf16.msra.mxu0 %v2201
    %2592 = vmatpush.bf16.msra.mxu0 %v2193
    %2593 = vmatpush.bf16.msra.mxu0 %v2185
    %2594 = vmatpush.bf16.msra.mxu0 %v2177
    %2595 = vmatmul.bf16.gmra.mxu0 %v1005
    %v2596 = vpop.f32.mrf.mxu0
    %v2597 = vadd.f32 %v2584, %v2596
    %v2598 = vpop.f32.mrf.mxu0
    %2599 = vdwg.mxu0
    %2600 = vmatpush.bf16.msra.mxu0 %v2297
    %2601 = vmatpush.bf16.msra.mxu0 %v2289
    %2602 = vmatpush.bf16.msra.mxu0 %v2281
    %2603 = vmatpush.bf16.msra.mxu0 %v2273
    %2604 = vmatpush.bf16.msra.mxu0 %v2265
    %2605 = vmatpush.bf16.msra.mxu0 %v2257
    %2606 = vmatpush.bf16.msra.mxu0 %v2249
    %2607 = vmatpush.bf16.msra.mxu0 %v2241
    %2608 = vmatmul.bf16.gmra.mxu0 %v1006
    %v2609 = vpop.f32.mrf.mxu0
    %v2610 = vadd.f32 %v2597, %v2609
    %v2611 = vpop.f32.mrf.mxu0
    %2612 = vdwg.mxu0
    %2613 = vmatpush.bf16.msra.mxu0 %v2106
    %2614 = vmatpush.bf16.msra.mxu0 %v2098
    %2615 = vmatpush.bf16.msra.mxu0 %v2090
    %2616 = vmatpush.bf16.msra.mxu0 %v2082
    %2617 = vmatpush.bf16.msra.mxu0 %v2074
    %2618 = vmatpush.bf16.msra.mxu0 %v2066
    %2619 = vmatpush.bf16.msra.mxu0 %v2058
    %2620 = vmatpush.bf16.msra.mxu0 %v2050
    %2621 = vmatmul.bf16.gmra.mxu0 %v1003
    %v2622 = vpop.f32.mrf.mxu0
    %v2623 = vadd.f32 %v1266, %v2622
    %v2624 = vpop.f32.mrf.mxu0
    %2625 = vdwg.mxu0
    %2626 = vmatpush.bf16.msra.mxu0 %v2170
    %2627 = vmatpush.bf16.msra.mxu0 %v2162
    %2628 = vmatpush.bf16.msra.mxu0 %v2154
    %2629 = vmatpush.bf16.msra.mxu0 %v2146
    %2630 = vmatpush.bf16.msra.mxu0 %v2138
    %2631 = vmatpush.bf16.msra.mxu0 %v2130
    %2632 = vmatpush.bf16.msra.mxu0 %v2122
    %2633 = vmatpush.bf16.msra.mxu0 %v2114
    %2634 = vmatmul.bf16.gmra.mxu0 %v1004
    %v2635 = vpop.f32.mrf.mxu0
    %v2636 = vadd.f32 %v2623, %v2635
    %v2637 = vpop.f32.mrf.mxu0
    %2638 = vdwg.mxu0
    %2639 = vmatpush.bf16.msra.mxu0 %v2234
    %2640 = vmatpush.bf16.msra.mxu0 %v2226
    %2641 = vmatpush.bf16.msra.mxu0 %v2218
    %2642 = vmatpush.bf16.msra.mxu0 %v2210
    %2643 = vmatpush.bf16.msra.mxu0 %v2202
    %2644 = vmatpush.bf16.msra.mxu0 %v2194
    %2645 = vmatpush.bf16.msra.mxu0 %v2186
    %2646 = vmatpush.bf16.msra.mxu0 %v2178
    %2647 = vmatmul.bf16.gmra.mxu0 %v1005
    %v2648 = vpop.f32.mrf.mxu0
    %v2649 = vadd.f32 %v2636, %v2648
    %v2650 = vpop.f32.mrf.mxu0
    %2651 = vdwg.mxu0
    %2652 = vmatpush.bf16.msra.mxu0 %v2298
    %2653 = vmatpush.bf16.msra.mxu0 %v2290
    %2654 = vmatpush.bf16.msra.mxu0 %v2282
    %2655 = vmatpush.bf16.msra.mxu0 %v2274
    %2656 = vmatpush.bf16.msra.mxu0 %v2266
    %2657 = vmatpush.bf16.msra.mxu0 %v2258
    %2658 = vmatpush.bf16.msra.mxu0 %v2250
    %2659 = vmatpush.bf16.msra.mxu0 %v2242
    %2660 = vmatmul.bf16.gmra.mxu0 %v1006
    %v2661 = vpop.f32.mrf.mxu0
    %v2662 = vadd.f32 %v2649, %v2661
    %v2663 = vpop.f32.mrf.mxu0
    %2664 = vdwg.mxu0
    %2665 = vmatpush.bf16.msra.mxu0 %v2107
    %2666 = vmatpush.bf16.msra.mxu0 %v2099
    %2667 = vmatpush.bf16.msra.mxu0 %v2091
    %2668 = vmatpush.bf16.msra.mxu0 %v2083
    %2669 = vmatpush.bf16.msra.mxu0 %v2075
    %2670 = vmatpush.bf16.msra.mxu0 %v2067
    %2671 = vmatpush.bf16.msra.mxu0 %v2059
    %2672 = vmatpush.bf16.msra.mxu0 %v2051
    %2673 = vmatmul.bf16.gmra.mxu0 %v1003
    %v2674 = vpop.f32.mrf.mxu0
    %v2675 = vadd.f32 %v1267, %v2674
    %v2676 = vpop.f32.mrf.mxu0
    %2677 = vdwg.mxu0
    %2678 = vmatpush.bf16.msra.mxu0 %v2171
    %2679 = vmatpush.bf16.msra.mxu0 %v2163
    %2680 = vmatpush.bf16.msra.mxu0 %v2155
    %2681 = vmatpush.bf16.msra.mxu0 %v2147
    %2682 = vmatpush.bf16.msra.mxu0 %v2139
    %2683 = vmatpush.bf16.msra.mxu0 %v2131
    %2684 = vmatpush.bf16.msra.mxu0 %v2123
    %2685 = vmatpush.bf16.msra.mxu0 %v2115
    %2686 = vmatmul.bf16.gmra.mxu0 %v1004
    %v2687 = vpop.f32.mrf.mxu0
    %v2688 = vadd.f32 %v2675, %v2687
    %v2689 = vpop.f32.mrf.mxu0
    %2690 = vdwg.mxu0
    %2691 = vmatpush.bf16.msra.mxu0 %v2235
    %2692 = vmatpush.bf16.msra.mxu0 %v2227
    %2693 = vmatpush.bf16.msra.mxu0 %v2219
    %2694 = vmatpush.bf16.msra.mxu0 %v2211
    %2695 = vmatpush.bf16.msra.mxu0 %v2203
    %2696 = vmatpush.bf16.msra.mxu0 %v2195
    %2697 = vmatpush.bf16.msra.mxu0 %v2187
    %2698 = vmatpush.bf16.msra.mxu0 %v2179
    %2699 = vmatmul.bf16.gmra.mxu0 %v1005
    %v2700 = vpop.f32.mrf.mxu0
    %v2701 = vadd.f32 %v2688, %v2700
    %v2702 = vpop.f32.mrf.mxu0
    %2703 = vdwg.mxu0
    %2704 = vmatpush.bf16.msra.mxu0 %v2299
    %2705 = vmatpush.bf16.msra.mxu0 %v2291
    %2706 = vmatpush.bf16.msra.mxu0 %v2283
    %2707 = vmatpush.bf16.msra.mxu0 %v2275
    %2708 = vmatpush.bf16.msra.mxu0 %v2267
    %2709 = vmatpush.bf16.msra.mxu0 %v2259
    %2710 = vmatpush.bf16.msra.mxu0 %v2251
    %2711 = vmatpush.bf16.msra.mxu0 %v2243
    %2712 = vmatmul.bf16.gmra.mxu0 %v1006
    %v2713 = vpop.f32.mrf.mxu0
    %v2714 = vadd.f32 %v2701, %v2713
    %v2715 = vpop.f32.mrf.mxu0
    %2716 = vdwg.mxu0
    %2717 = vmatpush.bf16.msra.mxu0 %v2108
    %2718 = vmatpush.bf16.msra.mxu0 %v2100
    %2719 = vmatpush.bf16.msra.mxu0 %v2092
    %2720 = vmatpush.bf16.msra.mxu0 %v2084
    %2721 = vmatpush.bf16.msra.mxu0 %v2076
    %2722 = vmatpush.bf16.msra.mxu0 %v2068
    %2723 = vmatpush.bf16.msra.mxu0 %v2060
    %2724 = vmatpush.bf16.msra.mxu0 %v2052
    %2725 = vmatmul.bf16.gmra.mxu0 %v1003
    %v2726 = vpop.f32.mrf.mxu0
    %v2727 = vadd.f32 %v1268, %v2726
    %v2728 = vpop.f32.mrf.mxu0
    %2729 = vdwg.mxu0
    %2730 = vmatpush.bf16.msra.mxu0 %v2172
    %2731 = vmatpush.bf16.msra.mxu0 %v2164
    %2732 = vmatpush.bf16.msra.mxu0 %v2156
    %2733 = vmatpush.bf16.msra.mxu0 %v2148
    %2734 = vmatpush.bf16.msra.mxu0 %v2140
    %2735 = vmatpush.bf16.msra.mxu0 %v2132
    %2736 = vmatpush.bf16.msra.mxu0 %v2124
    %2737 = vmatpush.bf16.msra.mxu0 %v2116
    %2738 = vmatmul.bf16.gmra.mxu0 %v1004
    %v2739 = vpop.f32.mrf.mxu0
    %v2740 = vadd.f32 %v2727, %v2739
    %v2741 = vpop.f32.mrf.mxu0
    %2742 = vdwg.mxu0
    %2743 = vmatpush.bf16.msra.mxu0 %v2236
    %2744 = vmatpush.bf16.msra.mxu0 %v2228
    %2745 = vmatpush.bf16.msra.mxu0 %v2220
    %2746 = vmatpush.bf16.msra.mxu0 %v2212
    %2747 = vmatpush.bf16.msra.mxu0 %v2204
    %2748 = vmatpush.bf16.msra.mxu0 %v2196
    %2749 = vmatpush.bf16.msra.mxu0 %v2188
    %2750 = vmatpush.bf16.msra.mxu0 %v2180
    %2751 = vmatmul.bf16.gmra.mxu0 %v1005
    %v2752 = vpop.f32.mrf.mxu0
    %v2753 = vadd.f32 %v2740, %v2752
    %v2754 = vpop.f32.mrf.mxu0
    %2755 = vdwg.mxu0
    %2756 = vmatpush.bf16.msra.mxu0 %v2300
    %2757 = vmatpush.bf16.msra.mxu0 %v2292
    %2758 = vmatpush.bf16.msra.mxu0 %v2284
    %2759 = vmatpush.bf16.msra.mxu0 %v2276
    %2760 = vmatpush.bf16.msra.mxu0 %v2268
    %2761 = vmatpush.bf16.msra.mxu0 %v2260
    %2762 = vmatpush.bf16.msra.mxu0 %v2252
    %2763 = vmatpush.bf16.msra.mxu0 %v2244
    %2764 = vmatmul.bf16.gmra.mxu0 %v1006
    %v2765 = vpop.f32.mrf.mxu0
    %v2766 = vadd.f32 %v2753, %v2765
    %v2767 = vpop.f32.mrf.mxu0
    %2768 = vdwg.mxu0
    %2769 = vmatpush.bf16.msra.mxu0 %v2109
    %2770 = vmatpush.bf16.msra.mxu0 %v2101
    %2771 = vmatpush.bf16.msra.mxu0 %v2093
    %2772 = vmatpush.bf16.msra.mxu0 %v2085
    %2773 = vmatpush.bf16.msra.mxu0 %v2077
    %2774 = vmatpush.bf16.msra.mxu0 %v2069
    %2775 = vmatpush.bf16.msra.mxu0 %v2061
    %2776 = vmatpush.bf16.msra.mxu0 %v2053
    %2777 = vmatmul.bf16.gmra.mxu0 %v1003
    %v2778 = vpop.f32.mrf.mxu0
    %v2779 = vadd.f32 %v1269, %v2778
    %v2780 = vpop.f32.mrf.mxu0
    %2781 = vdwg.mxu0
    %2782 = vmatpush.bf16.msra.mxu0 %v2173
    %2783 = vmatpush.bf16.msra.mxu0 %v2165
    %2784 = vmatpush.bf16.msra.mxu0 %v2157
    %2785 = vmatpush.bf16.msra.mxu0 %v2149
    %2786 = vmatpush.bf16.msra.mxu0 %v2141
    %2787 = vmatpush.bf16.msra.mxu0 %v2133
    %2788 = vmatpush.bf16.msra.mxu0 %v2125
    %2789 = vmatpush.bf16.msra.mxu0 %v2117
    %2790 = vmatmul.bf16.gmra.mxu0 %v1004
    %v2791 = vpop.f32.mrf.mxu0
    %v2792 = vadd.f32 %v2779, %v2791
    %v2793 = vpop.f32.mrf.mxu0
    %2794 = vdwg.mxu0
    %2795 = vmatpush.bf16.msra.mxu0 %v2237
    %2796 = vmatpush.bf16.msra.mxu0 %v2229
    %2797 = vmatpush.bf16.msra.mxu0 %v2221
    %2798 = vmatpush.bf16.msra.mxu0 %v2213
    %2799 = vmatpush.bf16.msra.mxu0 %v2205
    %2800 = vmatpush.bf16.msra.mxu0 %v2197
    %2801 = vmatpush.bf16.msra.mxu0 %v2189
    %2802 = vmatpush.bf16.msra.mxu0 %v2181
    %2803 = vmatmul.bf16.gmra.mxu0 %v1005
    %v2804 = vpop.f32.mrf.mxu0
    %v2805 = vadd.f32 %v2792, %v2804
    %v2806 = vpop.f32.mrf.mxu0
    %2807 = vdwg.mxu0
    %2808 = vmatpush.bf16.msra.mxu0 %v2301
    %2809 = vmatpush.bf16.msra.mxu0 %v2293
    %2810 = vmatpush.bf16.msra.mxu0 %v2285
    %2811 = vmatpush.bf16.msra.mxu0 %v2277
    %2812 = vmatpush.bf16.msra.mxu0 %v2269
    %2813 = vmatpush.bf16.msra.mxu0 %v2261
    %2814 = vmatpush.bf16.msra.mxu0 %v2253
    %2815 = vmatpush.bf16.msra.mxu0 %v2245
    %2816 = vmatmul.bf16.gmra.mxu0 %v1006
    %v2817 = vpop.f32.mrf.mxu0
    %v2818 = vadd.f32 %v2805, %v2817
    %v2819 = vpop.f32.mrf.mxu0
    %2820 = vdwg.mxu0
    %2821 = vmatpush.bf16.msra.mxu0 %v2110
    %2822 = vmatpush.bf16.msra.mxu0 %v2102
    %2823 = vmatpush.bf16.msra.mxu0 %v2094
    %2824 = vmatpush.bf16.msra.mxu0 %v2086
    %2825 = vmatpush.bf16.msra.mxu0 %v2078
    %2826 = vmatpush.bf16.msra.mxu0 %v2070
    %2827 = vmatpush.bf16.msra.mxu0 %v2062
    %2828 = vmatpush.bf16.msra.mxu0 %v2054
    %2829 = vmatmul.bf16.gmra.mxu0 %v1003
    %v2830 = vpop.f32.mrf.mxu0
    %v2831 = vadd.f32 %v1270, %v2830
    %v2832 = vpop.f32.mrf.mxu0
    %2833 = vdwg.mxu0
    %2834 = vmatpush.bf16.msra.mxu0 %v2174
    %2835 = vmatpush.bf16.msra.mxu0 %v2166
    %2836 = vmatpush.bf16.msra.mxu0 %v2158
    %2837 = vmatpush.bf16.msra.mxu0 %v2150
    %2838 = vmatpush.bf16.msra.mxu0 %v2142
    %2839 = vmatpush.bf16.msra.mxu0 %v2134
    %2840 = vmatpush.bf16.msra.mxu0 %v2126
    %2841 = vmatpush.bf16.msra.mxu0 %v2118
    %2842 = vmatmul.bf16.gmra.mxu0 %v1004
    %v2843 = vpop.f32.mrf.mxu0
    %v2844 = vadd.f32 %v2831, %v2843
    %v2845 = vpop.f32.mrf.mxu0
    %2846 = vdwg.mxu0
    %2847 = vmatpush.bf16.msra.mxu0 %v2238
    %2848 = vmatpush.bf16.msra.mxu0 %v2230
    %2849 = vmatpush.bf16.msra.mxu0 %v2222
    %2850 = vmatpush.bf16.msra.mxu0 %v2214
    %2851 = vmatpush.bf16.msra.mxu0 %v2206
    %2852 = vmatpush.bf16.msra.mxu0 %v2198
    %2853 = vmatpush.bf16.msra.mxu0 %v2190
    %2854 = vmatpush.bf16.msra.mxu0 %v2182
    %2855 = vmatmul.bf16.gmra.mxu0 %v1005
    %v2856 = vpop.f32.mrf.mxu0
    %v2857 = vadd.f32 %v2844, %v2856
    %v2858 = vpop.f32.mrf.mxu0
    %2859 = vdwg.mxu0
    %2860 = vmatpush.bf16.msra.mxu0 %v2302
    %2861 = vmatpush.bf16.msra.mxu0 %v2294
    %2862 = vmatpush.bf16.msra.mxu0 %v2286
    %2863 = vmatpush.bf16.msra.mxu0 %v2278
    %2864 = vmatpush.bf16.msra.mxu0 %v2270
    %2865 = vmatpush.bf16.msra.mxu0 %v2262
    %2866 = vmatpush.bf16.msra.mxu0 %v2254
    %2867 = vmatpush.bf16.msra.mxu0 %v2246
    %2868 = vmatmul.bf16.gmra.mxu0 %v1006
    %v2869 = vpop.f32.mrf.mxu0
    %v2870 = vadd.f32 %v2857, %v2869
    %v2871 = vpop.f32.mrf.mxu0
    %2872 = vdwg.mxu0
    %2873 = vmatpush.bf16.msra.mxu0 %v2111
    %2874 = vmatpush.bf16.msra.mxu0 %v2103
    %2875 = vmatpush.bf16.msra.mxu0 %v2095
    %2876 = vmatpush.bf16.msra.mxu0 %v2087
    %2877 = vmatpush.bf16.msra.mxu0 %v2079
    %2878 = vmatpush.bf16.msra.mxu0 %v2071
    %2879 = vmatpush.bf16.msra.mxu0 %v2063
    %2880 = vmatpush.bf16.msra.mxu0 %v2055
    %2881 = vmatmul.bf16.gmra.mxu0 %v1003
    %v2882 = vpop.f32.mrf.mxu0
    %v2883 = vadd.f32 %v1271, %v2882
    %v2884 = vpop.f32.mrf.mxu0
    %2885 = vdwg.mxu0
    %2886 = vmatpush.bf16.msra.mxu0 %v2175
    %2887 = vmatpush.bf16.msra.mxu0 %v2167
    %2888 = vmatpush.bf16.msra.mxu0 %v2159
    %2889 = vmatpush.bf16.msra.mxu0 %v2151
    %2890 = vmatpush.bf16.msra.mxu0 %v2143
    %2891 = vmatpush.bf16.msra.mxu0 %v2135
    %2892 = vmatpush.bf16.msra.mxu0 %v2127
    %2893 = vmatpush.bf16.msra.mxu0 %v2119
    %2894 = vmatmul.bf16.gmra.mxu0 %v1004
    %v2895 = vpop.f32.mrf.mxu0
    %v2896 = vadd.f32 %v2883, %v2895
    %v2897 = vpop.f32.mrf.mxu0
    %2898 = vdwg.mxu0
    %2899 = vmatpush.bf16.msra.mxu0 %v2239
    %2900 = vmatpush.bf16.msra.mxu0 %v2231
    %2901 = vmatpush.bf16.msra.mxu0 %v2223
    %2902 = vmatpush.bf16.msra.mxu0 %v2215
    %2903 = vmatpush.bf16.msra.mxu0 %v2207
    %2904 = vmatpush.bf16.msra.mxu0 %v2199
    %2905 = vmatpush.bf16.msra.mxu0 %v2191
    %2906 = vmatpush.bf16.msra.mxu0 %v2183
    %2907 = vmatmul.bf16.gmra.mxu0 %v1005
    %v2908 = vpop.f32.mrf.mxu0
    %v2909 = vadd.f32 %v2896, %v2908
    %v2910 = vpop.f32.mrf.mxu0
    %2911 = vdwg.mxu0
    %2912 = vmatpush.bf16.msra.mxu0 %v2303
    %2913 = vmatpush.bf16.msra.mxu0 %v2295
    %2914 = vmatpush.bf16.msra.mxu0 %v2287
    %2915 = vmatpush.bf16.msra.mxu0 %v2279
    %2916 = vmatpush.bf16.msra.mxu0 %v2271
    %2917 = vmatpush.bf16.msra.mxu0 %v2263
    %2918 = vmatpush.bf16.msra.mxu0 %v2255
    %2919 = vmatpush.bf16.msra.mxu0 %v2247
    %2920 = vmatmul.bf16.gmra.mxu0 %v1006
    %v2921 = vpop.f32.mrf.mxu0
    %v2922 = vadd.f32 %v2909, %v2921
    %v2923 = vpop.f32.mrf.mxu0
    %2924 = vdwg.mxu0
    %2925 = vmatpush.bf16.msra.mxu0 %v2112
    %2926 = vmatpush.bf16.msra.mxu0 %v2104
    %2927 = vmatpush.bf16.msra.mxu0 %v2096
    %2928 = vmatpush.bf16.msra.mxu0 %v2088
    %2929 = vmatpush.bf16.msra.mxu0 %v2080
    %2930 = vmatpush.bf16.msra.mxu0 %v2072
    %2931 = vmatpush.bf16.msra.mxu0 %v2064
    %2932 = vmatpush.bf16.msra.mxu0 %v2056
    %2933 = vmatmul.bf16.gmra.mxu0 %v1003
    %v2934 = vpop.f32.mrf.mxu0
    %v2935 = vadd.f32 %v1272, %v2934
    %v2936 = vpop.f32.mrf.mxu0
    %2937 = vdwg.mxu0
    %2938 = vmatpush.bf16.msra.mxu0 %v2176
    %2939 = vmatpush.bf16.msra.mxu0 %v2168
    %2940 = vmatpush.bf16.msra.mxu0 %v2160
    %2941 = vmatpush.bf16.msra.mxu0 %v2152
    %2942 = vmatpush.bf16.msra.mxu0 %v2144
    %2943 = vmatpush.bf16.msra.mxu0 %v2136
    %2944 = vmatpush.bf16.msra.mxu0 %v2128
    %2945 = vmatpush.bf16.msra.mxu0 %v2120
    %2946 = vmatmul.bf16.gmra.mxu0 %v1004
    %v2947 = vpop.f32.mrf.mxu0
    %v2948 = vadd.f32 %v2935, %v2947
    %v2949 = vpop.f32.mrf.mxu0
    %2950 = vdwg.mxu0
    %2951 = vmatpush.bf16.msra.mxu0 %v2240
    %2952 = vmatpush.bf16.msra.mxu0 %v2232
    %2953 = vmatpush.bf16.msra.mxu0 %v2224
    %2954 = vmatpush.bf16.msra.mxu0 %v2216
    %2955 = vmatpush.bf16.msra.mxu0 %v2208
    %2956 = vmatpush.bf16.msra.mxu0 %v2200
    %2957 = vmatpush.bf16.msra.mxu0 %v2192
    %2958 = vmatpush.bf16.msra.mxu0 %v2184
    %2959 = vmatmul.bf16.gmra.mxu0 %v1005
    %v2960 = vpop.f32.mrf.mxu0
    %v2961 = vadd.f32 %v2948, %v2960
    %v2962 = vpop.f32.mrf.mxu0
    %2963 = vdwg.mxu0
    %2964 = vmatpush.bf16.msra.mxu0 %v2304
    %2965 = vmatpush.bf16.msra.mxu0 %v2296
    %2966 = vmatpush.bf16.msra.mxu0 %v2288
    %2967 = vmatpush.bf16.msra.mxu0 %v2280
    %2968 = vmatpush.bf16.msra.mxu0 %v2272
    %2969 = vmatpush.bf16.msra.mxu0 %v2264
    %2970 = vmatpush.bf16.msra.mxu0 %v2256
    %2971 = vmatpush.bf16.msra.mxu0 %v2248
    %2972 = vmatmul.bf16.gmra.mxu0 %v1006
    %v2973 = vpop.f32.mrf.mxu0
    %v2974 = vadd.f32 %v2961, %v2973
    %v2975 = vpop.f32.mrf.mxu0
    %2976 = vdwg.mxu0
    %v2977 = vrot.slane %v2610, 4
    %v2978 = vadd.f32 %v2610, %v2977
    %v2979 = vrot.slane %v2978, 2
    %v2980 = vadd.f32 %v2978, %v2979
    %v2981 = vrot.slane %v2980, 1
    %v2982 = vadd.f32 %v2980, %v2981
    %v2983 = vrot.slane %v2662, 4
    %v2984 = vadd.f32 %v2662, %v2983
    %v2985 = vrot.slane %v2984, 2
    %v2986 = vadd.f32 %v2984, %v2985
    %v2987 = vrot.slane %v2986, 1
    %v2988 = vadd.f32 %v2986, %v2987
    %v2989 = vrot.slane %v2714, 4
    %v2990 = vadd.f32 %v2714, %v2989
    %v2991 = vrot.slane %v2990, 2
    %v2992 = vadd.f32 %v2990, %v2991
    %v2993 = vrot.slane %v2992, 1
    %v2994 = vadd.f32 %v2992, %v2993
    %v2995 = vrot.slane %v2766, 4
    %v2996 = vadd.f32 %v2766, %v2995
    %v2997 = vrot.slane %v2996, 2
    %v2998 = vadd.f32 %v2996, %v2997
    %v2999 = vrot.slane %v2998, 1
    %v3000 = vadd.f32 %v2998, %v2999
    %v3001 = vrot.slane %v2818, 4
    %v3002 = vadd.f32 %v2818, %v3001
    %v3003 = vrot.slane %v3002, 2
    %v3004 = vadd.f32 %v3002, %v3003
    %v3005 = vrot.slane %v3004, 1
    %v3006 = vadd.f32 %v3004, %v3005
    %v3007 = vrot.slane %v2870, 4
    %v3008 = vadd.f32 %v2870, %v3007
    %v3009 = vrot.slane %v3008, 2
    %v3010 = vadd.f32 %v3008, %v3009
    %v3011 = vrot.slane %v3010, 1
    %v3012 = vadd.f32 %v3010, %v3011
    %v3013 = vrot.slane %v2922, 4
    %v3014 = vadd.f32 %v2922, %v3013
    %v3015 = vrot.slane %v3014, 2
    %v3016 = vadd.f32 %v3014, %v3015
    %v3017 = vrot.slane %v3016, 1
    %v3018 = vadd.f32 %v3016, %v3017
    %v3019 = vrot.slane %v2974, 4
    %v3020 = vadd.f32 %v2974, %v3019
    %v3021 = vrot.slane %v3020, 2
    %v3022 = vadd.f32 %v3020, %v3021
    %v3023 = vrot.slane %v3022, 1
    %v3024 = vadd.f32 %v3022, %v3023
    %v3025 = vmul.f32 %v2982, %v310
    %v3026 = vmul.f32 %v2988, %v310
    %v3027 = vmul.f32 %v2994, %v310
    %v3028 = vmul.f32 %v3000, %v310
    %v3029 = vmul.f32 %v3006, %v310
    %v3030 = vmul.f32 %v3012, %v310
    %v3031 = vmul.f32 %v3018, %v310
    %v3032 = vmul.f32 %v3024, %v310
    %v3033 = vmul.f32 %v2610, %v2610
    %v3034 = vmul.f32 %v2662, %v2662
    %v3035 = vmul.f32 %v2714, %v2714
    %v3036 = vmul.f32 %v2766, %v2766
    %v3037 = vmul.f32 %v2818, %v2818
    %v3038 = vmul.f32 %v2870, %v2870
    %v3039 = vmul.f32 %v2922, %v2922
    %v3040 = vmul.f32 %v2974, %v2974
    %v3041 = vrot.slane %v3033, 4
    %v3042 = vadd.f32 %v3033, %v3041
    %v3043 = vrot.slane %v3042, 2
    %v3044 = vadd.f32 %v3042, %v3043
    %v3045 = vrot.slane %v3044, 1
    %v3046 = vadd.f32 %v3044, %v3045
    %v3047 = vrot.slane %v3034, 4
    %v3048 = vadd.f32 %v3034, %v3047
    %v3049 = vrot.slane %v3048, 2
    %v3050 = vadd.f32 %v3048, %v3049
    %v3051 = vrot.slane %v3050, 1
    %v3052 = vadd.f32 %v3050, %v3051
    %v3053 = vrot.slane %v3035, 4
    %v3054 = vadd.f32 %v3035, %v3053
    %v3055 = vrot.slane %v3054, 2
    %v3056 = vadd.f32 %v3054, %v3055
    %v3057 = vrot.slane %v3056, 1
    %v3058 = vadd.f32 %v3056, %v3057
    %v3059 = vrot.slane %v3036, 4
    %v3060 = vadd.f32 %v3036, %v3059
    %v3061 = vrot.slane %v3060, 2
    %v3062 = vadd.f32 %v3060, %v3061
    %v3063 = vrot.slane %v3062, 1
    %v3064 = vadd.f32 %v3062, %v3063
    %v3065 = vrot.slane %v3037, 4
    %v3066 = vadd.f32 %v3037, %v3065
    %v3067 = vrot.slane %v3066, 2
    %v3068 = vadd.f32 %v3066, %v3067
    %v3069 = vrot.slane %v3068, 1
    %v3070 = vadd.f32 %v3068, %v3069
    %v3071 = vrot.slane %v3038, 4
    %v3072 = vadd.f32 %v3038, %v3071
    %v3073 = vrot.slane %v3072, 2
    %v3074 = vadd.f32 %v3072, %v3073
    %v3075 = vrot.slane %v3074, 1
    %v3076 = vadd.f32 %v3074, %v3075
    %v3077 = vrot.slane %v3039, 4
    %v3078 = vadd.f32 %v3039, %v3077
    %v3079 = vrot.slane %v3078, 2
    %v3080 = vadd.f32 %v3078, %v3079
    %v3081 = vrot.slane %v3080, 1
    %v3082 = vadd.f32 %v3080, %v3081
    %v3083 = vrot.slane %v3040, 4
    %v3084 = vadd.f32 %v3040, %v3083
    %v3085 = vrot.slane %v3084, 2
    %v3086 = vadd.f32 %v3084, %v3085
    %v3087 = vrot.slane %v3086, 1
    %v3088 = vadd.f32 %v3086, %v3087
    %v3089 = vmul.f32 %v3046, %v310
    %v3090 = vmul.f32 %v3052, %v310
    %v3091 = vmul.f32 %v3058, %v310
    %v3092 = vmul.f32 %v3064, %v310
    %v3093 = vmul.f32 %v3070, %v310
    %v3094 = vmul.f32 %v3076, %v310
    %v3095 = vmul.f32 %v3082, %v310
    %v3096 = vmul.f32 %v3088, %v310
    %v3097 = vmul.f32 %v3025, %v3025
    %v3098 = vmul.f32 %v3026, %v3026
    %v3099 = vmul.f32 %v3027, %v3027
    %v3100 = vmul.f32 %v3028, %v3028
    %v3101 = vmul.f32 %v3029, %v3029
    %v3102 = vmul.f32 %v3030, %v3030
    %v3103 = vmul.f32 %v3031, %v3031
    %v3104 = vmul.f32 %v3032, %v3032
    %v3105 = vsub.f32 %v3089, %v3097
    %v3106 = vsub.f32 %v3090, %v3098
    %v3107 = vsub.f32 %v3091, %v3099
    %v3108 = vsub.f32 %v3092, %v3100
    %v3109 = vsub.f32 %v3093, %v3101
    %v3110 = vsub.f32 %v3094, %v3102
    %v3111 = vsub.f32 %v3095, %v3103
    %v3112 = vsub.f32 %v3096, %v3104
    %v3113 = vmax.f32 %v3105, 0.0
    %v3114 = vmax.f32 %v3106, 0.0
    %v3115 = vmax.f32 %v3107, 0.0
    %v3116 = vmax.f32 %v3108, 0.0
    %v3117 = vmax.f32 %v3109, 0.0
    %v3118 = vmax.f32 %v3110, 0.0
    %v3119 = vmax.f32 %v3111, 0.0
    %v3120 = vmax.f32 %v3112, 0.0
    %v3121 = vadd.f32 %v3113, 1e-05
    %v3122 = vadd.f32 %v3114, 1e-05
    %v3123 = vadd.f32 %v3115, 1e-05
    %v3124 = vadd.f32 %v3116, 1e-05
    %v3125 = vadd.f32 %v3117, 1e-05
    %v3126 = vadd.f32 %v3118, 1e-05
    %v3127 = vadd.f32 %v3119, 1e-05
    %v3128 = vadd.f32 %v3120, 1e-05
    %v3129 = vrsqrt.pop %v3121
    %v3130 = vmul.f32 %v3129, %v3121
    %v3131 = vmul.f32 %v3130, %v3129
    %v3132 = vmul.f32 0.5, %v3131
    %v3133 = vsub.f32 1.5, %v3132
    %v3134 = vmul.f32 %v3129, %v3133
    %vm3135 = vweird.f32 %v3121
    %vm3136 = vweird.f32 %v3129
    %vm3137 = vmor %vm3135, %vm3136
    %v3138 = vsel %vm3137, %v3129, %v3134
    %v3139 = vrsqrt.pop %v3122
    %v3140 = vmul.f32 %v3139, %v3122
    %v3141 = vmul.f32 %v3140, %v3139
    %v3142 = vmul.f32 0.5, %v3141
    %v3143 = vsub.f32 1.5, %v3142
    %v3144 = vmul.f32 %v3139, %v3143
    %vm3145 = vweird.f32 %v3122
    %vm3146 = vweird.f32 %v3139
    %vm3147 = vmor %vm3145, %vm3146
    %v3148 = vsel %vm3147, %v3139, %v3144
    %v3149 = vrsqrt.pop %v3123
    %v3150 = vmul.f32 %v3149, %v3123
    %v3151 = vmul.f32 %v3150, %v3149
    %v3152 = vmul.f32 0.5, %v3151
    %v3153 = vsub.f32 1.5, %v3152
    %v3154 = vmul.f32 %v3149, %v3153
    %vm3155 = vweird.f32 %v3123
    %vm3156 = vweird.f32 %v3149
    %vm3157 = vmor %vm3155, %vm3156
    %v3158 = vsel %vm3157, %v3149, %v3154
    %v3159 = vrsqrt.pop %v3124
    %v3160 = vmul.f32 %v3159, %v3124
    %v3161 = vmul.f32 %v3160, %v3159
    %v3162 = vmul.f32 0.5, %v3161
    %v3163 = vsub.f32 1.5, %v3162
    %v3164 = vmul.f32 %v3159, %v3163
    %vm3165 = vweird.f32 %v3124
    %vm3166 = vweird.f32 %v3159
    %vm3167 = vmor %vm3165, %vm3166
    %v3168 = vsel %vm3167, %v3159, %v3164
    %v3169 = vrsqrt.pop %v3125
    %v3170 = vmul.f32 %v3169, %v3125
    %v3171 = vmul.f32 %v3170, %v3169
    %v3172 = vmul.f32 0.5, %v3171
    %v3173 = vsub.f32 1.5, %v3172
    %v3174 = vmul.f32 %v3169, %v3173
    %vm3175 = vweird.f32 %v3125
    %vm3176 = vweird.f32 %v3169
    %vm3177 = vmor %vm3175, %vm3176
    %v3178 = vsel %vm3177, %v3169, %v3174
    %v3179 = vrsqrt.pop %v3126
    %v3180 = vmul.f32 %v3179, %v3126
    %v3181 = vmul.f32 %v3180, %v3179
    %v3182 = vmul.f32 0.5, %v3181
    %v3183 = vsub.f32 1.5, %v3182
    %v3184 = vmul.f32 %v3179, %v3183
    %vm3185 = vweird.f32 %v3126
    %vm3186 = vweird.f32 %v3179
    %vm3187 = vmor %vm3185, %vm3186
    %v3188 = vsel %vm3187, %v3179, %v3184
    %v3189 = vrsqrt.pop %v3127
    %v3190 = vmul.f32 %v3189, %v3127
    %v3191 = vmul.f32 %v3190, %v3189
    %v3192 = vmul.f32 0.5, %v3191
    %v3193 = vsub.f32 1.5, %v3192
    %v3194 = vmul.f32 %v3189, %v3193
    %vm3195 = vweird.f32 %v3127
    %vm3196 = vweird.f32 %v3189
    %vm3197 = vmor %vm3195, %vm3196
    %v3198 = vsel %vm3197, %v3189, %v3194
    %v3199 = vrsqrt.pop %v3128
    %v3200 = vmul.f32 %v3199, %v3128
    %v3201 = vmul.f32 %v3200, %v3199
    %v3202 = vmul.f32 0.5, %v3201
    %v3203 = vsub.f32 1.5, %v3202
    %v3204 = vmul.f32 %v3199, %v3203
    %vm3205 = vweird.f32 %v3128
    %vm3206 = vweird.f32 %v3199
    %vm3207 = vmor %vm3205, %vm3206
    %v3208 = vsel %vm3207, %v3199, %v3204
    %v3209 = vsub.f32 0.0, %v3025
    %v3210 = vsub.f32 0.0, %v3026
    %v3211 = vsub.f32 0.0, %v3027
    %v3212 = vsub.f32 0.0, %v3028
    %v3213 = vsub.f32 0.0, %v3029
    %v3214 = vsub.f32 0.0, %v3030
    %v3215 = vsub.f32 0.0, %v3031
    %v3216 = vsub.f32 0.0, %v3032
    %v3217 = vmul.f32 %v3209, %v3138
    %v3218 = vmul.f32 %v3210, %v3148
    %v3219 = vmul.f32 %v3211, %v3158
    %v3220 = vmul.f32 %v3212, %v3168
    %v3221 = vmul.f32 %v3213, %v3178
    %v3222 = vmul.f32 %v3214, %v3188
    %v3223 = vmul.f32 %v3215, %v3198
    %v3224 = vmul.f32 %v3216, %v3208
    %v3225 = vmul.f32 %v2610, %v3138
    %v3226 = vmul.f32 %v2662, %v3148
    %v3227 = vmul.f32 %v2714, %v3158
    %v3228 = vmul.f32 %v2766, %v3168
    %v3229 = vmul.f32 %v2818, %v3178
    %v3230 = vmul.f32 %v2870, %v3188
    %v3231 = vmul.f32 %v2922, %v3198
    %v3232 = vmul.f32 %v2974, %v3208
    %v3233 = vadd.f32 %v3225, %v3217
    %v3234 = vadd.f32 %v3226, %v3218
    %v3235 = vadd.f32 %v3227, %v3219
    %v3236 = vadd.f32 %v3228, %v3220
    %v3237 = vadd.f32 %v3229, %v3221
    %v3238 = vadd.f32 %v3230, %v3222
    %v3239 = vadd.f32 %v3231, %v3223
    %v3240 = vadd.f32 %v3232, %v3224
    %v3241 = vmax.f32 %v3233, 0.0
    %v3242 = vmax.f32 %v3234, 0.0
    %v3243 = vmax.f32 %v3235, 0.0
    %v3244 = vmax.f32 %v3236, 0.0
    %v3245 = vmax.f32 %v3237, 0.0
    %v3246 = vmax.f32 %v3238, 0.0
    %v3247 = vmax.f32 %v3239, 0.0
    %v3248 = vmax.f32 %v3240, 0.0
    %v3249 = vpack.c.bf16 %v3241, %v3241
    %v3250 = vpack.c.bf16 %v3242, %v3242
    %v3251 = vpack.c.bf16 %v3243, %v3243
    %v3252 = vpack.c.bf16 %v3244, %v3244
    %v3253 = vpack.c.bf16 %v3245, %v3245
    %v3254 = vpack.c.bf16 %v3246, %v3246
    %v3255 = vpack.c.bf16 %v3247, %v3247
    %v3256 = vpack.c.bf16 %v3248, %v3248
    %v3257 = vld [vmem:[#allocation14] sm:$0xff]
    %v3258 = vld [vmem:[#allocation14 + $0x8] sm:$0xff]
    %v3259 = vld [vmem:[#allocation14 + $0x10] sm:$0xff]
    %v3260 = vld [vmem:[#allocation14 + $0x18] sm:$0xf]
    %v3261 = vld [vmem:[#allocation14 + $0x1c] sm:$0xff]
    %v3262 = vld [vmem:[#allocation14 + $0x24] sm:$0xff]
    %v3263 = vld [vmem:[#allocation14 + $0x2c] sm:$0xff]
    %v3264 = vld [vmem:[#allocation14 + $0x34] sm:$0xf]
    %v3265 = vld [vmem:[#allocation14 + $0x38] sm:$0xff]
    %v3266 = vld [vmem:[#allocation14 + $0x40] sm:$0xff]
    %v3267 = vld [vmem:[#allocation14 + $0x48] sm:$0xff]
    %v3268 = vld [vmem:[#allocation14 + $0x50] sm:$0xf]
    %v3269 = vld [vmem:[#allocation14 + $0x54] sm:$0xff]
    %v3270 = vld [vmem:[#allocation14 + $0x5c] sm:$0xff]
    %v3271 = vld [vmem:[#allocation14 + $0x64] sm:$0xff]
    %v3272 = vld [vmem:[#allocation14 + $0x6c] sm:$0xf]
    %v3273 = vld [vmem:[#allocation14 + $0x70] sm:$0xff]
    %v3274 = vld [vmem:[#allocation14 + $0x78] sm:$0xff]
    %v3275 = vld [vmem:[#allocation14 + $0x80] sm:$0xff]
    %v3276 = vld [vmem:[#allocation14 + $0x88] sm:$0xf]
    %v3277 = vld [vmem:[#allocation14 + $0x8c] sm:$0xff]
    %v3278 = vld [vmem:[#allocation14 + $0x94] sm:$0xff]
    %v3279 = vld [vmem:[#allocation14 + $0x9c] sm:$0xff]
    %v3280 = vld [vmem:[#allocation14 + $0xa4] sm:$0xf]
    %v3281 = vld [vmem:[#allocation14 + $0xa8] sm:$0xff]
    %v3282 = vld [vmem:[#allocation14 + $0xb0] sm:$0xff]
    %v3283 = vld [vmem:[#allocation14 + $0xb8] sm:$0xff]
    %v3284 = vld [vmem:[#allocation14 + $0xc0] sm:$0xf]
    %v3285 = vld [vmem:[#allocation14 + $0xc4] sm:$0xff]
    %v3286 = vld [vmem:[#allocation14 + $0xcc] sm:$0xff]
    %v3287 = vld [vmem:[#allocation14 + $0xd4] sm:$0xff]
    %v3288 = vld [vmem:[#allocation14 + $0xdc] sm:$0xf]
    %v3289 = vld [vmem:[#allocation14 + $0xe0] sm:$0xff]
    %v3290 = vld [vmem:[#allocation14 + $0xe8] sm:$0xff]
    %v3291 = vld [vmem:[#allocation14 + $0xf0] sm:$0xff]
    %v3292 = vld [vmem:[#allocation14 + $0xf8] sm:$0xf]
    %v3293 = vld [vmem:[#allocation14 + $0xfc] sm:$0xff]
    %v3294 = vld [vmem:[#allocation14 + $0x104] sm:$0xff]
    %v3295 = vld [vmem:[#allocation14 + $0x10c] sm:$0xff]
    %v3296 = vld [vmem:[#allocation14 + $0x114] sm:$0xf]
    %v3297 = vld [vmem:[#allocation14 + $0x118] sm:$0xff]
    %v3298 = vld [vmem:[#allocation14 + $0x120] sm:$0xff]
    %v3299 = vld [vmem:[#allocation14 + $0x128] sm:$0xff]
    %v3300 = vld [vmem:[#allocation14 + $0x130] sm:$0xf]
    %v3301 = vld [vmem:[#allocation14 + $0x134] sm:$0xff]
    %v3302 = vld [vmem:[#allocation14 + $0x13c] sm:$0xff]
    %v3303 = vld [vmem:[#allocation14 + $0x144] sm:$0xff]
    %v3304 = vld [vmem:[#allocation14 + $0x14c] sm:$0xf]
    %v3305 = vld [vmem:[#allocation14 + $0x150] sm:$0xff]
    %v3306 = vld [vmem:[#allocation14 + $0x158] sm:$0xff]
    %v3307 = vld [vmem:[#allocation14 + $0x160] sm:$0xff]
    %v3308 = vld [vmem:[#allocation14 + $0x168] sm:$0xf]
    %v3309 = vld [vmem:[#allocation14 + $0x16c] sm:$0xff]
    %v3310 = vld [vmem:[#allocation14 + $0x174] sm:$0xff]
    %v3311 = vld [vmem:[#allocation14 + $0x17c] sm:$0xff]
    %v3312 = vld [vmem:[#allocation14 + $0x184] sm:$0xf]
    %v3313 = vld [vmem:[#allocation14 + $0x188] sm:$0xff]
    %v3314 = vld [vmem:[#allocation14 + $0x190] sm:$0xff]
    %v3315 = vld [vmem:[#allocation14 + $0x198] sm:$0xff]
    %v3316 = vld [vmem:[#allocation14 + $0x1a0] sm:$0xf]
    %v3317 = vld [vmem:[#allocation14 + $0x1a4] sm:$0xff]
    %v3318 = vld [vmem:[#allocation14 + $0x1ac] sm:$0xff]
    %v3319 = vld [vmem:[#allocation14 + $0x1b4] sm:$0xff]
    %v3320 = vld [vmem:[#allocation14 + $0x1bc] sm:$0xf]
    %v3321 = vld [vmem:[#allocation14 + $0x1c0] sm:$0xff]
    %v3322 = vld [vmem:[#allocation14 + $0x1c8] sm:$0xff]
    %v3323 = vld [vmem:[#allocation14 + $0x1d0] sm:$0xff]
    %v3324 = vld [vmem:[#allocation14 + $0x1d8] sm:$0xf]
    %v3325 = vld [vmem:[#allocation14 + $0x1dc] sm:$0xff]
    %v3326 = vld [vmem:[#allocation14 + $0x1e4] sm:$0xff]
    %v3327 = vld [vmem:[#allocation14 + $0x1ec] sm:$0xff]
    %v3328 = vld [vmem:[#allocation14 + $0x1f4] sm:$0xf]
    %v3329 = vld [vmem:[#allocation14 + $0x1f8] sm:$0xff]
    %v3330 = vld [vmem:[#allocation14 + $0x200] sm:$0xff]
    %v3331 = vld [vmem:[#allocation14 + $0x208] sm:$0xff]
    %v3332 = vld [vmem:[#allocation14 + $0x210] sm:$0xf]
    %v3333 = vld [vmem:[#allocation14 + $0x214] sm:$0xff]
    %v3334 = vld [vmem:[#allocation14 + $0x21c] sm:$0xff]
    %v3335 = vld [vmem:[#allocation14 + $0x224] sm:$0xff]
    %v3336 = vld [vmem:[#allocation14 + $0x22c] sm:$0xf]
    %v3337 = vld [vmem:[#allocation14 + $0x230] sm:$0xff]
    %v3338 = vld [vmem:[#allocation14 + $0x238] sm:$0xff]
    %v3339 = vld [vmem:[#allocation14 + $0x240] sm:$0xff]
    %v3340 = vld [vmem:[#allocation14 + $0x248] sm:$0xf]
    %v3341 = vld [vmem:[#allocation14 + $0x24c] sm:$0xff]
    %v3342 = vld [vmem:[#allocation14 + $0x254] sm:$0xff]
    %v3343 = vld [vmem:[#allocation14 + $0x25c] sm:$0xff]
    %v3344 = vld [vmem:[#allocation14 + $0x264] sm:$0xf]
    %v3345 = vld [vmem:[#allocation14 + $0x268] sm:$0xff]
    %v3346 = vld [vmem:[#allocation14 + $0x270] sm:$0xff]
    %v3347 = vld [vmem:[#allocation14 + $0x278] sm:$0xff]
    %v3348 = vld [vmem:[#allocation14 + $0x280] sm:$0xf]
    %v3349 = vld [vmem:[#allocation14 + $0x284] sm:$0xff]
    %v3350 = vld [vmem:[#allocation14 + $0x28c] sm:$0xff]
    %v3351 = vld [vmem:[#allocation14 + $0x294] sm:$0xff]
    %v3352 = vld [vmem:[#allocation14 + $0x29c] sm:$0xf]
    %v3353 = vld [vmem:[#allocation14 + $0x2a0] sm:$0xff]
    %v3354 = vld [vmem:[#allocation14 + $0x2a8] sm:$0xff]
    %v3355 = vld [vmem:[#allocation14 + $0x2b0] sm:$0xff]
    %v3356 = vld [vmem:[#allocation14 + $0x2b8] sm:$0xf]
    %v3357 = vld [vmem:[#allocation14 + $0x2bc] sm:$0xff]
    %v3358 = vld [vmem:[#allocation14 + $0x2c4] sm:$0xff]
    %v3359 = vld [vmem:[#allocation14 + $0x2cc] sm:$0xff]
    %v3360 = vld [vmem:[#allocation14 + $0x2d4] sm:$0xf]
    %v3361 = vld [vmem:[#allocation14 + $0x2d8] sm:$0xff]
    %v3362 = vld [vmem:[#allocation14 + $0x2e0] sm:$0xff]
    %v3363 = vld [vmem:[#allocation14 + $0x2e8] sm:$0xff]
    %v3364 = vld [vmem:[#allocation14 + $0x2f0] sm:$0xf]
    %v3365 = vld [vmem:[#allocation14 + $0x2f4] sm:$0xff]
    %v3366 = vld [vmem:[#allocation14 + $0x2fc] sm:$0xff]
    %v3367 = vld [vmem:[#allocation14 + $0x304] sm:$0xff]
    %v3368 = vld [vmem:[#allocation14 + $0x30c] sm:$0xf]
    %v3369 = vld [vmem:[#allocation14 + $0x310] sm:$0xff]
    %v3370 = vld [vmem:[#allocation14 + $0x318] sm:$0xff]
    %v3371 = vld [vmem:[#allocation14 + $0x320] sm:$0xff]
    %v3372 = vld [vmem:[#allocation14 + $0x328] sm:$0xf]
    %v3373 = vld [vmem:[#allocation14 + $0x32c] sm:$0xff]
    %v3374 = vld [vmem:[#allocation14 + $0x334] sm:$0xff]
    %v3375 = vld [vmem:[#allocation14 + $0x33c] sm:$0xff]
    %v3376 = vld [vmem:[#allocation14 + $0x344] sm:$0xf]
    %v3377 = vld [vmem:[#allocation14 + $0x348] sm:$0xff]
    %v3378 = vld [vmem:[#allocation14 + $0x350] sm:$0xff]
    %v3379 = vld [vmem:[#allocation14 + $0x358] sm:$0xff]
    %v3380 = vld [vmem:[#allocation14 + $0x360] sm:$0xf]
    %v3381 = vld [vmem:[#allocation14 + $0x364] sm:$0xff]
    %v3382 = vld [vmem:[#allocation14 + $0x36c] sm:$0xff]
    %v3383 = vld [vmem:[#allocation14 + $0x374] sm:$0xff]
    %v3384 = vld [vmem:[#allocation14 + $0x37c] sm:$0xf]
    %v3385 = vld [vmem:[#allocation14 + $0x380] sm:$0xff]
    %v3386 = vld [vmem:[#allocation14 + $0x388] sm:$0xff]
    %v3387 = vld [vmem:[#allocation14 + $0x390] sm:$0xff]
    %v3388 = vld [vmem:[#allocation14 + $0x398] sm:$0xf]
    %v3389 = vld [vmem:[#allocation14 + $0x39c] sm:$0xff]
    %v3390 = vld [vmem:[#allocation14 + $0x3a4] sm:$0xff]
    %v3391 = vld [vmem:[#allocation14 + $0x3ac] sm:$0xff]
    %v3392 = vld [vmem:[#allocation14 + $0x3b4] sm:$0xf]
    %v3393 = vld [vmem:[#allocation14 + $0x3b8] sm:$0xff]
    %v3394 = vld [vmem:[#allocation14 + $0x3c0] sm:$0xff]
    %v3395 = vld [vmem:[#allocation14 + $0x3c8] sm:$0xff]
    %v3396 = vld [vmem:[#allocation14 + $0x3d0] sm:$0xf]
    %v3397 = vld [vmem:[#allocation14 + $0x3d4] sm:$0xff]
    %v3398 = vld [vmem:[#allocation14 + $0x3dc] sm:$0xff]
    %v3399 = vld [vmem:[#allocation14 + $0x3e4] sm:$0xff]
    %v3400 = vld [vmem:[#allocation14 + $0x3ec] sm:$0xf]
    %v3401 = vld [vmem:[#allocation14 + $0x3f0] sm:$0xff]
    %v3402 = vld [vmem:[#allocation14 + $0x3f8] sm:$0xff]
    %v3403 = vld [vmem:[#allocation14 + $0x400] sm:$0xff]
    %v3404 = vld [vmem:[#allocation14 + $0x408] sm:$0xf]
    %v3405 = vld [vmem:[#allocation14 + $0x40c] sm:$0xff]
    %v3406 = vld [vmem:[#allocation14 + $0x414] sm:$0xff]
    %v3407 = vld [vmem:[#allocation14 + $0x41c] sm:$0xff]
    %v3408 = vld [vmem:[#allocation14 + $0x424] sm:$0xf]
    %v3409 = vld [vmem:[#allocation14 + $0x428] sm:$0xff]
    %v3410 = vld [vmem:[#allocation14 + $0x430] sm:$0xff]
    %v3411 = vld [vmem:[#allocation14 + $0x438] sm:$0xff]
    %v3412 = vld [vmem:[#allocation14 + $0x440] sm:$0xf]
    %v3413 = vld [vmem:[#allocation14 + $0x444] sm:$0xff]
    %v3414 = vld [vmem:[#allocation14 + $0x44c] sm:$0xff]
    %v3415 = vld [vmem:[#allocation14 + $0x454] sm:$0xff]
    %v3416 = vld [vmem:[#allocation14 + $0x45c] sm:$0xf]
    %v3417 = vld [vmem:[#allocation14 + $0x460] sm:$0xff]
    %v3418 = vld [vmem:[#allocation14 + $0x468] sm:$0xff]
    %v3419 = vld [vmem:[#allocation14 + $0x470] sm:$0xff]
    %v3420 = vld [vmem:[#allocation14 + $0x478] sm:$0xf]
    %v3421 = vld [vmem:[#allocation14 + $0x47c] sm:$0xff]
    %v3422 = vld [vmem:[#allocation14 + $0x484] sm:$0xff]
    %v3423 = vld [vmem:[#allocation14 + $0x48c] sm:$0xff]
    %v3424 = vld [vmem:[#allocation14 + $0x494] sm:$0xf]
    %v3425 = vld [vmem:[#allocation14 + $0x498] sm:$0xff]
    %v3426 = vld [vmem:[#allocation14 + $0x4a0] sm:$0xff]
    %v3427 = vld [vmem:[#allocation14 + $0x4a8] sm:$0xff]
    %v3428 = vld [vmem:[#allocation14 + $0x4b0] sm:$0xf]
    %v3429 = vld [vmem:[#allocation14 + $0x4b4] sm:$0xff]
    %v3430 = vld [vmem:[#allocation14 + $0x4bc] sm:$0xff]
    %v3431 = vld [vmem:[#allocation14 + $0x4c4] sm:$0xff]
    %v3432 = vld [vmem:[#allocation14 + $0x4cc] sm:$0xf]
    %v3433 = vld [vmem:[#allocation14 + $0x4d0] sm:$0xff]
    %v3434 = vld [vmem:[#allocation14 + $0x4d8] sm:$0xff]
    %v3435 = vld [vmem:[#allocation14 + $0x4e0] sm:$0xff]
    %v3436 = vld [vmem:[#allocation14 + $0x4e8] sm:$0xf]
    %v3437 = vld [vmem:[#allocation14 + $0x4ec] sm:$0xff]
    %v3438 = vld [vmem:[#allocation14 + $0x4f4] sm:$0xff]
    %v3439 = vld [vmem:[#allocation14 + $0x4fc] sm:$0xff]
    %v3440 = vld [vmem:[#allocation14 + $0x504] sm:$0xf]
    %v3441 = vld [vmem:[#allocation14 + $0x508] sm:$0xff]
    %v3442 = vld [vmem:[#allocation14 + $0x510] sm:$0xff]
    %v3443 = vld [vmem:[#allocation14 + $0x518] sm:$0xff]
    %v3444 = vld [vmem:[#allocation14 + $0x520] sm:$0xf]
    %v3445 = vld [vmem:[#allocation14 + $0x524] sm:$0xff]
    %v3446 = vld [vmem:[#allocation14 + $0x52c] sm:$0xff]
    %v3447 = vld [vmem:[#allocation14 + $0x534] sm:$0xff]
    %v3448 = vld [vmem:[#allocation14 + $0x53c] sm:$0xf]
    %v3449 = vld [vmem:[#allocation14 + $0x540] sm:$0xff]
    %v3450 = vld [vmem:[#allocation14 + $0x548] sm:$0xff]
    %v3451 = vld [vmem:[#allocation14 + $0x550] sm:$0xff]
    %v3452 = vld [vmem:[#allocation14 + $0x558] sm:$0xf]
    %v3453 = vld [vmem:[#allocation14 + $0x55c] sm:$0xff]
    %v3454 = vld [vmem:[#allocation14 + $0x564] sm:$0xff]
    %v3455 = vld [vmem:[#allocation14 + $0x56c] sm:$0xff]
    %v3456 = vld [vmem:[#allocation14 + $0x574] sm:$0xf]
    %v3457 = vld [vmem:[#allocation14 + $0x578] sm:$0xff]
    %v3458 = vld [vmem:[#allocation14 + $0x580] sm:$0xff]
    %v3459 = vld [vmem:[#allocation14 + $0x588] sm:$0xff]
    %v3460 = vld [vmem:[#allocation14 + $0x590] sm:$0xf]
    %v3461 = vld [vmem:[#allocation14 + $0x594] sm:$0xff]
    %v3462 = vld [vmem:[#allocation14 + $0x59c] sm:$0xff]
    %v3463 = vld [vmem:[#allocation14 + $0x5a4] sm:$0xff]
    %v3464 = vld [vmem:[#allocation14 + $0x5ac] sm:$0xf]
    %v3465 = vld [vmem:[#allocation14 + $0x5b0] sm:$0xff]
    %v3466 = vld [vmem:[#allocation14 + $0x5b8] sm:$0xff]
    %v3467 = vld [vmem:[#allocation14 + $0x5c0] sm:$0xff]
    %v3468 = vld [vmem:[#allocation14 + $0x5c8] sm:$0xf]
    %v3469 = vld [vmem:[#allocation14 + $0x5cc] sm:$0xff]
    %v3470 = vld [vmem:[#allocation14 + $0x5d4] sm:$0xff]
    %v3471 = vld [vmem:[#allocation14 + $0x5dc] sm:$0xff]
    %v3472 = vld [vmem:[#allocation14 + $0x5e4] sm:$0xf]
    %v3473 = vld [vmem:[#allocation14 + $0x5e8] sm:$0xff]
    %v3474 = vld [vmem:[#allocation14 + $0x5f0] sm:$0xff]
    %v3475 = vld [vmem:[#allocation14 + $0x5f8] sm:$0xff]
    %v3476 = vld [vmem:[#allocation14 + $0x600] sm:$0xf]
    %v3477 = vld [vmem:[#allocation14 + $0x604] sm:$0xff]
    %v3478 = vld [vmem:[#allocation14 + $0x60c] sm:$0xff]
    %v3479 = vld [vmem:[#allocation14 + $0x614] sm:$0xff]
    %v3480 = vld [vmem:[#allocation14 + $0x61c] sm:$0xf]
    %v3481 = vld [vmem:[#allocation14 + $0x620] sm:$0xff]
    %v3482 = vld [vmem:[#allocation14 + $0x628] sm:$0xff]
    %v3483 = vld [vmem:[#allocation14 + $0x630] sm:$0xff]
    %v3484 = vld [vmem:[#allocation14 + $0x638] sm:$0xf]
    %v3485 = vld [vmem:[#allocation14 + $0x63c] sm:$0xff]
    %v3486 = vld [vmem:[#allocation14 + $0x644] sm:$0xff]
    %v3487 = vld [vmem:[#allocation14 + $0x64c] sm:$0xff]
    %v3488 = vld [vmem:[#allocation14 + $0x654] sm:$0xf]
    %v3489 = vld [vmem:[#allocation14 + $0x658] sm:$0xff]
    %v3490 = vld [vmem:[#allocation14 + $0x660] sm:$0xff]
    %v3491 = vld [vmem:[#allocation14 + $0x668] sm:$0xff]
    %v3492 = vld [vmem:[#allocation14 + $0x670] sm:$0xf]
    %v3493 = vld [vmem:[#allocation14 + $0x674] sm:$0xff]
    %v3494 = vld [vmem:[#allocation14 + $0x67c] sm:$0xff]
    %v3495 = vld [vmem:[#allocation14 + $0x684] sm:$0xff]
    %v3496 = vld [vmem:[#allocation14 + $0x68c] sm:$0xf]
    %v3497 = vld [vmem:[#allocation14 + $0x690] sm:$0xff]
    %v3498 = vld [vmem:[#allocation14 + $0x698] sm:$0xff]
    %v3499 = vld [vmem:[#allocation14 + $0x6a0] sm:$0xff]
    %v3500 = vld [vmem:[#allocation14 + $0x6a8] sm:$0xf]
    %v3501 = vld [vmem:[#allocation14 + $0x6ac] sm:$0xff]
    %v3502 = vld [vmem:[#allocation14 + $0x6b4] sm:$0xff]
    %v3503 = vld [vmem:[#allocation14 + $0x6bc] sm:$0xff]
    %v3504 = vld [vmem:[#allocation14 + $0x6c4] sm:$0xf]
    %v3505 = vld [vmem:[#allocation14 + $0x6c8] sm:$0xff]
    %v3506 = vld [vmem:[#allocation14 + $0x6d0] sm:$0xff]
    %v3507 = vld [vmem:[#allocation14 + $0x6d8] sm:$0xff]
    %v3508 = vld [vmem:[#allocation14 + $0x6e0] sm:$0xf]
    %v3509 = vld [vmem:[#allocation14 + $0x6e4] sm:$0xff]
    %v3510 = vld [vmem:[#allocation14 + $0x6ec] sm:$0xff]
    %v3511 = vld [vmem:[#allocation14 + $0x6f4] sm:$0xff]
    %v3512 = vld [vmem:[#allocation14 + $0x6fc] sm:$0xf]
    %v3513 = vld [vmem:[#allocation14 + $0x700] sm:$0xff]
    %v3514 = vld [vmem:[#allocation14 + $0x708] sm:$0xff]
    %v3515 = vld [vmem:[#allocation14 + $0x710] sm:$0xff]
    %v3516 = vld [vmem:[#allocation14 + $0x718] sm:$0xf]
    %v3517 = vld [vmem:[#allocation14 + $0x71c] sm:$0xff]
    %v3518 = vld [vmem:[#allocation14 + $0x724] sm:$0xff]
    %v3519 = vld [vmem:[#allocation14 + $0x72c] sm:$0xff]
    %v3520 = vld [vmem:[#allocation14 + $0x734] sm:$0xf]
    %v3521 = vld [vmem:[#allocation14 + $0x738] sm:$0xff]
    %v3522 = vld [vmem:[#allocation14 + $0x740] sm:$0xff]
    %v3523 = vld [vmem:[#allocation14 + $0x748] sm:$0xff]
    %v3524 = vld [vmem:[#allocation14 + $0x750] sm:$0xf]
    %v3525 = vld [vmem:[#allocation14 + $0x754] sm:$0xff]
    %v3526 = vld [vmem:[#allocation14 + $0x75c] sm:$0xff]
    %v3527 = vld [vmem:[#allocation14 + $0x764] sm:$0xff]
    %v3528 = vld [vmem:[#allocation14 + $0x76c] sm:$0xf]
    %v3529 = vld [vmem:[#allocation14 + $0x770] sm:$0xff]
    %v3530 = vld [vmem:[#allocation14 + $0x778] sm:$0xff]
    %v3531 = vld [vmem:[#allocation14 + $0x780] sm:$0xff]
    %v3532 = vld [vmem:[#allocation14 + $0x788] sm:$0xf]
    %v3533 = vld [vmem:[#allocation14 + $0x78c] sm:$0xff]
    %v3534 = vld [vmem:[#allocation14 + $0x794] sm:$0xff]
    %v3535 = vld [vmem:[#allocation14 + $0x79c] sm:$0xff]
    %v3536 = vld [vmem:[#allocation14 + $0x7a4] sm:$0xf]
    %v3537 = vld [vmem:[#allocation14 + $0x7a8] sm:$0xff]
    %v3538 = vld [vmem:[#allocation14 + $0x7b0] sm:$0xff]
    %v3539 = vld [vmem:[#allocation14 + $0x7b8] sm:$0xff]
    %v3540 = vld [vmem:[#allocation14 + $0x7c0] sm:$0xf]
    %v3541 = vld [vmem:[#allocation14 + $0x7c4] sm:$0xff]
    %v3542 = vld [vmem:[#allocation14 + $0x7cc] sm:$0xff]
    %v3543 = vld [vmem:[#allocation14 + $0x7d4] sm:$0xff]
    %v3544 = vld [vmem:[#allocation14 + $0x7dc] sm:$0xf]
    %v3545 = vld [vmem:[#allocation14 + $0x7e0] sm:$0xff]
    %v3546 = vld [vmem:[#allocation14 + $0x7e8] sm:$0xff]
    %v3547 = vld [vmem:[#allocation14 + $0x7f0] sm:$0xff]
    %v3548 = vld [vmem:[#allocation14 + $0x7f8] sm:$0xf]
    %v3549 = vld [vmem:[#allocation14 + $0x7fc] sm:$0xff]
    %v3550 = vld [vmem:[#allocation14 + $0x804] sm:$0xff]
    %v3551 = vld [vmem:[#allocation14 + $0x80c] sm:$0xff]
    %v3552 = vld [vmem:[#allocation14 + $0x814] sm:$0xf]
    %v3553 = vld [vmem:[#allocation14 + $0x818] sm:$0xff]
    %v3554 = vld [vmem:[#allocation14 + $0x820] sm:$0xff]
    %v3555 = vld [vmem:[#allocation14 + $0x828] sm:$0xff]
    %v3556 = vld [vmem:[#allocation14 + $0x830] sm:$0xf]
    %v3557 = vld [vmem:[#allocation14 + $0x834] sm:$0xff]
    %v3558 = vld [vmem:[#allocation14 + $0x83c] sm:$0xff]
    %v3559 = vld [vmem:[#allocation14 + $0x844] sm:$0xff]
    %v3560 = vld [vmem:[#allocation14 + $0x84c] sm:$0xf]
    %v3561 = vld [vmem:[#allocation14 + $0x850] sm:$0xff]
    %v3562 = vld [vmem:[#allocation14 + $0x858] sm:$0xff]
    %v3563 = vld [vmem:[#allocation14 + $0x860] sm:$0xff]
    %v3564 = vld [vmem:[#allocation14 + $0x868] sm:$0xf]
    %v3565 = vld [vmem:[#allocation14 + $0x86c] sm:$0xff]
    %v3566 = vld [vmem:[#allocation14 + $0x874] sm:$0xff]
    %v3567 = vld [vmem:[#allocation14 + $0x87c] sm:$0xff]
    %v3568 = vld [vmem:[#allocation14 + $0x884] sm:$0xf]
    %v3569 = vld [vmem:[#allocation14 + $0x888] sm:$0xff]
    %v3570 = vld [vmem:[#allocation14 + $0x890] sm:$0xff]
    %v3571 = vld [vmem:[#allocation14 + $0x898] sm:$0xff]
    %v3572 = vld [vmem:[#allocation14 + $0x8a0] sm:$0xf]
    %v3573 = vld [vmem:[#allocation14 + $0x8a4] sm:$0xff]
    %v3574 = vld [vmem:[#allocation14 + $0x8ac] sm:$0xff]
    %v3575 = vld [vmem:[#allocation14 + $0x8b4] sm:$0xff]
    %v3576 = vld [vmem:[#allocation14 + $0x8bc] sm:$0xf]
    %v3577 = vld [vmem:[#allocation14 + $0x8c0] sm:$0xff]
    %v3578 = vld [vmem:[#allocation14 + $0x8c8] sm:$0xff]
    %v3579 = vld [vmem:[#allocation14 + $0x8d0] sm:$0xff]
    %v3580 = vld [vmem:[#allocation14 + $0x8d8] sm:$0xf]
    %v3581 = vld [vmem:[#allocation14 + $0x8dc] sm:$0xff]
    %v3582 = vld [vmem:[#allocation14 + $0x8e4] sm:$0xff]
    %v3583 = vld [vmem:[#allocation14 + $0x8ec] sm:$0xff]
    %v3584 = vld [vmem:[#allocation14 + $0x8f4] sm:$0xf]
    %v3585 = vld [vmem:[#allocation14 + $0x8f8] sm:$0xff]
    %v3586 = vld [vmem:[#allocation14 + $0x900] sm:$0xff]
    %v3587 = vld [vmem:[#allocation14 + $0x908] sm:$0xff]
    %v3588 = vld [vmem:[#allocation14 + $0x910] sm:$0xf]
    %v3589 = vld [vmem:[#allocation14 + $0x914] sm:$0xff]
    %v3590 = vld [vmem:[#allocation14 + $0x91c] sm:$0xff]
    %v3591 = vld [vmem:[#allocation14 + $0x924] sm:$0xff]
    %v3592 = vld [vmem:[#allocation14 + $0x92c] sm:$0xf]
    %v3593 = vld [vmem:[#allocation14 + $0x930] sm:$0xff]
    %v3594 = vld [vmem:[#allocation14 + $0x938] sm:$0xff]
    %v3595 = vld [vmem:[#allocation14 + $0x940] sm:$0xff]
    %v3596 = vld [vmem:[#allocation14 + $0x948] sm:$0xf]
    %v3597 = vld [vmem:[#allocation14 + $0x94c] sm:$0xff]
    %v3598 = vld [vmem:[#allocation14 + $0x954] sm:$0xff]
    %v3599 = vld [vmem:[#allocation14 + $0x95c] sm:$0xff]
    %v3600 = vld [vmem:[#allocation14 + $0x964] sm:$0xf]
    %v3601 = vld [vmem:[#allocation14 + $0x968] sm:$0xff]
    %v3602 = vld [vmem:[#allocation14 + $0x970] sm:$0xff]
    %v3603 = vld [vmem:[#allocation14 + $0x978] sm:$0xff]
    %v3604 = vld [vmem:[#allocation14 + $0x980] sm:$0xf]
    %v3605 = vld [vmem:[#allocation14 + $0x984] sm:$0xff]
    %v3606 = vld [vmem:[#allocation14 + $0x98c] sm:$0xff]
    %v3607 = vld [vmem:[#allocation14 + $0x994] sm:$0xff]
    %v3608 = vld [vmem:[#allocation14 + $0x99c] sm:$0xf]
    %v3609 = vld [vmem:[#allocation14 + $0x9a0] sm:$0xff]
    %v3610 = vld [vmem:[#allocation14 + $0x9a8] sm:$0xff]
    %v3611 = vld [vmem:[#allocation14 + $0x9b0] sm:$0xff]
    %v3612 = vld [vmem:[#allocation14 + $0x9b8] sm:$0xf]
    %v3613 = vld [vmem:[#allocation14 + $0x9bc] sm:$0xff]
    %v3614 = vld [vmem:[#allocation14 + $0x9c4] sm:$0xff]
    %v3615 = vld [vmem:[#allocation14 + $0x9cc] sm:$0xff]
    %v3616 = vld [vmem:[#allocation14 + $0x9d4] sm:$0xf]
    %v3617 = vld [vmem:[#allocation14 + $0x9d8] sm:$0xff]
    %v3618 = vld [vmem:[#allocation14 + $0x9e0] sm:$0xff]
    %v3619 = vld [vmem:[#allocation14 + $0x9e8] sm:$0xff]
    %v3620 = vld [vmem:[#allocation14 + $0x9f0] sm:$0xf]
    %v3621 = vld [vmem:[#allocation14 + $0x9f4] sm:$0xff]
    %v3622 = vld [vmem:[#allocation14 + $0x9fc] sm:$0xff]
    %v3623 = vld [vmem:[#allocation14 + $0xa04] sm:$0xff]
    %v3624 = vld [vmem:[#allocation14 + $0xa0c] sm:$0xf]
    %v3625 = vld [vmem:[#allocation14 + $0xa10] sm:$0xff]
    %v3626 = vld [vmem:[#allocation14 + $0xa18] sm:$0xff]
    %v3627 = vld [vmem:[#allocation14 + $0xa20] sm:$0xff]
    %v3628 = vld [vmem:[#allocation14 + $0xa28] sm:$0xf]
    %v3629 = vld [vmem:[#allocation14 + $0xa2c] sm:$0xff]
    %v3630 = vld [vmem:[#allocation14 + $0xa34] sm:$0xff]
    %v3631 = vld [vmem:[#allocation14 + $0xa3c] sm:$0xff]
    %v3632 = vld [vmem:[#allocation14 + $0xa44] sm:$0xf]
    %v3633 = vld [vmem:[#allocation14 + $0xa48] sm:$0xff]
    %v3634 = vld [vmem:[#allocation14 + $0xa50] sm:$0xff]
    %v3635 = vld [vmem:[#allocation14 + $0xa58] sm:$0xff]
    %v3636 = vld [vmem:[#allocation14 + $0xa60] sm:$0xf]
    %v3637 = vld [vmem:[#allocation14 + $0xa64] sm:$0xff]
    %v3638 = vld [vmem:[#allocation14 + $0xa6c] sm:$0xff]
    %v3639 = vld [vmem:[#allocation14 + $0xa74] sm:$0xff]
    %v3640 = vld [vmem:[#allocation14 + $0xa7c] sm:$0xf]
    %v3641 = vld [vmem:[#allocation14 + $0xa80] sm:$0xff]
    %v3642 = vld [vmem:[#allocation14 + $0xa88] sm:$0xff]
    %v3643 = vld [vmem:[#allocation14 + $0xa90] sm:$0xff]
    %v3644 = vld [vmem:[#allocation14 + $0xa98] sm:$0xf]
    %v3645 = vld [vmem:[#allocation14 + $0xa9c] sm:$0xff]
    %v3646 = vld [vmem:[#allocation14 + $0xaa4] sm:$0xff]
    %v3647 = vld [vmem:[#allocation14 + $0xaac] sm:$0xff]
    %v3648 = vld [vmem:[#allocation14 + $0xab4] sm:$0xf]
    %v3649 = vld [vmem:[#allocation14 + $0xab8] sm:$0xff]
    %v3650 = vld [vmem:[#allocation14 + $0xac0] sm:$0xff]
    %v3651 = vld [vmem:[#allocation14 + $0xac8] sm:$0xff]
    %v3652 = vld [vmem:[#allocation14 + $0xad0] sm:$0xf]
    %v3653 = vld [vmem:[#allocation14 + $0xad4] sm:$0xff]
    %v3654 = vld [vmem:[#allocation14 + $0xadc] sm:$0xff]
    %v3655 = vld [vmem:[#allocation14 + $0xae4] sm:$0xff]
    %v3656 = vld [vmem:[#allocation14 + $0xaec] sm:$0xf]
    %v3657 = vld [vmem:[#allocation14 + $0xaf0] sm:$0xff]
    %v3658 = vld [vmem:[#allocation14 + $0xaf8] sm:$0xff]
    %v3659 = vld [vmem:[#allocation14 + $0xb00] sm:$0xff]
    %v3660 = vld [vmem:[#allocation14 + $0xb08] sm:$0xf]
    %v3661 = vld [vmem:[#allocation14 + $0xb0c] sm:$0xff]
    %v3662 = vld [vmem:[#allocation14 + $0xb14] sm:$0xff]
    %v3663 = vld [vmem:[#allocation14 + $0xb1c] sm:$0xff]
    %v3664 = vld [vmem:[#allocation14 + $0xb24] sm:$0xf]
    %v3665 = vld [vmem:[#allocation14 + $0xb28] sm:$0xff]
    %v3666 = vld [vmem:[#allocation14 + $0xb30] sm:$0xff]
    %v3667 = vld [vmem:[#allocation14 + $0xb38] sm:$0xff]
    %v3668 = vld [vmem:[#allocation14 + $0xb40] sm:$0xf]
    %v3669 = vld [vmem:[#allocation14 + $0xb44] sm:$0xff]
    %v3670 = vld [vmem:[#allocation14 + $0xb4c] sm:$0xff]
    %v3671 = vld [vmem:[#allocation14 + $0xb54] sm:$0xff]
    %v3672 = vld [vmem:[#allocation14 + $0xb5c] sm:$0xf]
    %v3673 = vld [vmem:[#allocation14 + $0xb60] sm:$0xff]
    %v3674 = vld [vmem:[#allocation14 + $0xb68] sm:$0xff]
    %v3675 = vld [vmem:[#allocation14 + $0xb70] sm:$0xff]
    %v3676 = vld [vmem:[#allocation14 + $0xb78] sm:$0xf]
    %v3677 = vld [vmem:[#allocation14 + $0xb7c] sm:$0xff]
    %v3678 = vld [vmem:[#allocation14 + $0xb84] sm:$0xff]
    %v3679 = vld [vmem:[#allocation14 + $0xb8c] sm:$0xff]
    %v3680 = vld [vmem:[#allocation14 + $0xb94] sm:$0xf]
    %v3681 = vld [vmem:[#allocation14 + $0xb98] sm:$0xff]
    %v3682 = vld [vmem:[#allocation14 + $0xba0] sm:$0xff]
    %v3683 = vld [vmem:[#allocation14 + $0xba8] sm:$0xff]
    %v3684 = vld [vmem:[#allocation14 + $0xbb0] sm:$0xf]
    %v3685 = vld [vmem:[#allocation14 + $0xbb4] sm:$0xff]
    %v3686 = vld [vmem:[#allocation14 + $0xbbc] sm:$0xff]
    %v3687 = vld [vmem:[#allocation14 + $0xbc4] sm:$0xff]
    %v3688 = vld [vmem:[#allocation14 + $0xbcc] sm:$0xf]
    %v3689 = vld [vmem:[#allocation14 + $0xbd0] sm:$0xff]
    %v3690 = vld [vmem:[#allocation14 + $0xbd8] sm:$0xff]
    %v3691 = vld [vmem:[#allocation14 + $0xbe0] sm:$0xff]
    %v3692 = vld [vmem:[#allocation14 + $0xbe8] sm:$0xf]
    %v3693 = vld [vmem:[#allocation14 + $0xbec] sm:$0xff]
    %v3694 = vld [vmem:[#allocation14 + $0xbf4] sm:$0xff]
    %v3695 = vld [vmem:[#allocation14 + $0xbfc] sm:$0xff]
    %v3696 = vld [vmem:[#allocation14 + $0xc04] sm:$0xf]
    %v3697 = vld [vmem:[#allocation14 + $0xc08] sm:$0xff]
    %v3698 = vld [vmem:[#allocation14 + $0xc10] sm:$0xff]
    %v3699 = vld [vmem:[#allocation14 + $0xc18] sm:$0xff]
    %v3700 = vld [vmem:[#allocation14 + $0xc20] sm:$0xf]
    %v3701 = vld [vmem:[#allocation14 + $0xc24] sm:$0xff]
    %v3702 = vld [vmem:[#allocation14 + $0xc2c] sm:$0xff]
    %v3703 = vld [vmem:[#allocation14 + $0xc34] sm:$0xff]
    %v3704 = vld [vmem:[#allocation14 + $0xc3c] sm:$0xf]
    %v3705 = vld [vmem:[#allocation14 + $0xc40] sm:$0xff]
    %v3706 = vld [vmem:[#allocation14 + $0xc48] sm:$0xff]
    %v3707 = vld [vmem:[#allocation14 + $0xc50] sm:$0xff]
    %v3708 = vld [vmem:[#allocation14 + $0xc58] sm:$0xf]
    %v3709 = vld [vmem:[#allocation14 + $0xc5c] sm:$0xff]
    %v3710 = vld [vmem:[#allocation14 + $0xc64] sm:$0xff]
    %v3711 = vld [vmem:[#allocation14 + $0xc6c] sm:$0xff]
    %v3712 = vld [vmem:[#allocation14 + $0xc74] sm:$0xf]
    %v3713 = vld [vmem:[#allocation14 + $0xc78] sm:$0xff]
    %v3714 = vld [vmem:[#allocation14 + $0xc80] sm:$0xff]
    %v3715 = vld [vmem:[#allocation14 + $0xc88] sm:$0xff]
    %v3716 = vld [vmem:[#allocation14 + $0xc90] sm:$0xf]
    %v3717 = vld [vmem:[#allocation14 + $0xc94] sm:$0xff]
    %v3718 = vld [vmem:[#allocation14 + $0xc9c] sm:$0xff]
    %v3719 = vld [vmem:[#allocation14 + $0xca4] sm:$0xff]
    %v3720 = vld [vmem:[#allocation14 + $0xcac] sm:$0xf]
    %v3721 = vld [vmem:[#allocation14 + $0xcb0] sm:$0xff]
    %v3722 = vld [vmem:[#allocation14 + $0xcb8] sm:$0xff]
    %v3723 = vld [vmem:[#allocation14 + $0xcc0] sm:$0xff]
    %v3724 = vld [vmem:[#allocation14 + $0xcc8] sm:$0xf]
    %v3725 = vld [vmem:[#allocation14 + $0xccc] sm:$0xff]
    %v3726 = vld [vmem:[#allocation14 + $0xcd4] sm:$0xff]
    %v3727 = vld [vmem:[#allocation14 + $0xcdc] sm:$0xff]
    %v3728 = vld [vmem:[#allocation14 + $0xce4] sm:$0xf]
    %v3729 = vld [vmem:[#allocation14 + $0xce8] sm:$0xff]
    %v3730 = vld [vmem:[#allocation14 + $0xcf0] sm:$0xff]
    %v3731 = vld [vmem:[#allocation14 + $0xcf8] sm:$0xff]
    %v3732 = vld [vmem:[#allocation14 + $0xd00] sm:$0xf]
    %v3733 = vld [vmem:[#allocation14 + $0xd04] sm:$0xff]
    %v3734 = vld [vmem:[#allocation14 + $0xd0c] sm:$0xff]
    %v3735 = vld [vmem:[#allocation14 + $0xd14] sm:$0xff]
    %v3736 = vld [vmem:[#allocation14 + $0xd1c] sm:$0xf]
    %v3737 = vld [vmem:[#allocation14 + $0xd20] sm:$0xff]
    %v3738 = vld [vmem:[#allocation14 + $0xd28] sm:$0xff]
    %v3739 = vld [vmem:[#allocation14 + $0xd30] sm:$0xff]
    %v3740 = vld [vmem:[#allocation14 + $0xd38] sm:$0xf]
    %v3741 = vld [vmem:[#allocation14 + $0xd3c] sm:$0xff]
    %v3742 = vld [vmem:[#allocation14 + $0xd44] sm:$0xff]
    %v3743 = vld [vmem:[#allocation14 + $0xd4c] sm:$0xff]
    %v3744 = vld [vmem:[#allocation14 + $0xd54] sm:$0xf]
    %v3745 = vld [vmem:[#allocation14 + $0xd58] sm:$0xff]
    %v3746 = vld [vmem:[#allocation14 + $0xd60] sm:$0xff]
    %v3747 = vld [vmem:[#allocation14 + $0xd68] sm:$0xff]
    %v3748 = vld [vmem:[#allocation14 + $0xd70] sm:$0xf]
    %v3749 = vld [vmem:[#allocation14 + $0xd74] sm:$0xff]
    %v3750 = vld [vmem:[#allocation14 + $0xd7c] sm:$0xff]
    %v3751 = vld [vmem:[#allocation14 + $0xd84] sm:$0xff]
    %v3752 = vld [vmem:[#allocation14 + $0xd8c] sm:$0xf]
    %v3753 = vld [vmem:[#allocation14 + $0xd90] sm:$0xff]
    %v3754 = vld [vmem:[#allocation14 + $0xd98] sm:$0xff]
    %v3755 = vld [vmem:[#allocation14 + $0xda0] sm:$0xff]
    %v3756 = vld [vmem:[#allocation14 + $0xda8] sm:$0xf]
    %v3757 = vld [vmem:[#allocation14 + $0xdac] sm:$0xff]
    %v3758 = vld [vmem:[#allocation14 + $0xdb4] sm:$0xff]
    %v3759 = vld [vmem:[#allocation14 + $0xdbc] sm:$0xff]
    %v3760 = vld [vmem:[#allocation14 + $0xdc4] sm:$0xf]
    %v3761 = vld [vmem:[#allocation14 + $0xdc8] sm:$0xff]
    %v3762 = vld [vmem:[#allocation14 + $0xdd0] sm:$0xff]
    %v3763 = vld [vmem:[#allocation14 + $0xdd8] sm:$0xff]
    %v3764 = vld [vmem:[#allocation14 + $0xde0] sm:$0xf]
    %v3765 = vld [vmem:[#allocation14 + $0xde4] sm:$0xff]
    %v3766 = vld [vmem:[#allocation14 + $0xdec] sm:$0xff]
    %v3767 = vld [vmem:[#allocation14 + $0xdf4] sm:$0xff]
    %v3768 = vld [vmem:[#allocation14 + $0xdfc] sm:$0xf]
    %v3769 = vld [vmem:[#allocation16] sm:$0xff]
    %v3771 = vperm.slane %v3769, 0
    %v3772 = vperm.slane %v3769, 1
    %v3773 = vperm.slane %v3769, 2
    %v3774 = vperm.slane %v3769, 3
    %v3775 = vperm.slane %v3769, 4
    %v3776 = vperm.slane %v3769, 5
    %v3777 = vperm.slane %v3769, 6
    %v4297 = vunpack.c.l.b16 %v3257
    %v4298 = vunpack.c.h.b16 %v3257
    %v4299 = vunpack.c.l.b16 %v3258
    %v4300 = vunpack.c.h.b16 %v3258
    %v4301 = vunpack.c.l.b16 %v3259
    %v4302 = vunpack.c.h.b16 %v3259
    %v4303 = vunpack.c.l.b16 %v3260
    %v4304 = vunpack.c.l.b16 %v3261
    %v4305 = vunpack.c.h.b16 %v3261
    %v4306 = vunpack.c.l.b16 %v3262
    %v4307 = vunpack.c.h.b16 %v3262
    %v4308 = vunpack.c.l.b16 %v3263
    %v4309 = vunpack.c.h.b16 %v3263
    %v4310 = vunpack.c.l.b16 %v3264
    %v4311 = vunpack.c.l.b16 %v3265
    %v4312 = vunpack.c.h.b16 %v3265
    %v4313 = vunpack.c.l.b16 %v3266
    %v4314 = vunpack.c.h.b16 %v3266
    %v4315 = vunpack.c.l.b16 %v3267
    %v4316 = vunpack.c.h.b16 %v3267
    %v4317 = vunpack.c.l.b16 %v3268
    %v4318 = vunpack.c.l.b16 %v3269
    %v4319 = vunpack.c.h.b16 %v3269
    %v4320 = vunpack.c.l.b16 %v3270
    %v4321 = vunpack.c.h.b16 %v3270
    %v4322 = vunpack.c.l.b16 %v3271
    %v4323 = vunpack.c.h.b16 %v3271
    %v4324 = vunpack.c.l.b16 %v3272
    %v4325 = vunpack.c.l.b16 %v3273
    %v4326 = vunpack.c.h.b16 %v3273
    %v4327 = vunpack.c.l.b16 %v3274
    %v4328 = vunpack.c.h.b16 %v3274
    %v4329 = vunpack.c.l.b16 %v3275
    %v4330 = vunpack.c.h.b16 %v3275
    %v4331 = vunpack.c.l.b16 %v3276
    %v4332 = vunpack.c.l.b16 %v3277
    %v4333 = vunpack.c.h.b16 %v3277
    %v4334 = vunpack.c.l.b16 %v3278
    %v4335 = vunpack.c.h.b16 %v3278
    %v4336 = vunpack.c.l.b16 %v3279
    %v4337 = vunpack.c.h.b16 %v3279
    %v4338 = vunpack.c.l.b16 %v3280
    %v4339 = vunpack.c.l.b16 %v3281
    %v4340 = vunpack.c.h.b16 %v3281
    %v4341 = vunpack.c.l.b16 %v3282
    %v4342 = vunpack.c.h.b16 %v3282
    %v4343 = vunpack.c.l.b16 %v3283
    %v4344 = vunpack.c.h.b16 %v3283
    %v4345 = vunpack.c.l.b16 %v3284
    %v4346 = vunpack.c.l.b16 %v3285
    %v4347 = vunpack.c.h.b16 %v3285
    %v4348 = vunpack.c.l.b16 %v3286
    %v4349 = vunpack.c.h.b16 %v3286
    %v4350 = vunpack.c.l.b16 %v3287
    %v4351 = vunpack.c.h.b16 %v3287
    %v4352 = vunpack.c.l.b16 %v3288
    %v4353 = vunpack.c.l.b16 %v3289
    %v4354 = vunpack.c.h.b16 %v3289
    %v4355 = vunpack.c.l.b16 %v3290
    %v4356 = vunpack.c.h.b16 %v3290
    %v4357 = vunpack.c.l.b16 %v3291
    %v4358 = vunpack.c.h.b16 %v3291
    %v4359 = vunpack.c.l.b16 %v3292
    %v4360 = vunpack.c.l.b16 %v3293
    %v4361 = vunpack.c.h.b16 %v3293
    %v4362 = vunpack.c.l.b16 %v3294
    %v4363 = vunpack.c.h.b16 %v3294
    %v4364 = vunpack.c.l.b16 %v3295
    %v4365 = vunpack.c.h.b16 %v3295
    %v4366 = vunpack.c.l.b16 %v3296
    %v4367 = vunpack.c.l.b16 %v3297
    %v4368 = vunpack.c.h.b16 %v3297
    %v4369 = vunpack.c.l.b16 %v3298
    %v4370 = vunpack.c.h.b16 %v3298
    %v4371 = vunpack.c.l.b16 %v3299
    %v4372 = vunpack.c.h.b16 %v3299
    %v4373 = vunpack.c.l.b16 %v3300
    %v4374 = vunpack.c.l.b16 %v3301
    %v4375 = vunpack.c.h.b16 %v3301
    %v4376 = vunpack.c.l.b16 %v3302
    %v4377 = vunpack.c.h.b16 %v3302
    %v4378 = vunpack.c.l.b16 %v3303
    %v4379 = vunpack.c.h.b16 %v3303
    %v4380 = vunpack.c.l.b16 %v3304
    %v4381 = vunpack.c.l.b16 %v3305
    %v4382 = vunpack.c.h.b16 %v3305
    %v4383 = vunpack.c.l.b16 %v3306
    %v4384 = vunpack.c.h.b16 %v3306
    %v4385 = vunpack.c.l.b16 %v3307
    %v4386 = vunpack.c.h.b16 %v3307
    %v4387 = vunpack.c.l.b16 %v3308
    %v4388 = vunpack.c.l.b16 %v3309
    %v4389 = vunpack.c.h.b16 %v3309
    %v4390 = vunpack.c.l.b16 %v3310
    %v4391 = vunpack.c.h.b16 %v3310
    %v4392 = vunpack.c.l.b16 %v3311
    %v4393 = vunpack.c.h.b16 %v3311
    %v4394 = vunpack.c.l.b16 %v3312
    %v4395 = vunpack.c.l.b16 %v3313
    %v4396 = vunpack.c.h.b16 %v3313
    %v4397 = vunpack.c.l.b16 %v3314
    %v4398 = vunpack.c.h.b16 %v3314
    %v4399 = vunpack.c.l.b16 %v3315
    %v4400 = vunpack.c.h.b16 %v3315
    %v4401 = vunpack.c.l.b16 %v3316
    %v4402 = vunpack.c.l.b16 %v3317
    %v4403 = vunpack.c.h.b16 %v3317
    %v4404 = vunpack.c.l.b16 %v3318
    %v4405 = vunpack.c.h.b16 %v3318
    %v4406 = vunpack.c.l.b16 %v3319
    %v4407 = vunpack.c.h.b16 %v3319
    %v4408 = vunpack.c.l.b16 %v3320
    %v4409 = vunpack.c.l.b16 %v3321
    %v4410 = vunpack.c.h.b16 %v3321
    %v4411 = vunpack.c.l.b16 %v3322
    %v4412 = vunpack.c.h.b16 %v3322
    %v4413 = vunpack.c.l.b16 %v3323
    %v4414 = vunpack.c.h.b16 %v3323
    %v4415 = vunpack.c.l.b16 %v3324
    %v4416 = vunpack.c.l.b16 %v3325
    %v4417 = vunpack.c.h.b16 %v3325
    %v4418 = vunpack.c.l.b16 %v3326
    %v4419 = vunpack.c.h.b16 %v3326
    %v4420 = vunpack.c.l.b16 %v3327
    %v4421 = vunpack.c.h.b16 %v3327
    %v4422 = vunpack.c.l.b16 %v3328
    %v4423 = vunpack.c.l.b16 %v3329
    %v4424 = vunpack.c.h.b16 %v3329
    %v4425 = vunpack.c.l.b16 %v3330
    %v4426 = vunpack.c.h.b16 %v3330
    %v4427 = vunpack.c.l.b16 %v3331
    %v4428 = vunpack.c.h.b16 %v3331
    %v4429 = vunpack.c.l.b16 %v3332
    %v4430 = vunpack.c.l.b16 %v3333
    %v4431 = vunpack.c.h.b16 %v3333
    %v4432 = vunpack.c.l.b16 %v3334
    %v4433 = vunpack.c.h.b16 %v3334
    %v4434 = vunpack.c.l.b16 %v3335
    %v4435 = vunpack.c.h.b16 %v3335
    %v4436 = vunpack.c.l.b16 %v3336
    %v4437 = vunpack.c.l.b16 %v3337
    %v4438 = vunpack.c.h.b16 %v3337
    %v4439 = vunpack.c.l.b16 %v3338
    %v4440 = vunpack.c.h.b16 %v3338
    %v4441 = vunpack.c.l.b16 %v3339
    %v4442 = vunpack.c.h.b16 %v3339
    %v4443 = vunpack.c.l.b16 %v3340
    %v4444 = vunpack.c.l.b16 %v3341
    %v4445 = vunpack.c.h.b16 %v3341
    %v4446 = vunpack.c.l.b16 %v3342
    %v4447 = vunpack.c.h.b16 %v3342
    %v4448 = vunpack.c.l.b16 %v3343
    %v4449 = vunpack.c.h.b16 %v3343
    %v4450 = vunpack.c.l.b16 %v3344
    %v4451 = vunpack.c.l.b16 %v3345
    %v4452 = vunpack.c.h.b16 %v3345
    %v4453 = vunpack.c.l.b16 %v3346
    %v4454 = vunpack.c.h.b16 %v3346
    %v4455 = vunpack.c.l.b16 %v3347
    %v4456 = vunpack.c.h.b16 %v3347
    %v4457 = vunpack.c.l.b16 %v3348
    %v4458 = vunpack.c.l.b16 %v3349
    %v4459 = vunpack.c.h.b16 %v3349
    %v4460 = vunpack.c.l.b16 %v3350
    %v4461 = vunpack.c.h.b16 %v3350
    %v4462 = vunpack.c.l.b16 %v3351
    %v4463 = vunpack.c.h.b16 %v3351
    %v4464 = vunpack.c.l.b16 %v3352
    %v4465 = vunpack.c.l.b16 %v3353
    %v4466 = vunpack.c.h.b16 %v3353
    %v4467 = vunpack.c.l.b16 %v3354
    %v4468 = vunpack.c.h.b16 %v3354
    %v4469 = vunpack.c.l.b16 %v3355
    %v4470 = vunpack.c.h.b16 %v3355
    %v4471 = vunpack.c.l.b16 %v3356
    %v4472 = vunpack.c.l.b16 %v3357
    %v4473 = vunpack.c.h.b16 %v3357
    %v4474 = vunpack.c.l.b16 %v3358
    %v4475 = vunpack.c.h.b16 %v3358
    %v4476 = vunpack.c.l.b16 %v3359
    %v4477 = vunpack.c.h.b16 %v3359
    %v4478 = vunpack.c.l.b16 %v3360
    %v4479 = vunpack.c.l.b16 %v3361
    %v4480 = vunpack.c.h.b16 %v3361
    %v4481 = vunpack.c.l.b16 %v3362
    %v4482 = vunpack.c.h.b16 %v3362
    %v4483 = vunpack.c.l.b16 %v3363
    %v4484 = vunpack.c.h.b16 %v3363
    %v4485 = vunpack.c.l.b16 %v3364
    %v4486 = vunpack.c.l.b16 %v3365
    %v4487 = vunpack.c.h.b16 %v3365
    %v4488 = vunpack.c.l.b16 %v3366
    %v4489 = vunpack.c.h.b16 %v3366
    %v4490 = vunpack.c.l.b16 %v3367
    %v4491 = vunpack.c.h.b16 %v3367
    %v4492 = vunpack.c.l.b16 %v3368
    %v4493 = vunpack.c.l.b16 %v3369
    %v4494 = vunpack.c.h.b16 %v3369
    %v4495 = vunpack.c.l.b16 %v3370
    %v4496 = vunpack.c.h.b16 %v3370
    %v4497 = vunpack.c.l.b16 %v3371
    %v4498 = vunpack.c.h.b16 %v3371
    %v4499 = vunpack.c.l.b16 %v3372
    %v4500 = vunpack.c.l.b16 %v3373
    %v4501 = vunpack.c.h.b16 %v3373
    %v4502 = vunpack.c.l.b16 %v3374
    %v4503 = vunpack.c.h.b16 %v3374
    %v4504 = vunpack.c.l.b16 %v3375
    %v4505 = vunpack.c.h.b16 %v3375
    %v4506 = vunpack.c.l.b16 %v3376
    %v4507 = vunpack.c.l.b16 %v3377
    %v4508 = vunpack.c.h.b16 %v3377
    %v4509 = vunpack.c.l.b16 %v3378
    %v4510 = vunpack.c.h.b16 %v3378
    %v4511 = vunpack.c.l.b16 %v3379
    %v4512 = vunpack.c.h.b16 %v3379
    %v4513 = vunpack.c.l.b16 %v3380
    %v4514 = vunpack.c.l.b16 %v3381
    %v4515 = vunpack.c.h.b16 %v3381
    %v4516 = vunpack.c.l.b16 %v3382
    %v4517 = vunpack.c.h.b16 %v3382
    %v4518 = vunpack.c.l.b16 %v3383
    %v4519 = vunpack.c.h.b16 %v3383
    %v4520 = vunpack.c.l.b16 %v3384
    %v4521 = vunpack.c.l.b16 %v3385
    %v4522 = vunpack.c.h.b16 %v3385
    %v4523 = vunpack.c.l.b16 %v3386
    %v4524 = vunpack.c.h.b16 %v3386
    %v4525 = vunpack.c.l.b16 %v3387
    %v4526 = vunpack.c.h.b16 %v3387
    %v4527 = vunpack.c.l.b16 %v3388
    %v4528 = vunpack.c.l.b16 %v3389
    %v4529 = vunpack.c.h.b16 %v3389
    %v4530 = vunpack.c.l.b16 %v3390
    %v4531 = vunpack.c.h.b16 %v3390
    %v4532 = vunpack.c.l.b16 %v3391
    %v4533 = vunpack.c.h.b16 %v3391
    %v4534 = vunpack.c.l.b16 %v3392
    %v4535 = vunpack.c.l.b16 %v3393
    %v4536 = vunpack.c.h.b16 %v3393
    %v4537 = vunpack.c.l.b16 %v3394
    %v4538 = vunpack.c.h.b16 %v3394
    %v4539 = vunpack.c.l.b16 %v3395
    %v4540 = vunpack.c.h.b16 %v3395
    %v4541 = vunpack.c.l.b16 %v3396
    %v4542 = vunpack.c.l.b16 %v3397
    %v4543 = vunpack.c.h.b16 %v3397
    %v4544 = vunpack.c.l.b16 %v3398
    %v4545 = vunpack.c.h.b16 %v3398
    %v4546 = vunpack.c.l.b16 %v3399
    %v4547 = vunpack.c.h.b16 %v3399
    %v4548 = vunpack.c.l.b16 %v3400
    %v4549 = vunpack.c.l.b16 %v3401
    %v4550 = vunpack.c.h.b16 %v3401
    %v4551 = vunpack.c.l.b16 %v3402
    %v4552 = vunpack.c.h.b16 %v3402
    %v4553 = vunpack.c.l.b16 %v3403
    %v4554 = vunpack.c.h.b16 %v3403
    %v4555 = vunpack.c.l.b16 %v3404
    %v4556 = vunpack.c.l.b16 %v3405
    %v4557 = vunpack.c.h.b16 %v3405
    %v4558 = vunpack.c.l.b16 %v3406
    %v4559 = vunpack.c.h.b16 %v3406
    %v4560 = vunpack.c.l.b16 %v3407
    %v4561 = vunpack.c.h.b16 %v3407
    %v4562 = vunpack.c.l.b16 %v3408
    %v4563 = vunpack.c.l.b16 %v3409
    %v4564 = vunpack.c.h.b16 %v3409
    %v4565 = vunpack.c.l.b16 %v3410
    %v4566 = vunpack.c.h.b16 %v3410
    %v4567 = vunpack.c.l.b16 %v3411
    %v4568 = vunpack.c.h.b16 %v3411
    %v4569 = vunpack.c.l.b16 %v3412
    %v4570 = vunpack.c.l.b16 %v3413
    %v4571 = vunpack.c.h.b16 %v3413
    %v4572 = vunpack.c.l.b16 %v3414
    %v4573 = vunpack.c.h.b16 %v3414
    %v4574 = vunpack.c.l.b16 %v3415
    %v4575 = vunpack.c.h.b16 %v3415
    %v4576 = vunpack.c.l.b16 %v3416
    %v4577 = vunpack.c.l.b16 %v3417
    %v4578 = vunpack.c.h.b16 %v3417
    %v4579 = vunpack.c.l.b16 %v3418
    %v4580 = vunpack.c.h.b16 %v3418
    %v4581 = vunpack.c.l.b16 %v3419
    %v4582 = vunpack.c.h.b16 %v3419
    %v4583 = vunpack.c.l.b16 %v3420
    %v4584 = vunpack.c.l.b16 %v3421
    %v4585 = vunpack.c.h.b16 %v3421
    %v4586 = vunpack.c.l.b16 %v3422
    %v4587 = vunpack.c.h.b16 %v3422
    %v4588 = vunpack.c.l.b16 %v3423
    %v4589 = vunpack.c.h.b16 %v3423
    %v4590 = vunpack.c.l.b16 %v3424
    %v4591 = vunpack.c.l.b16 %v3425
    %v4592 = vunpack.c.h.b16 %v3425
    %v4593 = vunpack.c.l.b16 %v3426
    %v4594 = vunpack.c.h.b16 %v3426
    %v4595 = vunpack.c.l.b16 %v3427
    %v4596 = vunpack.c.h.b16 %v3427
    %v4597 = vunpack.c.l.b16 %v3428
    %v4598 = vunpack.c.l.b16 %v3429
    %v4599 = vunpack.c.h.b16 %v3429
    %v4600 = vunpack.c.l.b16 %v3430
    %v4601 = vunpack.c.h.b16 %v3430
    %v4602 = vunpack.c.l.b16 %v3431
    %v4603 = vunpack.c.h.b16 %v3431
    %v4604 = vunpack.c.l.b16 %v3432
    %v4605 = vunpack.c.l.b16 %v3433
    %v4606 = vunpack.c.h.b16 %v3433
    %v4607 = vunpack.c.l.b16 %v3434
    %v4608 = vunpack.c.h.b16 %v3434
    %v4609 = vunpack.c.l.b16 %v3435
    %v4610 = vunpack.c.h.b16 %v3435
    %v4611 = vunpack.c.l.b16 %v3436
    %v4612 = vunpack.c.l.b16 %v3437
    %v4613 = vunpack.c.h.b16 %v3437
    %v4614 = vunpack.c.l.b16 %v3438
    %v4615 = vunpack.c.h.b16 %v3438
    %v4616 = vunpack.c.l.b16 %v3439
    %v4617 = vunpack.c.h.b16 %v3439
    %v4618 = vunpack.c.l.b16 %v3440
    %v4619 = vunpack.c.l.b16 %v3441
    %v4620 = vunpack.c.h.b16 %v3441
    %v4621 = vunpack.c.l.b16 %v3442
    %v4622 = vunpack.c.h.b16 %v3442
    %v4623 = vunpack.c.l.b16 %v3443
    %v4624 = vunpack.c.h.b16 %v3443
    %v4625 = vunpack.c.l.b16 %v3444
    %v4626 = vunpack.c.l.b16 %v3445
    %v4627 = vunpack.c.h.b16 %v3445
    %v4628 = vunpack.c.l.b16 %v3446
    %v4629 = vunpack.c.h.b16 %v3446
    %v4630 = vunpack.c.l.b16 %v3447
    %v4631 = vunpack.c.h.b16 %v3447
    %v4632 = vunpack.c.l.b16 %v3448
    %v4633 = vunpack.c.l.b16 %v3449
    %v4634 = vunpack.c.h.b16 %v3449
    %v4635 = vunpack.c.l.b16 %v3450
    %v4636 = vunpack.c.h.b16 %v3450
    %v4637 = vunpack.c.l.b16 %v3451
    %v4638 = vunpack.c.h.b16 %v3451
    %v4639 = vunpack.c.l.b16 %v3452
    %v4640 = vunpack.c.l.b16 %v3453
    %v4641 = vunpack.c.h.b16 %v3453
    %v4642 = vunpack.c.l.b16 %v3454
    %v4643 = vunpack.c.h.b16 %v3454
    %v4644 = vunpack.c.l.b16 %v3455
    %v4645 = vunpack.c.h.b16 %v3455
    %v4646 = vunpack.c.l.b16 %v3456
    %v4647 = vunpack.c.l.b16 %v3457
    %v4648 = vunpack.c.h.b16 %v3457
    %v4649 = vunpack.c.l.b16 %v3458
    %v4650 = vunpack.c.h.b16 %v3458
    %v4651 = vunpack.c.l.b16 %v3459
    %v4652 = vunpack.c.h.b16 %v3459
    %v4653 = vunpack.c.l.b16 %v3460
    %v4654 = vunpack.c.l.b16 %v3461
    %v4655 = vunpack.c.h.b16 %v3461
    %v4656 = vunpack.c.l.b16 %v3462
    %v4657 = vunpack.c.h.b16 %v3462
    %v4658 = vunpack.c.l.b16 %v3463
    %v4659 = vunpack.c.h.b16 %v3463
    %v4660 = vunpack.c.l.b16 %v3464
    %v4661 = vunpack.c.l.b16 %v3465
    %v4662 = vunpack.c.h.b16 %v3465
    %v4663 = vunpack.c.l.b16 %v3466
    %v4664 = vunpack.c.h.b16 %v3466
    %v4665 = vunpack.c.l.b16 %v3467
    %v4666 = vunpack.c.h.b16 %v3467
    %v4667 = vunpack.c.l.b16 %v3468
    %v4668 = vunpack.c.l.b16 %v3469
    %v4669 = vunpack.c.h.b16 %v3469
    %v4670 = vunpack.c.l.b16 %v3470
    %v4671 = vunpack.c.h.b16 %v3470
    %v4672 = vunpack.c.l.b16 %v3471
    %v4673 = vunpack.c.h.b16 %v3471
    %v4674 = vunpack.c.l.b16 %v3472
    %v4675 = vunpack.c.l.b16 %v3473
    %v4676 = vunpack.c.h.b16 %v3473
    %v4677 = vunpack.c.l.b16 %v3474
    %v4678 = vunpack.c.h.b16 %v3474
    %v4679 = vunpack.c.l.b16 %v3475
    %v4680 = vunpack.c.h.b16 %v3475
    %v4681 = vunpack.c.l.b16 %v3476
    %v4682 = vunpack.c.l.b16 %v3477
    %v4683 = vunpack.c.h.b16 %v3477
    %v4684 = vunpack.c.l.b16 %v3478
    %v4685 = vunpack.c.h.b16 %v3478
    %v4686 = vunpack.c.l.b16 %v3479
    %v4687 = vunpack.c.h.b16 %v3479
    %v4688 = vunpack.c.l.b16 %v3480
    %v4689 = vunpack.c.l.b16 %v3481
    %v4690 = vunpack.c.h.b16 %v3481
    %v4691 = vunpack.c.l.b16 %v3482
    %v4692 = vunpack.c.h.b16 %v3482
    %v4693 = vunpack.c.l.b16 %v3483
    %v4694 = vunpack.c.h.b16 %v3483
    %v4695 = vunpack.c.l.b16 %v3484
    %v4696 = vunpack.c.l.b16 %v3485
    %v4697 = vunpack.c.h.b16 %v3485
    %v4698 = vunpack.c.l.b16 %v3486
    %v4699 = vunpack.c.h.b16 %v3486
    %v4700 = vunpack.c.l.b16 %v3487
    %v4701 = vunpack.c.h.b16 %v3487
    %v4702 = vunpack.c.l.b16 %v3488
    %v4703 = vunpack.c.l.b16 %v3489
    %v4704 = vunpack.c.h.b16 %v3489
    %v4705 = vunpack.c.l.b16 %v3490
    %v4706 = vunpack.c.h.b16 %v3490
    %v4707 = vunpack.c.l.b16 %v3491
    %v4708 = vunpack.c.h.b16 %v3491
    %v4709 = vunpack.c.l.b16 %v3492
    %v4710 = vunpack.c.l.b16 %v3493
    %v4711 = vunpack.c.h.b16 %v3493
    %v4712 = vunpack.c.l.b16 %v3494
    %v4713 = vunpack.c.h.b16 %v3494
    %v4714 = vunpack.c.l.b16 %v3495
    %v4715 = vunpack.c.h.b16 %v3495
    %v4716 = vunpack.c.l.b16 %v3496
    %v4717 = vunpack.c.l.b16 %v3497
    %v4718 = vunpack.c.h.b16 %v3497
    %v4719 = vunpack.c.l.b16 %v3498
    %v4720 = vunpack.c.h.b16 %v3498
    %v4721 = vunpack.c.l.b16 %v3499
    %v4722 = vunpack.c.h.b16 %v3499
    %v4723 = vunpack.c.l.b16 %v3500
    %v4724 = vunpack.c.l.b16 %v3501
    %v4725 = vunpack.c.h.b16 %v3501
    %v4726 = vunpack.c.l.b16 %v3502
    %v4727 = vunpack.c.h.b16 %v3502
    %v4728 = vunpack.c.l.b16 %v3503
    %v4729 = vunpack.c.h.b16 %v3503
    %v4730 = vunpack.c.l.b16 %v3504
    %v4731 = vunpack.c.l.b16 %v3505
    %v4732 = vunpack.c.h.b16 %v3505
    %v4733 = vunpack.c.l.b16 %v3506
    %v4734 = vunpack.c.h.b16 %v3506
    %v4735 = vunpack.c.l.b16 %v3507
    %v4736 = vunpack.c.h.b16 %v3507
    %v4737 = vunpack.c.l.b16 %v3508
    %v4738 = vunpack.c.l.b16 %v3509
    %v4739 = vunpack.c.h.b16 %v3509
    %v4740 = vunpack.c.l.b16 %v3510
    %v4741 = vunpack.c.h.b16 %v3510
    %v4742 = vunpack.c.l.b16 %v3511
    %v4743 = vunpack.c.h.b16 %v3511
    %v4744 = vunpack.c.l.b16 %v3512
    %v4745 = vunpack.c.l.b16 %v3513
    %v4746 = vunpack.c.h.b16 %v3513
    %v4747 = vunpack.c.l.b16 %v3514
    %v4748 = vunpack.c.h.b16 %v3514
    %v4749 = vunpack.c.l.b16 %v3515
    %v4750 = vunpack.c.h.b16 %v3515
    %v4751 = vunpack.c.l.b16 %v3516
    %v4752 = vunpack.c.l.b16 %v3517
    %v4753 = vunpack.c.h.b16 %v3517
    %v4754 = vunpack.c.l.b16 %v3518
    %v4755 = vunpack.c.h.b16 %v3518
    %v4756 = vunpack.c.l.b16 %v3519
    %v4757 = vunpack.c.h.b16 %v3519
    %v4758 = vunpack.c.l.b16 %v3520
    %v4759 = vunpack.c.l.b16 %v3521
    %v4760 = vunpack.c.h.b16 %v3521
    %v4761 = vunpack.c.l.b16 %v3522
    %v4762 = vunpack.c.h.b16 %v3522
    %v4763 = vunpack.c.l.b16 %v3523
    %v4764 = vunpack.c.h.b16 %v3523
    %v4765 = vunpack.c.l.b16 %v3524
    %v4766 = vunpack.c.l.b16 %v3525
    %v4767 = vunpack.c.h.b16 %v3525
    %v4768 = vunpack.c.l.b16 %v3526
    %v4769 = vunpack.c.h.b16 %v3526
    %v4770 = vunpack.c.l.b16 %v3527
    %v4771 = vunpack.c.h.b16 %v3527
    %v4772 = vunpack.c.l.b16 %v3528
    %v4773 = vunpack.c.l.b16 %v3529
    %v4774 = vunpack.c.h.b16 %v3529
    %v4775 = vunpack.c.l.b16 %v3530
    %v4776 = vunpack.c.h.b16 %v3530
    %v4777 = vunpack.c.l.b16 %v3531
    %v4778 = vunpack.c.h.b16 %v3531
    %v4779 = vunpack.c.l.b16 %v3532
    %v4780 = vunpack.c.l.b16 %v3533
    %v4781 = vunpack.c.h.b16 %v3533
    %v4782 = vunpack.c.l.b16 %v3534
    %v4783 = vunpack.c.h.b16 %v3534
    %v4784 = vunpack.c.l.b16 %v3535
    %v4785 = vunpack.c.h.b16 %v3535
    %v4786 = vunpack.c.l.b16 %v3536
    %v4787 = vunpack.c.l.b16 %v3537
    %v4788 = vunpack.c.h.b16 %v3537
    %v4789 = vunpack.c.l.b16 %v3538
    %v4790 = vunpack.c.h.b16 %v3538
    %v4791 = vunpack.c.l.b16 %v3539
    %v4792 = vunpack.c.h.b16 %v3539
    %v4793 = vunpack.c.l.b16 %v3540
    %v4794 = vunpack.c.l.b16 %v3541
    %v4795 = vunpack.c.h.b16 %v3541
    %v4796 = vunpack.c.l.b16 %v3542
    %v4797 = vunpack.c.h.b16 %v3542
    %v4798 = vunpack.c.l.b16 %v3543
    %v4799 = vunpack.c.h.b16 %v3543
    %v4800 = vunpack.c.l.b16 %v3544
    %v4801 = vunpack.c.l.b16 %v3545
    %v4802 = vunpack.c.h.b16 %v3545
    %v4803 = vunpack.c.l.b16 %v3546
    %v4804 = vunpack.c.h.b16 %v3546
    %v4805 = vunpack.c.l.b16 %v3547
    %v4806 = vunpack.c.h.b16 %v3547
    %v4807 = vunpack.c.l.b16 %v3548
    %v4808 = vunpack.c.l.b16 %v3549
    %v4809 = vunpack.c.h.b16 %v3549
    %v4810 = vunpack.c.l.b16 %v3550
    %v4811 = vunpack.c.h.b16 %v3550
    %v4812 = vunpack.c.l.b16 %v3551
    %v4813 = vunpack.c.h.b16 %v3551
    %v4814 = vunpack.c.l.b16 %v3552
    %v4815 = vunpack.c.l.b16 %v3553
    %v4816 = vunpack.c.h.b16 %v3553
    %v4817 = vunpack.c.l.b16 %v3554
    %v4818 = vunpack.c.h.b16 %v3554
    %v4819 = vunpack.c.l.b16 %v3555
    %v4820 = vunpack.c.h.b16 %v3555
    %v4821 = vunpack.c.l.b16 %v3556
    %v4822 = vunpack.c.l.b16 %v3557
    %v4823 = vunpack.c.h.b16 %v3557
    %v4824 = vunpack.c.l.b16 %v3558
    %v4825 = vunpack.c.h.b16 %v3558
    %v4826 = vunpack.c.l.b16 %v3559
    %v4827 = vunpack.c.h.b16 %v3559
    %v4828 = vunpack.c.l.b16 %v3560
    %v4829 = vunpack.c.l.b16 %v3561
    %v4830 = vunpack.c.h.b16 %v3561
    %v4831 = vunpack.c.l.b16 %v3562
    %v4832 = vunpack.c.h.b16 %v3562
    %v4833 = vunpack.c.l.b16 %v3563
    %v4834 = vunpack.c.h.b16 %v3563
    %v4835 = vunpack.c.l.b16 %v3564
    %v4836 = vunpack.c.l.b16 %v3565
    %v4837 = vunpack.c.h.b16 %v3565
    %v4838 = vunpack.c.l.b16 %v3566
    %v4839 = vunpack.c.h.b16 %v3566
    %v4840 = vunpack.c.l.b16 %v3567
    %v4841 = vunpack.c.h.b16 %v3567
    %v4842 = vunpack.c.l.b16 %v3568
    %v4843 = vunpack.c.l.b16 %v3569
    %v4844 = vunpack.c.h.b16 %v3569
    %v4845 = vunpack.c.l.b16 %v3570
    %v4846 = vunpack.c.h.b16 %v3570
    %v4847 = vunpack.c.l.b16 %v3571
    %v4848 = vunpack.c.h.b16 %v3571
    %v4849 = vunpack.c.l.b16 %v3572
    %v4850 = vunpack.c.l.b16 %v3573
    %v4851 = vunpack.c.h.b16 %v3573
    %v4852 = vunpack.c.l.b16 %v3574
    %v4853 = vunpack.c.h.b16 %v3574
    %v4854 = vunpack.c.l.b16 %v3575
    %v4855 = vunpack.c.h.b16 %v3575
    %v4856 = vunpack.c.l.b16 %v3576
    %v4857 = vunpack.c.l.b16 %v3577
    %v4858 = vunpack.c.h.b16 %v3577
    %v4859 = vunpack.c.l.b16 %v3578
    %v4860 = vunpack.c.h.b16 %v3578
    %v4861 = vunpack.c.l.b16 %v3579
    %v4862 = vunpack.c.h.b16 %v3579
    %v4863 = vunpack.c.l.b16 %v3580
    %v4864 = vunpack.c.l.b16 %v3581
    %v4865 = vunpack.c.h.b16 %v3581
    %v4866 = vunpack.c.l.b16 %v3582
    %v4867 = vunpack.c.h.b16 %v3582
    %v4868 = vunpack.c.l.b16 %v3583
    %v4869 = vunpack.c.h.b16 %v3583
    %v4870 = vunpack.c.l.b16 %v3584
    %v4871 = vunpack.c.l.b16 %v3585
    %v4872 = vunpack.c.h.b16 %v3585
    %v4873 = vunpack.c.l.b16 %v3586
    %v4874 = vunpack.c.h.b16 %v3586
    %v4875 = vunpack.c.l.b16 %v3587
    %v4876 = vunpack.c.h.b16 %v3587
    %v4877 = vunpack.c.l.b16 %v3588
    %v4878 = vunpack.c.l.b16 %v3589
    %v4879 = vunpack.c.h.b16 %v3589
    %v4880 = vunpack.c.l.b16 %v3590
    %v4881 = vunpack.c.h.b16 %v3590
    %v4882 = vunpack.c.l.b16 %v3591
    %v4883 = vunpack.c.h.b16 %v3591
    %v4884 = vunpack.c.l.b16 %v3592
    %v4885 = vunpack.c.l.b16 %v3593
    %v4886 = vunpack.c.h.b16 %v3593
    %v4887 = vunpack.c.l.b16 %v3594
    %v4888 = vunpack.c.h.b16 %v3594
    %v4889 = vunpack.c.l.b16 %v3595
    %v4890 = vunpack.c.h.b16 %v3595
    %v4891 = vunpack.c.l.b16 %v3596
    %v4892 = vunpack.c.l.b16 %v3597
    %v4893 = vunpack.c.h.b16 %v3597
    %v4894 = vunpack.c.l.b16 %v3598
    %v4895 = vunpack.c.h.b16 %v3598
    %v4896 = vunpack.c.l.b16 %v3599
    %v4897 = vunpack.c.h.b16 %v3599
    %v4898 = vunpack.c.l.b16 %v3600
    %v4899 = vunpack.c.l.b16 %v3601
    %v4900 = vunpack.c.h.b16 %v3601
    %v4901 = vunpack.c.l.b16 %v3602
    %v4902 = vunpack.c.h.b16 %v3602
    %v4903 = vunpack.c.l.b16 %v3603
    %v4904 = vunpack.c.h.b16 %v3603
    %v4905 = vunpack.c.l.b16 %v3604
    %v4906 = vunpack.c.l.b16 %v3605
    %v4907 = vunpack.c.h.b16 %v3605
    %v4908 = vunpack.c.l.b16 %v3606
    %v4909 = vunpack.c.h.b16 %v3606
    %v4910 = vunpack.c.l.b16 %v3607
    %v4911 = vunpack.c.h.b16 %v3607
    %v4912 = vunpack.c.l.b16 %v3608
    %v4913 = vunpack.c.l.b16 %v3609
    %v4914 = vunpack.c.h.b16 %v3609
    %v4915 = vunpack.c.l.b16 %v3610
    %v4916 = vunpack.c.h.b16 %v3610
    %v4917 = vunpack.c.l.b16 %v3611
    %v4918 = vunpack.c.h.b16 %v3611
    %v4919 = vunpack.c.l.b16 %v3612
    %v4920 = vunpack.c.l.b16 %v3613
    %v4921 = vunpack.c.h.b16 %v3613
    %v4922 = vunpack.c.l.b16 %v3614
    %v4923 = vunpack.c.h.b16 %v3614
    %v4924 = vunpack.c.l.b16 %v3615
    %v4925 = vunpack.c.h.b16 %v3615
    %v4926 = vunpack.c.l.b16 %v3616
    %v4927 = vunpack.c.l.b16 %v3617
    %v4928 = vunpack.c.h.b16 %v3617
    %v4929 = vunpack.c.l.b16 %v3618
    %v4930 = vunpack.c.h.b16 %v3618
    %v4931 = vunpack.c.l.b16 %v3619
    %v4932 = vunpack.c.h.b16 %v3619
    %v4933 = vunpack.c.l.b16 %v3620
    %v4934 = vunpack.c.l.b16 %v3621
    %v4935 = vunpack.c.h.b16 %v3621
    %v4936 = vunpack.c.l.b16 %v3622
    %v4937 = vunpack.c.h.b16 %v3622
    %v4938 = vunpack.c.l.b16 %v3623
    %v4939 = vunpack.c.h.b16 %v3623
    %v4940 = vunpack.c.l.b16 %v3624
    %v4941 = vunpack.c.l.b16 %v3625
    %v4942 = vunpack.c.h.b16 %v3625
    %v4943 = vunpack.c.l.b16 %v3626
    %v4944 = vunpack.c.h.b16 %v3626
    %v4945 = vunpack.c.l.b16 %v3627
    %v4946 = vunpack.c.h.b16 %v3627
    %v4947 = vunpack.c.l.b16 %v3628
    %v4948 = vunpack.c.l.b16 %v3629
    %v4949 = vunpack.c.h.b16 %v3629
    %v4950 = vunpack.c.l.b16 %v3630
    %v4951 = vunpack.c.h.b16 %v3630
    %v4952 = vunpack.c.l.b16 %v3631
    %v4953 = vunpack.c.h.b16 %v3631
    %v4954 = vunpack.c.l.b16 %v3632
    %v4955 = vunpack.c.l.b16 %v3633
    %v4956 = vunpack.c.h.b16 %v3633
    %v4957 = vunpack.c.l.b16 %v3634
    %v4958 = vunpack.c.h.b16 %v3634
    %v4959 = vunpack.c.l.b16 %v3635
    %v4960 = vunpack.c.h.b16 %v3635
    %v4961 = vunpack.c.l.b16 %v3636
    %v4962 = vunpack.c.l.b16 %v3637
    %v4963 = vunpack.c.h.b16 %v3637
    %v4964 = vunpack.c.l.b16 %v3638
    %v4965 = vunpack.c.h.b16 %v3638
    %v4966 = vunpack.c.l.b16 %v3639
    %v4967 = vunpack.c.h.b16 %v3639
    %v4968 = vunpack.c.l.b16 %v3640
    %v4969 = vunpack.c.l.b16 %v3641
    %v4970 = vunpack.c.h.b16 %v3641
    %v4971 = vunpack.c.l.b16 %v3642
    %v4972 = vunpack.c.h.b16 %v3642
    %v4973 = vunpack.c.l.b16 %v3643
    %v4974 = vunpack.c.h.b16 %v3643
    %v4975 = vunpack.c.l.b16 %v3644
    %v4976 = vunpack.c.l.b16 %v3645
    %v4977 = vunpack.c.h.b16 %v3645
    %v4978 = vunpack.c.l.b16 %v3646
    %v4979 = vunpack.c.h.b16 %v3646
    %v4980 = vunpack.c.l.b16 %v3647
    %v4981 = vunpack.c.h.b16 %v3647
    %v4982 = vunpack.c.l.b16 %v3648
    %v4983 = vunpack.c.l.b16 %v3649
    %v4984 = vunpack.c.h.b16 %v3649
    %v4985 = vunpack.c.l.b16 %v3650
    %v4986 = vunpack.c.h.b16 %v3650
    %v4987 = vunpack.c.l.b16 %v3651
    %v4988 = vunpack.c.h.b16 %v3651
    %v4989 = vunpack.c.l.b16 %v3652
    %v4990 = vunpack.c.l.b16 %v3653
    %v4991 = vunpack.c.h.b16 %v3653
    %v4992 = vunpack.c.l.b16 %v3654
    %v4993 = vunpack.c.h.b16 %v3654
    %v4994 = vunpack.c.l.b16 %v3655
    %v4995 = vunpack.c.h.b16 %v3655
    %v4996 = vunpack.c.l.b16 %v3656
    %v4997 = vunpack.c.l.b16 %v3657
    %v4998 = vunpack.c.h.b16 %v3657
    %v4999 = vunpack.c.l.b16 %v3658
    %v5000 = vunpack.c.h.b16 %v3658
    %v5001 = vunpack.c.l.b16 %v3659
    %v5002 = vunpack.c.h.b16 %v3659
    %v5003 = vunpack.c.l.b16 %v3660
    %v5004 = vunpack.c.l.b16 %v3661
    %v5005 = vunpack.c.h.b16 %v3661
    %v5006 = vunpack.c.l.b16 %v3662
    %v5007 = vunpack.c.h.b16 %v3662
    %v5008 = vunpack.c.l.b16 %v3663
    %v5009 = vunpack.c.h.b16 %v3663
    %v5010 = vunpack.c.l.b16 %v3664
    %v5011 = vunpack.c.l.b16 %v3665
    %v5012 = vunpack.c.h.b16 %v3665
    %v5013 = vunpack.c.l.b16 %v3666
    %v5014 = vunpack.c.h.b16 %v3666
    %v5015 = vunpack.c.l.b16 %v3667
    %v5016 = vunpack.c.h.b16 %v3667
    %v5017 = vunpack.c.l.b16 %v3668
    %v5018 = vunpack.c.l.b16 %v3669
    %v5019 = vunpack.c.h.b16 %v3669
    %v5020 = vunpack.c.l.b16 %v3670
    %v5021 = vunpack.c.h.b16 %v3670
    %v5022 = vunpack.c.l.b16 %v3671
    %v5023 = vunpack.c.h.b16 %v3671
    %v5024 = vunpack.c.l.b16 %v3672
    %v5025 = vunpack.c.l.b16 %v3673
    %v5026 = vunpack.c.h.b16 %v3673
    %v5027 = vunpack.c.l.b16 %v3674
    %v5028 = vunpack.c.h.b16 %v3674
    %v5029 = vunpack.c.l.b16 %v3675
    %v5030 = vunpack.c.h.b16 %v3675
    %v5031 = vunpack.c.l.b16 %v3676
    %v5032 = vunpack.c.l.b16 %v3677
    %v5033 = vunpack.c.h.b16 %v3677
    %v5034 = vunpack.c.l.b16 %v3678
    %v5035 = vunpack.c.h.b16 %v3678
    %v5036 = vunpack.c.l.b16 %v3679
    %v5037 = vunpack.c.h.b16 %v3679
    %v5038 = vunpack.c.l.b16 %v3680
    %v5039 = vunpack.c.l.b16 %v3681
    %v5040 = vunpack.c.h.b16 %v3681
    %v5041 = vunpack.c.l.b16 %v3682
    %v5042 = vunpack.c.h.b16 %v3682
    %v5043 = vunpack.c.l.b16 %v3683
    %v5044 = vunpack.c.h.b16 %v3683
    %v5045 = vunpack.c.l.b16 %v3684
    %v5046 = vunpack.c.l.b16 %v3685
    %v5047 = vunpack.c.h.b16 %v3685
    %v5048 = vunpack.c.l.b16 %v3686
    %v5049 = vunpack.c.h.b16 %v3686
    %v5050 = vunpack.c.l.b16 %v3687
    %v5051 = vunpack.c.h.b16 %v3687
    %v5052 = vunpack.c.l.b16 %v3688
    %v5053 = vunpack.c.l.b16 %v3689
    %v5054 = vunpack.c.h.b16 %v3689
    %v5055 = vunpack.c.l.b16 %v3690
    %v5056 = vunpack.c.h.b16 %v3690
    %v5057 = vunpack.c.l.b16 %v3691
    %v5058 = vunpack.c.h.b16 %v3691
    %v5059 = vunpack.c.l.b16 %v3692
    %v5060 = vunpack.c.l.b16 %v3693
    %v5061 = vunpack.c.h.b16 %v3693
    %v5062 = vunpack.c.l.b16 %v3694
    %v5063 = vunpack.c.h.b16 %v3694
    %v5064 = vunpack.c.l.b16 %v3695
    %v5065 = vunpack.c.h.b16 %v3695
    %v5066 = vunpack.c.l.b16 %v3696
    %v5067 = vunpack.c.l.b16 %v3697
    %v5068 = vunpack.c.h.b16 %v3697
    %v5069 = vunpack.c.l.b16 %v3698
    %v5070 = vunpack.c.h.b16 %v3698
    %v5071 = vunpack.c.l.b16 %v3699
    %v5072 = vunpack.c.h.b16 %v3699
    %v5073 = vunpack.c.l.b16 %v3700
    %v5074 = vunpack.c.l.b16 %v3701
    %v5075 = vunpack.c.h.b16 %v3701
    %v5076 = vunpack.c.l.b16 %v3702
    %v5077 = vunpack.c.h.b16 %v3702
    %v5078 = vunpack.c.l.b16 %v3703
    %v5079 = vunpack.c.h.b16 %v3703
    %v5080 = vunpack.c.l.b16 %v3704
    %v5081 = vunpack.c.l.b16 %v3705
    %v5082 = vunpack.c.h.b16 %v3705
    %v5083 = vunpack.c.l.b16 %v3706
    %v5084 = vunpack.c.h.b16 %v3706
    %v5085 = vunpack.c.l.b16 %v3707
    %v5086 = vunpack.c.h.b16 %v3707
    %v5087 = vunpack.c.l.b16 %v3708
    %v5088 = vunpack.c.l.b16 %v3709
    %v5089 = vunpack.c.h.b16 %v3709
    %v5090 = vunpack.c.l.b16 %v3710
    %v5091 = vunpack.c.h.b16 %v3710
    %v5092 = vunpack.c.l.b16 %v3711
    %v5093 = vunpack.c.h.b16 %v3711
    %v5094 = vunpack.c.l.b16 %v3712
    %v5095 = vunpack.c.l.b16 %v3713
    %v5096 = vunpack.c.h.b16 %v3713
    %v5097 = vunpack.c.l.b16 %v3714
    %v5098 = vunpack.c.h.b16 %v3714
    %v5099 = vunpack.c.l.b16 %v3715
    %v5100 = vunpack.c.h.b16 %v3715
    %v5101 = vunpack.c.l.b16 %v3716
    %v5102 = vunpack.c.l.b16 %v3717
    %v5103 = vunpack.c.h.b16 %v3717
    %v5104 = vunpack.c.l.b16 %v3718
    %v5105 = vunpack.c.h.b16 %v3718
    %v5106 = vunpack.c.l.b16 %v3719
    %v5107 = vunpack.c.h.b16 %v3719
    %v5108 = vunpack.c.l.b16 %v3720
    %v5109 = vunpack.c.l.b16 %v3721
    %v5110 = vunpack.c.h.b16 %v3721
    %v5111 = vunpack.c.l.b16 %v3722
    %v5112 = vunpack.c.h.b16 %v3722
    %v5113 = vunpack.c.l.b16 %v3723
    %v5114 = vunpack.c.h.b16 %v3723
    %v5115 = vunpack.c.l.b16 %v3724
    %v5116 = vunpack.c.l.b16 %v3725
    %v5117 = vunpack.c.h.b16 %v3725
    %v5118 = vunpack.c.l.b16 %v3726
    %v5119 = vunpack.c.h.b16 %v3726
    %v5120 = vunpack.c.l.b16 %v3727
    %v5121 = vunpack.c.h.b16 %v3727
    %v5122 = vunpack.c.l.b16 %v3728
    %v5123 = vunpack.c.l.b16 %v3729
    %v5124 = vunpack.c.h.b16 %v3729
    %v5125 = vunpack.c.l.b16 %v3730
    %v5126 = vunpack.c.h.b16 %v3730
    %v5127 = vunpack.c.l.b16 %v3731
    %v5128 = vunpack.c.h.b16 %v3731
    %v5129 = vunpack.c.l.b16 %v3732
    %v5130 = vunpack.c.l.b16 %v3733
    %v5131 = vunpack.c.h.b16 %v3733
    %v5132 = vunpack.c.l.b16 %v3734
    %v5133 = vunpack.c.h.b16 %v3734
    %v5134 = vunpack.c.l.b16 %v3735
    %v5135 = vunpack.c.h.b16 %v3735
    %v5136 = vunpack.c.l.b16 %v3736
    %v5137 = vunpack.c.l.b16 %v3737
    %v5138 = vunpack.c.h.b16 %v3737
    %v5139 = vunpack.c.l.b16 %v3738
    %v5140 = vunpack.c.h.b16 %v3738
    %v5141 = vunpack.c.l.b16 %v3739
    %v5142 = vunpack.c.h.b16 %v3739
    %v5143 = vunpack.c.l.b16 %v3740
    %v5144 = vunpack.c.l.b16 %v3741
    %v5145 = vunpack.c.h.b16 %v3741
    %v5146 = vunpack.c.l.b16 %v3742
    %v5147 = vunpack.c.h.b16 %v3742
    %v5148 = vunpack.c.l.b16 %v3743
    %v5149 = vunpack.c.h.b16 %v3743
    %v5150 = vunpack.c.l.b16 %v3744
    %v5151 = vunpack.c.l.b16 %v3745
    %v5152 = vunpack.c.h.b16 %v3745
    %v5153 = vunpack.c.l.b16 %v3746
    %v5154 = vunpack.c.h.b16 %v3746
    %v5155 = vunpack.c.l.b16 %v3747
    %v5156 = vunpack.c.h.b16 %v3747
    %v5157 = vunpack.c.l.b16 %v3748
    %v5158 = vunpack.c.l.b16 %v3749
    %v5159 = vunpack.c.h.b16 %v3749
    %v5160 = vunpack.c.l.b16 %v3750
    %v5161 = vunpack.c.h.b16 %v3750
    %v5162 = vunpack.c.l.b16 %v3751
    %v5163 = vunpack.c.h.b16 %v3751
    %v5164 = vunpack.c.l.b16 %v3752
    %v5165 = vunpack.c.l.b16 %v3753
    %v5166 = vunpack.c.h.b16 %v3753
    %v5167 = vunpack.c.l.b16 %v3754
    %v5168 = vunpack.c.h.b16 %v3754
    %v5169 = vunpack.c.l.b16 %v3755
    %v5170 = vunpack.c.h.b16 %v3755
    %v5171 = vunpack.c.l.b16 %v3756
    %v5172 = vunpack.c.l.b16 %v3757
    %v5173 = vunpack.c.h.b16 %v3757
    %v5174 = vunpack.c.l.b16 %v3758
    %v5175 = vunpack.c.h.b16 %v3758
    %v5176 = vunpack.c.l.b16 %v3759
    %v5177 = vunpack.c.h.b16 %v3759
    %v5178 = vunpack.c.l.b16 %v3760
    %v5179 = vunpack.c.l.b16 %v3761
    %v5180 = vunpack.c.h.b16 %v3761
    %v5181 = vunpack.c.l.b16 %v3762
    %v5182 = vunpack.c.h.b16 %v3762
    %v5183 = vunpack.c.l.b16 %v3763
    %v5184 = vunpack.c.h.b16 %v3763
    %v5185 = vunpack.c.l.b16 %v3764
    %v5186 = vunpack.c.l.b16 %v3765
    %v5187 = vunpack.c.h.b16 %v3765
    %v5188 = vunpack.c.l.b16 %v3766
    %v5189 = vunpack.c.h.b16 %v3766
    %v5190 = vunpack.c.l.b16 %v3767
    %v5191 = vunpack.c.h.b16 %v3767
    %v5192 = vunpack.c.l.b16 %v3768
    %v5193 = vpack.c.b16 %v4304, %v4297
    %v5194 = vpack.c.b16 %v4305, %v4298
    %v5195 = vpack.c.b16 %v4306, %v4299
    %v5196 = vpack.c.b16 %v4307, %v4300
    %v5197 = vpack.c.b16 %v4308, %v4301
    %v5198 = vpack.c.b16 %v4309, %v4302
    %v5199 = vpack.c.b16 %v4310, %v4303
    %v5200 = vpack.c.b16 %v4318, %v4311
    %v5201 = vpack.c.b16 %v4319, %v4312
    %v5202 = vpack.c.b16 %v4320, %v4313
    %v5203 = vpack.c.b16 %v4321, %v4314
    %v5204 = vpack.c.b16 %v4322, %v4315
    %v5205 = vpack.c.b16 %v4323, %v4316
    %v5206 = vpack.c.b16 %v4324, %v4317
    %v5207 = vpack.c.b16 %v4332, %v4325
    %v5208 = vpack.c.b16 %v4333, %v4326
    %v5209 = vpack.c.b16 %v4334, %v4327
    %v5210 = vpack.c.b16 %v4335, %v4328
    %v5211 = vpack.c.b16 %v4336, %v4329
    %v5212 = vpack.c.b16 %v4337, %v4330
    %v5213 = vpack.c.b16 %v4338, %v4331
    %v5214 = vpack.c.b16 %v4346, %v4339
    %v5215 = vpack.c.b16 %v4347, %v4340
    %v5216 = vpack.c.b16 %v4348, %v4341
    %v5217 = vpack.c.b16 %v4349, %v4342
    %v5218 = vpack.c.b16 %v4350, %v4343
    %v5219 = vpack.c.b16 %v4351, %v4344
    %v5220 = vpack.c.b16 %v4352, %v4345
    %v5221 = vpack.c.b16 %v4360, %v4353
    %v5222 = vpack.c.b16 %v4361, %v4354
    %v5223 = vpack.c.b16 %v4362, %v4355
    %v5224 = vpack.c.b16 %v4363, %v4356
    %v5225 = vpack.c.b16 %v4364, %v4357
    %v5226 = vpack.c.b16 %v4365, %v4358
    %v5227 = vpack.c.b16 %v4366, %v4359
    %v5228 = vpack.c.b16 %v4374, %v4367
    %v5229 = vpack.c.b16 %v4375, %v4368
    %v5230 = vpack.c.b16 %v4376, %v4369
    %v5231 = vpack.c.b16 %v4377, %v4370
    %v5232 = vpack.c.b16 %v4378, %v4371
    %v5233 = vpack.c.b16 %v4379, %v4372
    %v5234 = vpack.c.b16 %v4380, %v4373
    %v5235 = vpack.c.b16 %v4388, %v4381
    %v5236 = vpack.c.b16 %v4389, %v4382
    %v5237 = vpack.c.b16 %v4390, %v4383
    %v5238 = vpack.c.b16 %v4391, %v4384
    %v5239 = vpack.c.b16 %v4392, %v4385
    %v5240 = vpack.c.b16 %v4393, %v4386
    %v5241 = vpack.c.b16 %v4394, %v4387
    %v5242 = vpack.c.b16 %v4402, %v4395
    %v5243 = vpack.c.b16 %v4403, %v4396
    %v5244 = vpack.c.b16 %v4404, %v4397
    %v5245 = vpack.c.b16 %v4405, %v4398
    %v5246 = vpack.c.b16 %v4406, %v4399
    %v5247 = vpack.c.b16 %v4407, %v4400
    %v5248 = vpack.c.b16 %v4408, %v4401
    %v5249 = vpack.c.b16 %v4416, %v4409
    %v5250 = vpack.c.b16 %v4417, %v4410
    %v5251 = vpack.c.b16 %v4418, %v4411
    %v5252 = vpack.c.b16 %v4419, %v4412
    %v5253 = vpack.c.b16 %v4420, %v4413
    %v5254 = vpack.c.b16 %v4421, %v4414
    %v5255 = vpack.c.b16 %v4422, %v4415
    %v5256 = vpack.c.b16 %v4430, %v4423
    %v5257 = vpack.c.b16 %v4431, %v4424
    %v5258 = vpack.c.b16 %v4432, %v4425
    %v5259 = vpack.c.b16 %v4433, %v4426
    %v5260 = vpack.c.b16 %v4434, %v4427
    %v5261 = vpack.c.b16 %v4435, %v4428
    %v5262 = vpack.c.b16 %v4436, %v4429
    %v5263 = vpack.c.b16 %v4444, %v4437
    %v5264 = vpack.c.b16 %v4445, %v4438
    %v5265 = vpack.c.b16 %v4446, %v4439
    %v5266 = vpack.c.b16 %v4447, %v4440
    %v5267 = vpack.c.b16 %v4448, %v4441
    %v5268 = vpack.c.b16 %v4449, %v4442
    %v5269 = vpack.c.b16 %v4450, %v4443
    %v5270 = vpack.c.b16 %v4458, %v4451
    %v5271 = vpack.c.b16 %v4459, %v4452
    %v5272 = vpack.c.b16 %v4460, %v4453
    %v5273 = vpack.c.b16 %v4461, %v4454
    %v5274 = vpack.c.b16 %v4462, %v4455
    %v5275 = vpack.c.b16 %v4463, %v4456
    %v5276 = vpack.c.b16 %v4464, %v4457
    %v5277 = vpack.c.b16 %v4472, %v4465
    %v5278 = vpack.c.b16 %v4473, %v4466
    %v5279 = vpack.c.b16 %v4474, %v4467
    %v5280 = vpack.c.b16 %v4475, %v4468
    %v5281 = vpack.c.b16 %v4476, %v4469
    %v5282 = vpack.c.b16 %v4477, %v4470
    %v5283 = vpack.c.b16 %v4478, %v4471
    %v5284 = vpack.c.b16 %v4486, %v4479
    %v5285 = vpack.c.b16 %v4487, %v4480
    %v5286 = vpack.c.b16 %v4488, %v4481
    %v5287 = vpack.c.b16 %v4489, %v4482
    %v5288 = vpack.c.b16 %v4490, %v4483
    %v5289 = vpack.c.b16 %v4491, %v4484
    %v5290 = vpack.c.b16 %v4492, %v4485
    %v5291 = vpack.c.b16 %v4500, %v4493
    %v5292 = vpack.c.b16 %v4501, %v4494
    %v5293 = vpack.c.b16 %v4502, %v4495
    %v5294 = vpack.c.b16 %v4503, %v4496
    %v5295 = vpack.c.b16 %v4504, %v4497
    %v5296 = vpack.c.b16 %v4505, %v4498
    %v5297 = vpack.c.b16 %v4506, %v4499
    %v5298 = vpack.c.b16 %v4514, %v4507
    %v5299 = vpack.c.b16 %v4515, %v4508
    %v5300 = vpack.c.b16 %v4516, %v4509
    %v5301 = vpack.c.b16 %v4517, %v4510
    %v5302 = vpack.c.b16 %v4518, %v4511
    %v5303 = vpack.c.b16 %v4519, %v4512
    %v5304 = vpack.c.b16 %v4520, %v4513
    %v5305 = vpack.c.b16 %v4528, %v4521
    %v5306 = vpack.c.b16 %v4529, %v4522
    %v5307 = vpack.c.b16 %v4530, %v4523
    %v5308 = vpack.c.b16 %v4531, %v4524
    %v5309 = vpack.c.b16 %v4532, %v4525
    %v5310 = vpack.c.b16 %v4533, %v4526
    %v5311 = vpack.c.b16 %v4534, %v4527
    %v5312 = vpack.c.b16 %v4542, %v4535
    %v5313 = vpack.c.b16 %v4543, %v4536
    %v5314 = vpack.c.b16 %v4544, %v4537
    %v5315 = vpack.c.b16 %v4545, %v4538
    %v5316 = vpack.c.b16 %v4546, %v4539
    %v5317 = vpack.c.b16 %v4547, %v4540
    %v5318 = vpack.c.b16 %v4548, %v4541
    %v5319 = vpack.c.b16 %v4556, %v4549
    %v5320 = vpack.c.b16 %v4557, %v4550
    %v5321 = vpack.c.b16 %v4558, %v4551
    %v5322 = vpack.c.b16 %v4559, %v4552
    %v5323 = vpack.c.b16 %v4560, %v4553
    %v5324 = vpack.c.b16 %v4561, %v4554
    %v5325 = vpack.c.b16 %v4562, %v4555
    %v5326 = vpack.c.b16 %v4570, %v4563
    %v5327 = vpack.c.b16 %v4571, %v4564
    %v5328 = vpack.c.b16 %v4572, %v4565
    %v5329 = vpack.c.b16 %v4573, %v4566
    %v5330 = vpack.c.b16 %v4574, %v4567
    %v5331 = vpack.c.b16 %v4575, %v4568
    %v5332 = vpack.c.b16 %v4576, %v4569
    %v5333 = vpack.c.b16 %v4584, %v4577
    %v5334 = vpack.c.b16 %v4585, %v4578
    %v5335 = vpack.c.b16 %v4586, %v4579
    %v5336 = vpack.c.b16 %v4587, %v4580
    %v5337 = vpack.c.b16 %v4588, %v4581
    %v5338 = vpack.c.b16 %v4589, %v4582
    %v5339 = vpack.c.b16 %v4590, %v4583
    %v5340 = vpack.c.b16 %v4598, %v4591
    %v5341 = vpack.c.b16 %v4599, %v4592
    %v5342 = vpack.c.b16 %v4600, %v4593
    %v5343 = vpack.c.b16 %v4601, %v4594
    %v5344 = vpack.c.b16 %v4602, %v4595
    %v5345 = vpack.c.b16 %v4603, %v4596
    %v5346 = vpack.c.b16 %v4604, %v4597
    %v5347 = vpack.c.b16 %v4612, %v4605
    %v5348 = vpack.c.b16 %v4613, %v4606
    %v5349 = vpack.c.b16 %v4614, %v4607
    %v5350 = vpack.c.b16 %v4615, %v4608
    %v5351 = vpack.c.b16 %v4616, %v4609
    %v5352 = vpack.c.b16 %v4617, %v4610
    %v5353 = vpack.c.b16 %v4618, %v4611
    %v5354 = vpack.c.b16 %v4626, %v4619
    %v5355 = vpack.c.b16 %v4627, %v4620
    %v5356 = vpack.c.b16 %v4628, %v4621
    %v5357 = vpack.c.b16 %v4629, %v4622
    %v5358 = vpack.c.b16 %v4630, %v4623
    %v5359 = vpack.c.b16 %v4631, %v4624
    %v5360 = vpack.c.b16 %v4632, %v4625
    %v5361 = vpack.c.b16 %v4640, %v4633
    %v5362 = vpack.c.b16 %v4641, %v4634
    %v5363 = vpack.c.b16 %v4642, %v4635
    %v5364 = vpack.c.b16 %v4643, %v4636
    %v5365 = vpack.c.b16 %v4644, %v4637
    %v5366 = vpack.c.b16 %v4645, %v4638
    %v5367 = vpack.c.b16 %v4646, %v4639
    %v5368 = vpack.c.b16 %v4654, %v4647
    %v5369 = vpack.c.b16 %v4655, %v4648
    %v5370 = vpack.c.b16 %v4656, %v4649
    %v5371 = vpack.c.b16 %v4657, %v4650
    %v5372 = vpack.c.b16 %v4658, %v4651
    %v5373 = vpack.c.b16 %v4659, %v4652
    %v5374 = vpack.c.b16 %v4660, %v4653
    %v5375 = vpack.c.b16 %v4668, %v4661
    %v5376 = vpack.c.b16 %v4669, %v4662
    %v5377 = vpack.c.b16 %v4670, %v4663
    %v5378 = vpack.c.b16 %v4671, %v4664
    %v5379 = vpack.c.b16 %v4672, %v4665
    %v5380 = vpack.c.b16 %v4673, %v4666
    %v5381 = vpack.c.b16 %v4674, %v4667
    %v5382 = vpack.c.b16 %v4682, %v4675
    %v5383 = vpack.c.b16 %v4683, %v4676
    %v5384 = vpack.c.b16 %v4684, %v4677
    %v5385 = vpack.c.b16 %v4685, %v4678
    %v5386 = vpack.c.b16 %v4686, %v4679
    %v5387 = vpack.c.b16 %v4687, %v4680
    %v5388 = vpack.c.b16 %v4688, %v4681
    %v5389 = vpack.c.b16 %v4696, %v4689
    %v5390 = vpack.c.b16 %v4697, %v4690
    %v5391 = vpack.c.b16 %v4698, %v4691
    %v5392 = vpack.c.b16 %v4699, %v4692
    %v5393 = vpack.c.b16 %v4700, %v4693
    %v5394 = vpack.c.b16 %v4701, %v4694
    %v5395 = vpack.c.b16 %v4702, %v4695
    %v5396 = vpack.c.b16 %v4710, %v4703
    %v5397 = vpack.c.b16 %v4711, %v4704
    %v5398 = vpack.c.b16 %v4712, %v4705
    %v5399 = vpack.c.b16 %v4713, %v4706
    %v5400 = vpack.c.b16 %v4714, %v4707
    %v5401 = vpack.c.b16 %v4715, %v4708
    %v5402 = vpack.c.b16 %v4716, %v4709
    %v5403 = vpack.c.b16 %v4724, %v4717
    %v5404 = vpack.c.b16 %v4725, %v4718
    %v5405 = vpack.c.b16 %v4726, %v4719
    %v5406 = vpack.c.b16 %v4727, %v4720
    %v5407 = vpack.c.b16 %v4728, %v4721
    %v5408 = vpack.c.b16 %v4729, %v4722
    %v5409 = vpack.c.b16 %v4730, %v4723
    %v5410 = vpack.c.b16 %v4738, %v4731
    %v5411 = vpack.c.b16 %v4739, %v4732
    %v5412 = vpack.c.b16 %v4740, %v4733
    %v5413 = vpack.c.b16 %v4741, %v4734
    %v5414 = vpack.c.b16 %v4742, %v4735
    %v5415 = vpack.c.b16 %v4743, %v4736
    %v5416 = vpack.c.b16 %v4744, %v4737
    %v5417 = vpack.c.b16 %v4752, %v4745
    %v5418 = vpack.c.b16 %v4753, %v4746
    %v5419 = vpack.c.b16 %v4754, %v4747
    %v5420 = vpack.c.b16 %v4755, %v4748
    %v5421 = vpack.c.b16 %v4756, %v4749
    %v5422 = vpack.c.b16 %v4757, %v4750
    %v5423 = vpack.c.b16 %v4758, %v4751
    %v5424 = vpack.c.b16 %v4766, %v4759
    %v5425 = vpack.c.b16 %v4767, %v4760
    %v5426 = vpack.c.b16 %v4768, %v4761
    %v5427 = vpack.c.b16 %v4769, %v4762
    %v5428 = vpack.c.b16 %v4770, %v4763
    %v5429 = vpack.c.b16 %v4771, %v4764
    %v5430 = vpack.c.b16 %v4772, %v4765
    %v5431 = vpack.c.b16 %v4780, %v4773
    %v5432 = vpack.c.b16 %v4781, %v4774
    %v5433 = vpack.c.b16 %v4782, %v4775
    %v5434 = vpack.c.b16 %v4783, %v4776
    %v5435 = vpack.c.b16 %v4784, %v4777
    %v5436 = vpack.c.b16 %v4785, %v4778
    %v5437 = vpack.c.b16 %v4786, %v4779
    %v5438 = vpack.c.b16 %v4794, %v4787
    %v5439 = vpack.c.b16 %v4795, %v4788
    %v5440 = vpack.c.b16 %v4796, %v4789
    %v5441 = vpack.c.b16 %v4797, %v4790
    %v5442 = vpack.c.b16 %v4798, %v4791
    %v5443 = vpack.c.b16 %v4799, %v4792
    %v5444 = vpack.c.b16 %v4800, %v4793
    %v5445 = vpack.c.b16 %v4808, %v4801
    %v5446 = vpack.c.b16 %v4809, %v4802
    %v5447 = vpack.c.b16 %v4810, %v4803
    %v5448 = vpack.c.b16 %v4811, %v4804
    %v5449 = vpack.c.b16 %v4812, %v4805
    %v5450 = vpack.c.b16 %v4813, %v4806
    %v5451 = vpack.c.b16 %v4814, %v4807
    %v5452 = vpack.c.b16 %v4822, %v4815
    %v5453 = vpack.c.b16 %v4823, %v4816
    %v5454 = vpack.c.b16 %v4824, %v4817
    %v5455 = vpack.c.b16 %v4825, %v4818
    %v5456 = vpack.c.b16 %v4826, %v4819
    %v5457 = vpack.c.b16 %v4827, %v4820
    %v5458 = vpack.c.b16 %v4828, %v4821
    %v5459 = vpack.c.b16 %v4836, %v4829
    %v5460 = vpack.c.b16 %v4837, %v4830
    %v5461 = vpack.c.b16 %v4838, %v4831
    %v5462 = vpack.c.b16 %v4839, %v4832
    %v5463 = vpack.c.b16 %v4840, %v4833
    %v5464 = vpack.c.b16 %v4841, %v4834
    %v5465 = vpack.c.b16 %v4842, %v4835
    %v5466 = vpack.c.b16 %v4850, %v4843
    %v5467 = vpack.c.b16 %v4851, %v4844
    %v5468 = vpack.c.b16 %v4852, %v4845
    %v5469 = vpack.c.b16 %v4853, %v4846
    %v5470 = vpack.c.b16 %v4854, %v4847
    %v5471 = vpack.c.b16 %v4855, %v4848
    %v5472 = vpack.c.b16 %v4856, %v4849
    %v5473 = vpack.c.b16 %v4864, %v4857
    %v5474 = vpack.c.b16 %v4865, %v4858
    %v5475 = vpack.c.b16 %v4866, %v4859
    %v5476 = vpack.c.b16 %v4867, %v4860
    %v5477 = vpack.c.b16 %v4868, %v4861
    %v5478 = vpack.c.b16 %v4869, %v4862
    %v5479 = vpack.c.b16 %v4870, %v4863
    %v5480 = vpack.c.b16 %v4878, %v4871
    %v5481 = vpack.c.b16 %v4879, %v4872
    %v5482 = vpack.c.b16 %v4880, %v4873
    %v5483 = vpack.c.b16 %v4881, %v4874
    %v5484 = vpack.c.b16 %v4882, %v4875
    %v5485 = vpack.c.b16 %v4883, %v4876
    %v5486 = vpack.c.b16 %v4884, %v4877
    %v5487 = vpack.c.b16 %v4892, %v4885
    %v5488 = vpack.c.b16 %v4893, %v4886
    %v5489 = vpack.c.b16 %v4894, %v4887
    %v5490 = vpack.c.b16 %v4895, %v4888
    %v5491 = vpack.c.b16 %v4896, %v4889
    %v5492 = vpack.c.b16 %v4897, %v4890
    %v5493 = vpack.c.b16 %v4898, %v4891
    %v5494 = vpack.c.b16 %v4906, %v4899
    %v5495 = vpack.c.b16 %v4907, %v4900
    %v5496 = vpack.c.b16 %v4908, %v4901
    %v5497 = vpack.c.b16 %v4909, %v4902
    %v5498 = vpack.c.b16 %v4910, %v4903
    %v5499 = vpack.c.b16 %v4911, %v4904
    %v5500 = vpack.c.b16 %v4912, %v4905
    %v5501 = vpack.c.b16 %v4920, %v4913
    %v5502 = vpack.c.b16 %v4921, %v4914
    %v5503 = vpack.c.b16 %v4922, %v4915
    %v5504 = vpack.c.b16 %v4923, %v4916
    %v5505 = vpack.c.b16 %v4924, %v4917
    %v5506 = vpack.c.b16 %v4925, %v4918
    %v5507 = vpack.c.b16 %v4926, %v4919
    %v5508 = vpack.c.b16 %v4934, %v4927
    %v5509 = vpack.c.b16 %v4935, %v4928
    %v5510 = vpack.c.b16 %v4936, %v4929
    %v5511 = vpack.c.b16 %v4937, %v4930
    %v5512 = vpack.c.b16 %v4938, %v4931
    %v5513 = vpack.c.b16 %v4939, %v4932
    %v5514 = vpack.c.b16 %v4940, %v4933
    %v5515 = vpack.c.b16 %v4948, %v4941
    %v5516 = vpack.c.b16 %v4949, %v4942
    %v5517 = vpack.c.b16 %v4950, %v4943
    %v5518 = vpack.c.b16 %v4951, %v4944
    %v5519 = vpack.c.b16 %v4952, %v4945
    %v5520 = vpack.c.b16 %v4953, %v4946
    %v5521 = vpack.c.b16 %v4954, %v4947
    %v5522 = vpack.c.b16 %v4962, %v4955
    %v5523 = vpack.c.b16 %v4963, %v4956
    %v5524 = vpack.c.b16 %v4964, %v4957
    %v5525 = vpack.c.b16 %v4965, %v4958
    %v5526 = vpack.c.b16 %v4966, %v4959
    %v5527 = vpack.c.b16 %v4967, %v4960
    %v5528 = vpack.c.b16 %v4968, %v4961
    %v5529 = vpack.c.b16 %v4976, %v4969
    %v5530 = vpack.c.b16 %v4977, %v4970
    %v5531 = vpack.c.b16 %v4978, %v4971
    %v5532 = vpack.c.b16 %v4979, %v4972
    %v5533 = vpack.c.b16 %v4980, %v4973
    %v5534 = vpack.c.b16 %v4981, %v4974
    %v5535 = vpack.c.b16 %v4982, %v4975
    %v5536 = vpack.c.b16 %v4990, %v4983
    %v5537 = vpack.c.b16 %v4991, %v4984
    %v5538 = vpack.c.b16 %v4992, %v4985
    %v5539 = vpack.c.b16 %v4993, %v4986
    %v5540 = vpack.c.b16 %v4994, %v4987
    %v5541 = vpack.c.b16 %v4995, %v4988
    %v5542 = vpack.c.b16 %v4996, %v4989
    %v5543 = vpack.c.b16 %v5004, %v4997
    %v5544 = vpack.c.b16 %v5005, %v4998
    %v5545 = vpack.c.b16 %v5006, %v4999
    %v5546 = vpack.c.b16 %v5007, %v5000
    %v5547 = vpack.c.b16 %v5008, %v5001
    %v5548 = vpack.c.b16 %v5009, %v5002
    %v5549 = vpack.c.b16 %v5010, %v5003
    %v5550 = vpack.c.b16 %v5018, %v5011
    %v5551 = vpack.c.b16 %v5019, %v5012
    %v5552 = vpack.c.b16 %v5020, %v5013
    %v5553 = vpack.c.b16 %v5021, %v5014
    %v5554 = vpack.c.b16 %v5022, %v5015
    %v5555 = vpack.c.b16 %v5023, %v5016
    %v5556 = vpack.c.b16 %v5024, %v5017
    %v5557 = vpack.c.b16 %v5032, %v5025
    %v5558 = vpack.c.b16 %v5033, %v5026
    %v5559 = vpack.c.b16 %v5034, %v5027
    %v5560 = vpack.c.b16 %v5035, %v5028
    %v5561 = vpack.c.b16 %v5036, %v5029
    %v5562 = vpack.c.b16 %v5037, %v5030
    %v5563 = vpack.c.b16 %v5038, %v5031
    %v5564 = vpack.c.b16 %v5046, %v5039
    %v5565 = vpack.c.b16 %v5047, %v5040
    %v5566 = vpack.c.b16 %v5048, %v5041
    %v5567 = vpack.c.b16 %v5049, %v5042
    %v5568 = vpack.c.b16 %v5050, %v5043
    %v5569 = vpack.c.b16 %v5051, %v5044
    %v5570 = vpack.c.b16 %v5052, %v5045
    %v5571 = vpack.c.b16 %v5060, %v5053
    %v5572 = vpack.c.b16 %v5061, %v5054
    %v5573 = vpack.c.b16 %v5062, %v5055
    %v5574 = vpack.c.b16 %v5063, %v5056
    %v5575 = vpack.c.b16 %v5064, %v5057
    %v5576 = vpack.c.b16 %v5065, %v5058
    %v5577 = vpack.c.b16 %v5066, %v5059
    %v5578 = vpack.c.b16 %v5074, %v5067
    %v5579 = vpack.c.b16 %v5075, %v5068
    %v5580 = vpack.c.b16 %v5076, %v5069
    %v5581 = vpack.c.b16 %v5077, %v5070
    %v5582 = vpack.c.b16 %v5078, %v5071
    %v5583 = vpack.c.b16 %v5079, %v5072
    %v5584 = vpack.c.b16 %v5080, %v5073
    %v5585 = vpack.c.b16 %v5088, %v5081
    %v5586 = vpack.c.b16 %v5089, %v5082
    %v5587 = vpack.c.b16 %v5090, %v5083
    %v5588 = vpack.c.b16 %v5091, %v5084
    %v5589 = vpack.c.b16 %v5092, %v5085
    %v5590 = vpack.c.b16 %v5093, %v5086
    %v5591 = vpack.c.b16 %v5094, %v5087
    %v5592 = vpack.c.b16 %v5102, %v5095
    %v5593 = vpack.c.b16 %v5103, %v5096
    %v5594 = vpack.c.b16 %v5104, %v5097
    %v5595 = vpack.c.b16 %v5105, %v5098
    %v5596 = vpack.c.b16 %v5106, %v5099
    %v5597 = vpack.c.b16 %v5107, %v5100
    %v5598 = vpack.c.b16 %v5108, %v5101
    %v5599 = vpack.c.b16 %v5116, %v5109
    %v5600 = vpack.c.b16 %v5117, %v5110
    %v5601 = vpack.c.b16 %v5118, %v5111
    %v5602 = vpack.c.b16 %v5119, %v5112
    %v5603 = vpack.c.b16 %v5120, %v5113
    %v5604 = vpack.c.b16 %v5121, %v5114
    %v5605 = vpack.c.b16 %v5122, %v5115
    %v5606 = vpack.c.b16 %v5130, %v5123
    %v5607 = vpack.c.b16 %v5131, %v5124
    %v5608 = vpack.c.b16 %v5132, %v5125
    %v5609 = vpack.c.b16 %v5133, %v5126
    %v5610 = vpack.c.b16 %v5134, %v5127
    %v5611 = vpack.c.b16 %v5135, %v5128
    %v5612 = vpack.c.b16 %v5136, %v5129
    %v5613 = vpack.c.b16 %v5144, %v5137
    %v5614 = vpack.c.b16 %v5145, %v5138
    %v5615 = vpack.c.b16 %v5146, %v5139
    %v5616 = vpack.c.b16 %v5147, %v5140
    %v5617 = vpack.c.b16 %v5148, %v5141
    %v5618 = vpack.c.b16 %v5149, %v5142
    %v5619 = vpack.c.b16 %v5150, %v5143
    %v5620 = vpack.c.b16 %v5158, %v5151
    %v5621 = vpack.c.b16 %v5159, %v5152
    %v5622 = vpack.c.b16 %v5160, %v5153
    %v5623 = vpack.c.b16 %v5161, %v5154
    %v5624 = vpack.c.b16 %v5162, %v5155
    %v5625 = vpack.c.b16 %v5163, %v5156
    %v5626 = vpack.c.b16 %v5164, %v5157
    %v5627 = vpack.c.b16 %v5172, %v5165
    %v5628 = vpack.c.b16 %v5173, %v5166
    %v5629 = vpack.c.b16 %v5174, %v5167
    %v5630 = vpack.c.b16 %v5175, %v5168
    %v5631 = vpack.c.b16 %v5176, %v5169
    %v5632 = vpack.c.b16 %v5177, %v5170
    %v5633 = vpack.c.b16 %v5178, %v5171
    %v5634 = vpack.c.b16 %v5186, %v5179
    %v5635 = vpack.c.b16 %v5187, %v5180
    %v5636 = vpack.c.b16 %v5188, %v5181
    %v5637 = vpack.c.b16 %v5189, %v5182
    %v5638 = vpack.c.b16 %v5190, %v5183
    %v5639 = vpack.c.b16 %v5191, %v5184
    %v5640 = vpack.c.b16 %v5192, %v5185
    %6089 = vmatpush.bf16.msra.mxu0 %v5242
    %6090 = vmatpush.bf16.msra.mxu0 %v5235
    %6091 = vmatpush.bf16.msra.mxu0 %v5228
    %6092 = vmatpush.bf16.msra.mxu0 %v5221
    %6093 = vmatpush.bf16.msra.mxu0 %v5214
    %6094 = vmatpush.bf16.msra.mxu0 %v5207
    %6095 = vmatpush.bf16.msra.mxu0 %v5200
    %6096 = vmatpush.bf16.msra.mxu0 %v5193
    %6097 = vmatmul.bf16.gmra.mxu0 %v3249
    %v6098 = vpop.f32.mrf.mxu0
    %v6099 = vadd.f32 %v3771, %v6098
    %v6100 = vpop.f32.mrf.mxu0
    %6101 = vdwg.mxu0
    %6102 = vmatpush.bf16.msra.mxu0 %v5298
    %6103 = vmatpush.bf16.msra.mxu0 %v5291
    %6104 = vmatpush.bf16.msra.mxu0 %v5284
    %6105 = vmatpush.bf16.msra.mxu0 %v5277
    %6106 = vmatpush.bf16.msra.mxu0 %v5270
    %6107 = vmatpush.bf16.msra.mxu0 %v5263
    %6108 = vmatpush.bf16.msra.mxu0 %v5256
    %6109 = vmatpush.bf16.msra.mxu0 %v5249
    %6110 = vmatmul.bf16.gmra.mxu0 %v3250
    %v6111 = vpop.f32.mrf.mxu0
    %v6112 = vadd.f32 %v6099, %v6111
    %v6113 = vpop.f32.mrf.mxu0
    %6114 = vdwg.mxu0
    %6115 = vmatpush.bf16.msra.mxu0 %v5354
    %6116 = vmatpush.bf16.msra.mxu0 %v5347
    %6117 = vmatpush.bf16.msra.mxu0 %v5340
    %6118 = vmatpush.bf16.msra.mxu0 %v5333
    %6119 = vmatpush.bf16.msra.mxu0 %v5326
    %6120 = vmatpush.bf16.msra.mxu0 %v5319
    %6121 = vmatpush.bf16.msra.mxu0 %v5312
    %6122 = vmatpush.bf16.msra.mxu0 %v5305
    %6123 = vmatmul.bf16.gmra.mxu0 %v3251
    %v6124 = vpop.f32.mrf.mxu0
    %v6125 = vadd.f32 %v6112, %v6124
    %v6126 = vpop.f32.mrf.mxu0
    %6127 = vdwg.mxu0
    %6128 = vmatpush.bf16.msra.mxu0 %v5410
    %6129 = vmatpush.bf16.msra.mxu0 %v5403
    %6130 = vmatpush.bf16.msra.mxu0 %v5396
    %6131 = vmatpush.bf16.msra.mxu0 %v5389
    %6132 = vmatpush.bf16.msra.mxu0 %v5382
    %6133 = vmatpush.bf16.msra.mxu0 %v5375
    %6134 = vmatpush.bf16.msra.mxu0 %v5368
    %6135 = vmatpush.bf16.msra.mxu0 %v5361
    %6136 = vmatmul.bf16.gmra.mxu0 %v3252
    %v6137 = vpop.f32.mrf.mxu0
    %v6138 = vadd.f32 %v6125, %v6137
    %v6139 = vpop.f32.mrf.mxu0
    %6140 = vdwg.mxu0
    %6141 = vmatpush.bf16.msra.mxu0 %v5466
    %6142 = vmatpush.bf16.msra.mxu0 %v5459
    %6143 = vmatpush.bf16.msra.mxu0 %v5452
    %6144 = vmatpush.bf16.msra.mxu0 %v5445
    %6145 = vmatpush.bf16.msra.mxu0 %v5438
    %6146 = vmatpush.bf16.msra.mxu0 %v5431
    %6147 = vmatpush.bf16.msra.mxu0 %v5424
    %6148 = vmatpush.bf16.msra.mxu0 %v5417
    %6149 = vmatmul.bf16.gmra.mxu0 %v3253
    %v6150 = vpop.f32.mrf.mxu0
    %v6151 = vadd.f32 %v6138, %v6150
    %v6152 = vpop.f32.mrf.mxu0
    %6153 = vdwg.mxu0
    %6154 = vmatpush.bf16.msra.mxu0 %v5522
    %6155 = vmatpush.bf16.msra.mxu0 %v5515
    %6156 = vmatpush.bf16.msra.mxu0 %v5508
    %6157 = vmatpush.bf16.msra.mxu0 %v5501
    %6158 = vmatpush.bf16.msra.mxu0 %v5494
    %6159 = vmatpush.bf16.msra.mxu0 %v5487
    %6160 = vmatpush.bf16.msra.mxu0 %v5480
    %6161 = vmatpush.bf16.msra.mxu0 %v5473
    %6162 = vmatmul.bf16.gmra.mxu0 %v3254
    %v6163 = vpop.f32.mrf.mxu0
    %v6164 = vadd.f32 %v6151, %v6163
    %v6165 = vpop.f32.mrf.mxu0
    %6166 = vdwg.mxu0
    %6167 = vmatpush.bf16.msra.mxu0 %v5578
    %6168 = vmatpush.bf16.msra.mxu0 %v5571
    %6169 = vmatpush.bf16.msra.mxu0 %v5564
    %6170 = vmatpush.bf16.msra.mxu0 %v5557
    %6171 = vmatpush.bf16.msra.mxu0 %v5550
    %6172 = vmatpush.bf16.msra.mxu0 %v5543
    %6173 = vmatpush.bf16.msra.mxu0 %v5536
    %6174 = vmatpush.bf16.msra.mxu0 %v5529
    %6175 = vmatmul.bf16.gmra.mxu0 %v3255
    %v6176 = vpop.f32.mrf.mxu0
    %v6177 = vadd.f32 %v6164, %v6176
    %v6178 = vpop.f32.mrf.mxu0
    %6179 = vdwg.mxu0
    %6180 = vmatpush.bf16.msra.mxu0 %v5634
    %6181 = vmatpush.bf16.msra.mxu0 %v5627
    %6182 = vmatpush.bf16.msra.mxu0 %v5620
    %6183 = vmatpush.bf16.msra.mxu0 %v5613
    %6184 = vmatpush.bf16.msra.mxu0 %v5606
    %6185 = vmatpush.bf16.msra.mxu0 %v5599
    %6186 = vmatpush.bf16.msra.mxu0 %v5592
    %6187 = vmatpush.bf16.msra.mxu0 %v5585
    %6188 = vmatmul.bf16.gmra.mxu0 %v3256
    %v6189 = vpop.f32.mrf.mxu0
    %v6190 = vadd.f32 %v6177, %v6189
    %v6191 = vpop.f32.mrf.mxu0
    %6192 = vdwg.mxu0
    %6193 = vmatpush.bf16.msra.mxu0 %v5243
    %6194 = vmatpush.bf16.msra.mxu0 %v5236
    %6195 = vmatpush.bf16.msra.mxu0 %v5229
    %6196 = vmatpush.bf16.msra.mxu0 %v5222
    %6197 = vmatpush.bf16.msra.mxu0 %v5215
    %6198 = vmatpush.bf16.msra.mxu0 %v5208
    %6199 = vmatpush.bf16.msra.mxu0 %v5201
    %6200 = vmatpush.bf16.msra.mxu0 %v5194
    %6201 = vmatmul.bf16.gmra.mxu0 %v3249
    %v6202 = vpop.f32.mrf.mxu0
    %v6203 = vadd.f32 %v3772, %v6202
    %v6204 = vpop.f32.mrf.mxu0
    %6205 = vdwg.mxu0
    %6206 = vmatpush.bf16.msra.mxu0 %v5299
    %6207 = vmatpush.bf16.msra.mxu0 %v5292
    %6208 = vmatpush.bf16.msra.mxu0 %v5285
    %6209 = vmatpush.bf16.msra.mxu0 %v5278
    %6210 = vmatpush.bf16.msra.mxu0 %v5271
    %6211 = vmatpush.bf16.msra.mxu0 %v5264
    %6212 = vmatpush.bf16.msra.mxu0 %v5257
    %6213 = vmatpush.bf16.msra.mxu0 %v5250
    %6214 = vmatmul.bf16.gmra.mxu0 %v3250
    %v6215 = vpop.f32.mrf.mxu0
    %v6216 = vadd.f32 %v6203, %v6215
    %v6217 = vpop.f32.mrf.mxu0
    %6218 = vdwg.mxu0
    %6219 = vmatpush.bf16.msra.mxu0 %v5355
    %6220 = vmatpush.bf16.msra.mxu0 %v5348
    %6221 = vmatpush.bf16.msra.mxu0 %v5341
    %6222 = vmatpush.bf16.msra.mxu0 %v5334
    %6223 = vmatpush.bf16.msra.mxu0 %v5327
    %6224 = vmatpush.bf16.msra.mxu0 %v5320
    %6225 = vmatpush.bf16.msra.mxu0 %v5313
    %6226 = vmatpush.bf16.msra.mxu0 %v5306
    %6227 = vmatmul.bf16.gmra.mxu0 %v3251
    %v6228 = vpop.f32.mrf.mxu0
    %v6229 = vadd.f32 %v6216, %v6228
    %v6230 = vpop.f32.mrf.mxu0
    %6231 = vdwg.mxu0
    %6232 = vmatpush.bf16.msra.mxu0 %v5411
    %6233 = vmatpush.bf16.msra.mxu0 %v5404
    %6234 = vmatpush.bf16.msra.mxu0 %v5397
    %6235 = vmatpush.bf16.msra.mxu0 %v5390
    %6236 = vmatpush.bf16.msra.mxu0 %v5383
    %6237 = vmatpush.bf16.msra.mxu0 %v5376
    %6238 = vmatpush.bf16.msra.mxu0 %v5369
    %6239 = vmatpush.bf16.msra.mxu0 %v5362
    %6240 = vmatmul.bf16.gmra.mxu0 %v3252
    %v6241 = vpop.f32.mrf.mxu0
    %v6242 = vadd.f32 %v6229, %v6241
    %v6243 = vpop.f32.mrf.mxu0
    %6244 = vdwg.mxu0
    %6245 = vmatpush.bf16.msra.mxu0 %v5467
    %6246 = vmatpush.bf16.msra.mxu0 %v5460
    %6247 = vmatpush.bf16.msra.mxu0 %v5453
    %6248 = vmatpush.bf16.msra.mxu0 %v5446
    %6249 = vmatpush.bf16.msra.mxu0 %v5439
    %6250 = vmatpush.bf16.msra.mxu0 %v5432
    %6251 = vmatpush.bf16.msra.mxu0 %v5425
    %6252 = vmatpush.bf16.msra.mxu0 %v5418
    %6253 = vmatmul.bf16.gmra.mxu0 %v3253
    %v6254 = vpop.f32.mrf.mxu0
    %v6255 = vadd.f32 %v6242, %v6254
    %v6256 = vpop.f32.mrf.mxu0
    %6257 = vdwg.mxu0
    %6258 = vmatpush.bf16.msra.mxu0 %v5523
    %6259 = vmatpush.bf16.msra.mxu0 %v5516
    %6260 = vmatpush.bf16.msra.mxu0 %v5509
    %6261 = vmatpush.bf16.msra.mxu0 %v5502
    %6262 = vmatpush.bf16.msra.mxu0 %v5495
    %6263 = vmatpush.bf16.msra.mxu0 %v5488
    %6264 = vmatpush.bf16.msra.mxu0 %v5481
    %6265 = vmatpush.bf16.msra.mxu0 %v5474
    %6266 = vmatmul.bf16.gmra.mxu0 %v3254
    %v6267 = vpop.f32.mrf.mxu0
    %v6268 = vadd.f32 %v6255, %v6267
    %v6269 = vpop.f32.mrf.mxu0
    %6270 = vdwg.mxu0
    %6271 = vmatpush.bf16.msra.mxu0 %v5579
    %6272 = vmatpush.bf16.msra.mxu0 %v5572
    %6273 = vmatpush.bf16.msra.mxu0 %v5565
    %6274 = vmatpush.bf16.msra.mxu0 %v5558
    %6275 = vmatpush.bf16.msra.mxu0 %v5551
    %6276 = vmatpush.bf16.msra.mxu0 %v5544
    %6277 = vmatpush.bf16.msra.mxu0 %v5537
    %6278 = vmatpush.bf16.msra.mxu0 %v5530
    %6279 = vmatmul.bf16.gmra.mxu0 %v3255
    %v6280 = vpop.f32.mrf.mxu0
    %v6281 = vadd.f32 %v6268, %v6280
    %v6282 = vpop.f32.mrf.mxu0
    %6283 = vdwg.mxu0
    %6284 = vmatpush.bf16.msra.mxu0 %v5635
    %6285 = vmatpush.bf16.msra.mxu0 %v5628
    %6286 = vmatpush.bf16.msra.mxu0 %v5621
    %6287 = vmatpush.bf16.msra.mxu0 %v5614
    %6288 = vmatpush.bf16.msra.mxu0 %v5607
    %6289 = vmatpush.bf16.msra.mxu0 %v5600
    %6290 = vmatpush.bf16.msra.mxu0 %v5593
    %6291 = vmatpush.bf16.msra.mxu0 %v5586
    %6292 = vmatmul.bf16.gmra.mxu0 %v3256
    %v6293 = vpop.f32.mrf.mxu0
    %v6294 = vadd.f32 %v6281, %v6293
    %v6295 = vpop.f32.mrf.mxu0
    %6296 = vdwg.mxu0
    %6297 = vmatpush.bf16.msra.mxu0 %v5244
    %6298 = vmatpush.bf16.msra.mxu0 %v5237
    %6299 = vmatpush.bf16.msra.mxu0 %v5230
    %6300 = vmatpush.bf16.msra.mxu0 %v5223
    %6301 = vmatpush.bf16.msra.mxu0 %v5216
    %6302 = vmatpush.bf16.msra.mxu0 %v5209
    %6303 = vmatpush.bf16.msra.mxu0 %v5202
    %6304 = vmatpush.bf16.msra.mxu0 %v5195
    %6305 = vmatmul.bf16.gmra.mxu0 %v3249
    %v6306 = vpop.f32.mrf.mxu0
    %v6307 = vadd.f32 %v3773, %v6306
    %v6308 = vpop.f32.mrf.mxu0
    %6309 = vdwg.mxu0
    %6310 = vmatpush.bf16.msra.mxu0 %v5300
    %6311 = vmatpush.bf16.msra.mxu0 %v5293
    %6312 = vmatpush.bf16.msra.mxu0 %v5286
    %6313 = vmatpush.bf16.msra.mxu0 %v5279
    %6314 = vmatpush.bf16.msra.mxu0 %v5272
    %6315 = vmatpush.bf16.msra.mxu0 %v5265
    %6316 = vmatpush.bf16.msra.mxu0 %v5258
    %6317 = vmatpush.bf16.msra.mxu0 %v5251
    %6318 = vmatmul.bf16.gmra.mxu0 %v3250
    %v6319 = vpop.f32.mrf.mxu0
    %v6320 = vadd.f32 %v6307, %v6319
    %v6321 = vpop.f32.mrf.mxu0
    %6322 = vdwg.mxu0
    %6323 = vmatpush.bf16.msra.mxu0 %v5356
    %6324 = vmatpush.bf16.msra.mxu0 %v5349
    %6325 = vmatpush.bf16.msra.mxu0 %v5342
    %6326 = vmatpush.bf16.msra.mxu0 %v5335
    %6327 = vmatpush.bf16.msra.mxu0 %v5328
    %6328 = vmatpush.bf16.msra.mxu0 %v5321
    %6329 = vmatpush.bf16.msra.mxu0 %v5314
    %6330 = vmatpush.bf16.msra.mxu0 %v5307
    %6331 = vmatmul.bf16.gmra.mxu0 %v3251
    %v6332 = vpop.f32.mrf.mxu0
    %v6333 = vadd.f32 %v6320, %v6332
    %v6334 = vpop.f32.mrf.mxu0
    %6335 = vdwg.mxu0
    %6336 = vmatpush.bf16.msra.mxu0 %v5412
    %6337 = vmatpush.bf16.msra.mxu0 %v5405
    %6338 = vmatpush.bf16.msra.mxu0 %v5398
    %6339 = vmatpush.bf16.msra.mxu0 %v5391
    %6340 = vmatpush.bf16.msra.mxu0 %v5384
    %6341 = vmatpush.bf16.msra.mxu0 %v5377
    %6342 = vmatpush.bf16.msra.mxu0 %v5370
    %6343 = vmatpush.bf16.msra.mxu0 %v5363
    %6344 = vmatmul.bf16.gmra.mxu0 %v3252
    %v6345 = vpop.f32.mrf.mxu0
    %v6346 = vadd.f32 %v6333, %v6345
    %v6347 = vpop.f32.mrf.mxu0
    %6348 = vdwg.mxu0
    %6349 = vmatpush.bf16.msra.mxu0 %v5468
    %6350 = vmatpush.bf16.msra.mxu0 %v5461
    %6351 = vmatpush.bf16.msra.mxu0 %v5454
    %6352 = vmatpush.bf16.msra.mxu0 %v5447
    %6353 = vmatpush.bf16.msra.mxu0 %v5440
    %6354 = vmatpush.bf16.msra.mxu0 %v5433
    %6355 = vmatpush.bf16.msra.mxu0 %v5426
    %6356 = vmatpush.bf16.msra.mxu0 %v5419
    %6357 = vmatmul.bf16.gmra.mxu0 %v3253
    %v6358 = vpop.f32.mrf.mxu0
    %v6359 = vadd.f32 %v6346, %v6358
    %v6360 = vpop.f32.mrf.mxu0
    %6361 = vdwg.mxu0
    %6362 = vmatpush.bf16.msra.mxu0 %v5524
    %6363 = vmatpush.bf16.msra.mxu0 %v5517
    %6364 = vmatpush.bf16.msra.mxu0 %v5510
    %6365 = vmatpush.bf16.msra.mxu0 %v5503
    %6366 = vmatpush.bf16.msra.mxu0 %v5496
    %6367 = vmatpush.bf16.msra.mxu0 %v5489
    %6368 = vmatpush.bf16.msra.mxu0 %v5482
    %6369 = vmatpush.bf16.msra.mxu0 %v5475
    %6370 = vmatmul.bf16.gmra.mxu0 %v3254
    %v6371 = vpop.f32.mrf.mxu0
    %v6372 = vadd.f32 %v6359, %v6371
    %v6373 = vpop.f32.mrf.mxu0
    %6374 = vdwg.mxu0
    %6375 = vmatpush.bf16.msra.mxu0 %v5580
    %6376 = vmatpush.bf16.msra.mxu0 %v5573
    %6377 = vmatpush.bf16.msra.mxu0 %v5566
    %6378 = vmatpush.bf16.msra.mxu0 %v5559
    %6379 = vmatpush.bf16.msra.mxu0 %v5552
    %6380 = vmatpush.bf16.msra.mxu0 %v5545
    %6381 = vmatpush.bf16.msra.mxu0 %v5538
    %6382 = vmatpush.bf16.msra.mxu0 %v5531
    %6383 = vmatmul.bf16.gmra.mxu0 %v3255
    %v6384 = vpop.f32.mrf.mxu0
    %v6385 = vadd.f32 %v6372, %v6384
    %v6386 = vpop.f32.mrf.mxu0
    %6387 = vdwg.mxu0
    %6388 = vmatpush.bf16.msra.mxu0 %v5636
    %6389 = vmatpush.bf16.msra.mxu0 %v5629
    %6390 = vmatpush.bf16.msra.mxu0 %v5622
    %6391 = vmatpush.bf16.msra.mxu0 %v5615
    %6392 = vmatpush.bf16.msra.mxu0 %v5608
    %6393 = vmatpush.bf16.msra.mxu0 %v5601
    %6394 = vmatpush.bf16.msra.mxu0 %v5594
    %6395 = vmatpush.bf16.msra.mxu0 %v5587
    %6396 = vmatmul.bf16.gmra.mxu0 %v3256
    %v6397 = vpop.f32.mrf.mxu0
    %v6398 = vadd.f32 %v6385, %v6397
    %v6399 = vpop.f32.mrf.mxu0
    %6400 = vdwg.mxu0
    %6401 = vmatpush.bf16.msra.mxu0 %v5245
    %6402 = vmatpush.bf16.msra.mxu0 %v5238
    %6403 = vmatpush.bf16.msra.mxu0 %v5231
    %6404 = vmatpush.bf16.msra.mxu0 %v5224
    %6405 = vmatpush.bf16.msra.mxu0 %v5217
    %6406 = vmatpush.bf16.msra.mxu0 %v5210
    %6407 = vmatpush.bf16.msra.mxu0 %v5203
    %6408 = vmatpush.bf16.msra.mxu0 %v5196
    %6409 = vmatmul.bf16.gmra.mxu0 %v3249
    %v6410 = vpop.f32.mrf.mxu0
    %v6411 = vadd.f32 %v3774, %v6410
    %v6412 = vpop.f32.mrf.mxu0
    %6413 = vdwg.mxu0
    %6414 = vmatpush.bf16.msra.mxu0 %v5301
    %6415 = vmatpush.bf16.msra.mxu0 %v5294
    %6416 = vmatpush.bf16.msra.mxu0 %v5287
    %6417 = vmatpush.bf16.msra.mxu0 %v5280
    %6418 = vmatpush.bf16.msra.mxu0 %v5273
    %6419 = vmatpush.bf16.msra.mxu0 %v5266
    %6420 = vmatpush.bf16.msra.mxu0 %v5259
    %6421 = vmatpush.bf16.msra.mxu0 %v5252
    %6422 = vmatmul.bf16.gmra.mxu0 %v3250
    %v6423 = vpop.f32.mrf.mxu0
    %v6424 = vadd.f32 %v6411, %v6423
    %v6425 = vpop.f32.mrf.mxu0
    %6426 = vdwg.mxu0
    %6427 = vmatpush.bf16.msra.mxu0 %v5357
    %6428 = vmatpush.bf16.msra.mxu0 %v5350
    %6429 = vmatpush.bf16.msra.mxu0 %v5343
    %6430 = vmatpush.bf16.msra.mxu0 %v5336
    %6431 = vmatpush.bf16.msra.mxu0 %v5329
    %6432 = vmatpush.bf16.msra.mxu0 %v5322
    %6433 = vmatpush.bf16.msra.mxu0 %v5315
    %6434 = vmatpush.bf16.msra.mxu0 %v5308
    %6435 = vmatmul.bf16.gmra.mxu0 %v3251
    %v6436 = vpop.f32.mrf.mxu0
    %v6437 = vadd.f32 %v6424, %v6436
    %v6438 = vpop.f32.mrf.mxu0
    %6439 = vdwg.mxu0
    %6440 = vmatpush.bf16.msra.mxu0 %v5413
    %6441 = vmatpush.bf16.msra.mxu0 %v5406
    %6442 = vmatpush.bf16.msra.mxu0 %v5399
    %6443 = vmatpush.bf16.msra.mxu0 %v5392
    %6444 = vmatpush.bf16.msra.mxu0 %v5385
    %6445 = vmatpush.bf16.msra.mxu0 %v5378
    %6446 = vmatpush.bf16.msra.mxu0 %v5371
    %6447 = vmatpush.bf16.msra.mxu0 %v5364
    %6448 = vmatmul.bf16.gmra.mxu0 %v3252
    %v6449 = vpop.f32.mrf.mxu0
    %v6450 = vadd.f32 %v6437, %v6449
    %v6451 = vpop.f32.mrf.mxu0
    %6452 = vdwg.mxu0
    %6453 = vmatpush.bf16.msra.mxu0 %v5469
    %6454 = vmatpush.bf16.msra.mxu0 %v5462
    %6455 = vmatpush.bf16.msra.mxu0 %v5455
    %6456 = vmatpush.bf16.msra.mxu0 %v5448
    %6457 = vmatpush.bf16.msra.mxu0 %v5441
    %6458 = vmatpush.bf16.msra.mxu0 %v5434
    %6459 = vmatpush.bf16.msra.mxu0 %v5427
    %6460 = vmatpush.bf16.msra.mxu0 %v5420
    %6461 = vmatmul.bf16.gmra.mxu0 %v3253
    %v6462 = vpop.f32.mrf.mxu0
    %v6463 = vadd.f32 %v6450, %v6462
    %v6464 = vpop.f32.mrf.mxu0
    %6465 = vdwg.mxu0
    %6466 = vmatpush.bf16.msra.mxu0 %v5525
    %6467 = vmatpush.bf16.msra.mxu0 %v5518
    %6468 = vmatpush.bf16.msra.mxu0 %v5511
    %6469 = vmatpush.bf16.msra.mxu0 %v5504
    %6470 = vmatpush.bf16.msra.mxu0 %v5497
    %6471 = vmatpush.bf16.msra.mxu0 %v5490
    %6472 = vmatpush.bf16.msra.mxu0 %v5483
    %6473 = vmatpush.bf16.msra.mxu0 %v5476
    %6474 = vmatmul.bf16.gmra.mxu0 %v3254
    %v6475 = vpop.f32.mrf.mxu0
    %v6476 = vadd.f32 %v6463, %v6475
    %v6477 = vpop.f32.mrf.mxu0
    %6478 = vdwg.mxu0
    %6479 = vmatpush.bf16.msra.mxu0 %v5581
    %6480 = vmatpush.bf16.msra.mxu0 %v5574
    %6481 = vmatpush.bf16.msra.mxu0 %v5567
    %6482 = vmatpush.bf16.msra.mxu0 %v5560
    %6483 = vmatpush.bf16.msra.mxu0 %v5553
    %6484 = vmatpush.bf16.msra.mxu0 %v5546
    %6485 = vmatpush.bf16.msra.mxu0 %v5539
    %6486 = vmatpush.bf16.msra.mxu0 %v5532
    %6487 = vmatmul.bf16.gmra.mxu0 %v3255
    %v6488 = vpop.f32.mrf.mxu0
    %v6489 = vadd.f32 %v6476, %v6488
    %v6490 = vpop.f32.mrf.mxu0
    %6491 = vdwg.mxu0
    %6492 = vmatpush.bf16.msra.mxu0 %v5637
    %6493 = vmatpush.bf16.msra.mxu0 %v5630
    %6494 = vmatpush.bf16.msra.mxu0 %v5623
    %6495 = vmatpush.bf16.msra.mxu0 %v5616
    %6496 = vmatpush.bf16.msra.mxu0 %v5609
    %6497 = vmatpush.bf16.msra.mxu0 %v5602
    %6498 = vmatpush.bf16.msra.mxu0 %v5595
    %6499 = vmatpush.bf16.msra.mxu0 %v5588
    %6500 = vmatmul.bf16.gmra.mxu0 %v3256
    %v6501 = vpop.f32.mrf.mxu0
    %v6502 = vadd.f32 %v6489, %v6501
    %v6503 = vpop.f32.mrf.mxu0
    %6504 = vdwg.mxu0
    %6505 = vmatpush.bf16.msra.mxu0 %v5246
    %6506 = vmatpush.bf16.msra.mxu0 %v5239
    %6507 = vmatpush.bf16.msra.mxu0 %v5232
    %6508 = vmatpush.bf16.msra.mxu0 %v5225
    %6509 = vmatpush.bf16.msra.mxu0 %v5218
    %6510 = vmatpush.bf16.msra.mxu0 %v5211
    %6511 = vmatpush.bf16.msra.mxu0 %v5204
    %6512 = vmatpush.bf16.msra.mxu0 %v5197
    %6513 = vmatmul.bf16.gmra.mxu0 %v3249
    %v6514 = vpop.f32.mrf.mxu0
    %v6515 = vadd.f32 %v3775, %v6514
    %v6516 = vpop.f32.mrf.mxu0
    %6517 = vdwg.mxu0
    %6518 = vmatpush.bf16.msra.mxu0 %v5302
    %6519 = vmatpush.bf16.msra.mxu0 %v5295
    %6520 = vmatpush.bf16.msra.mxu0 %v5288
    %6521 = vmatpush.bf16.msra.mxu0 %v5281
    %6522 = vmatpush.bf16.msra.mxu0 %v5274
    %6523 = vmatpush.bf16.msra.mxu0 %v5267
    %6524 = vmatpush.bf16.msra.mxu0 %v5260
    %6525 = vmatpush.bf16.msra.mxu0 %v5253
    %6526 = vmatmul.bf16.gmra.mxu0 %v3250
    %v6527 = vpop.f32.mrf.mxu0
    %v6528 = vadd.f32 %v6515, %v6527
    %v6529 = vpop.f32.mrf.mxu0
    %6530 = vdwg.mxu0
    %6531 = vmatpush.bf16.msra.mxu0 %v5358
    %6532 = vmatpush.bf16.msra.mxu0 %v5351
    %6533 = vmatpush.bf16.msra.mxu0 %v5344
    %6534 = vmatpush.bf16.msra.mxu0 %v5337
    %6535 = vmatpush.bf16.msra.mxu0 %v5330
    %6536 = vmatpush.bf16.msra.mxu0 %v5323
    %6537 = vmatpush.bf16.msra.mxu0 %v5316
    %6538 = vmatpush.bf16.msra.mxu0 %v5309
    %6539 = vmatmul.bf16.gmra.mxu0 %v3251
    %v6540 = vpop.f32.mrf.mxu0
    %v6541 = vadd.f32 %v6528, %v6540
    %v6542 = vpop.f32.mrf.mxu0
    %6543 = vdwg.mxu0
    %6544 = vmatpush.bf16.msra.mxu0 %v5414
    %6545 = vmatpush.bf16.msra.mxu0 %v5407
    %6546 = vmatpush.bf16.msra.mxu0 %v5400
    %6547 = vmatpush.bf16.msra.mxu0 %v5393
    %6548 = vmatpush.bf16.msra.mxu0 %v5386
    %6549 = vmatpush.bf16.msra.mxu0 %v5379
    %6550 = vmatpush.bf16.msra.mxu0 %v5372
    %6551 = vmatpush.bf16.msra.mxu0 %v5365
    %6552 = vmatmul.bf16.gmra.mxu0 %v3252
    %v6553 = vpop.f32.mrf.mxu0
    %v6554 = vadd.f32 %v6541, %v6553
    %v6555 = vpop.f32.mrf.mxu0
    %6556 = vdwg.mxu0
    %6557 = vmatpush.bf16.msra.mxu0 %v5470
    %6558 = vmatpush.bf16.msra.mxu0 %v5463
    %6559 = vmatpush.bf16.msra.mxu0 %v5456
    %6560 = vmatpush.bf16.msra.mxu0 %v5449
    %6561 = vmatpush.bf16.msra.mxu0 %v5442
    %6562 = vmatpush.bf16.msra.mxu0 %v5435
    %6563 = vmatpush.bf16.msra.mxu0 %v5428
    %6564 = vmatpush.bf16.msra.mxu0 %v5421
    %6565 = vmatmul.bf16.gmra.mxu0 %v3253
    %v6566 = vpop.f32.mrf.mxu0
    %v6567 = vadd.f32 %v6554, %v6566
    %v6568 = vpop.f32.mrf.mxu0
    %6569 = vdwg.mxu0
    %6570 = vmatpush.bf16.msra.mxu0 %v5526
    %6571 = vmatpush.bf16.msra.mxu0 %v5519
    %6572 = vmatpush.bf16.msra.mxu0 %v5512
    %6573 = vmatpush.bf16.msra.mxu0 %v5505
    %6574 = vmatpush.bf16.msra.mxu0 %v5498
    %6575 = vmatpush.bf16.msra.mxu0 %v5491
    %6576 = vmatpush.bf16.msra.mxu0 %v5484
    %6577 = vmatpush.bf16.msra.mxu0 %v5477
    %6578 = vmatmul.bf16.gmra.mxu0 %v3254
    %v6579 = vpop.f32.mrf.mxu0
    %v6580 = vadd.f32 %v6567, %v6579
    %v6581 = vpop.f32.mrf.mxu0
    %6582 = vdwg.mxu0
    %6583 = vmatpush.bf16.msra.mxu0 %v5582
    %6584 = vmatpush.bf16.msra.mxu0 %v5575
    %6585 = vmatpush.bf16.msra.mxu0 %v5568
    %6586 = vmatpush.bf16.msra.mxu0 %v5561
    %6587 = vmatpush.bf16.msra.mxu0 %v5554
    %6588 = vmatpush.bf16.msra.mxu0 %v5547
    %6589 = vmatpush.bf16.msra.mxu0 %v5540
    %6590 = vmatpush.bf16.msra.mxu0 %v5533
    %6591 = vmatmul.bf16.gmra.mxu0 %v3255
    %v6592 = vpop.f32.mrf.mxu0
    %v6593 = vadd.f32 %v6580, %v6592
    %v6594 = vpop.f32.mrf.mxu0
    %6595 = vdwg.mxu0
    %6596 = vmatpush.bf16.msra.mxu0 %v5638
    %6597 = vmatpush.bf16.msra.mxu0 %v5631
    %6598 = vmatpush.bf16.msra.mxu0 %v5624
    %6599 = vmatpush.bf16.msra.mxu0 %v5617
    %6600 = vmatpush.bf16.msra.mxu0 %v5610
    %6601 = vmatpush.bf16.msra.mxu0 %v5603
    %6602 = vmatpush.bf16.msra.mxu0 %v5596
    %6603 = vmatpush.bf16.msra.mxu0 %v5589
    %6604 = vmatmul.bf16.gmra.mxu0 %v3256
    %v6605 = vpop.f32.mrf.mxu0
    %v6606 = vadd.f32 %v6593, %v6605
    %v6607 = vpop.f32.mrf.mxu0
    %6608 = vdwg.mxu0
    %6609 = vmatpush.bf16.msra.mxu0 %v5247
    %6610 = vmatpush.bf16.msra.mxu0 %v5240
    %6611 = vmatpush.bf16.msra.mxu0 %v5233
    %6612 = vmatpush.bf16.msra.mxu0 %v5226
    %6613 = vmatpush.bf16.msra.mxu0 %v5219
    %6614 = vmatpush.bf16.msra.mxu0 %v5212
    %6615 = vmatpush.bf16.msra.mxu0 %v5205
    %6616 = vmatpush.bf16.msra.mxu0 %v5198
    %6617 = vmatmul.bf16.gmra.mxu0 %v3249
    %v6618 = vpop.f32.mrf.mxu0
    %v6619 = vadd.f32 %v3776, %v6618
    %v6620 = vpop.f32.mrf.mxu0
    %6621 = vdwg.mxu0
    %6622 = vmatpush.bf16.msra.mxu0 %v5303
    %6623 = vmatpush.bf16.msra.mxu0 %v5296
    %6624 = vmatpush.bf16.msra.mxu0 %v5289
    %6625 = vmatpush.bf16.msra.mxu0 %v5282
    %6626 = vmatpush.bf16.msra.mxu0 %v5275
    %6627 = vmatpush.bf16.msra.mxu0 %v5268
    %6628 = vmatpush.bf16.msra.mxu0 %v5261
    %6629 = vmatpush.bf16.msra.mxu0 %v5254
    %6630 = vmatmul.bf16.gmra.mxu0 %v3250
    %v6631 = vpop.f32.mrf.mxu0
    %v6632 = vadd.f32 %v6619, %v6631
    %v6633 = vpop.f32.mrf.mxu0
    %6634 = vdwg.mxu0
    %6635 = vmatpush.bf16.msra.mxu0 %v5359
    %6636 = vmatpush.bf16.msra.mxu0 %v5352
    %6637 = vmatpush.bf16.msra.mxu0 %v5345
    %6638 = vmatpush.bf16.msra.mxu0 %v5338
    %6639 = vmatpush.bf16.msra.mxu0 %v5331
    %6640 = vmatpush.bf16.msra.mxu0 %v5324
    %6641 = vmatpush.bf16.msra.mxu0 %v5317
    %6642 = vmatpush.bf16.msra.mxu0 %v5310
    %6643 = vmatmul.bf16.gmra.mxu0 %v3251
    %v6644 = vpop.f32.mrf.mxu0
    %v6645 = vadd.f32 %v6632, %v6644
    %v6646 = vpop.f32.mrf.mxu0
    %6647 = vdwg.mxu0
    %6648 = vmatpush.bf16.msra.mxu0 %v5415
    %6649 = vmatpush.bf16.msra.mxu0 %v5408
    %6650 = vmatpush.bf16.msra.mxu0 %v5401
    %6651 = vmatpush.bf16.msra.mxu0 %v5394
    %6652 = vmatpush.bf16.msra.mxu0 %v5387
    %6653 = vmatpush.bf16.msra.mxu0 %v5380
    %6654 = vmatpush.bf16.msra.mxu0 %v5373
    %6655 = vmatpush.bf16.msra.mxu0 %v5366
    %6656 = vmatmul.bf16.gmra.mxu0 %v3252
    %v6657 = vpop.f32.mrf.mxu0
    %v6658 = vadd.f32 %v6645, %v6657
    %v6659 = vpop.f32.mrf.mxu0
    %6660 = vdwg.mxu0
    %6661 = vmatpush.bf16.msra.mxu0 %v5471
    %6662 = vmatpush.bf16.msra.mxu0 %v5464
    %6663 = vmatpush.bf16.msra.mxu0 %v5457
    %6664 = vmatpush.bf16.msra.mxu0 %v5450
    %6665 = vmatpush.bf16.msra.mxu0 %v5443
    %6666 = vmatpush.bf16.msra.mxu0 %v5436
    %6667 = vmatpush.bf16.msra.mxu0 %v5429
    %6668 = vmatpush.bf16.msra.mxu0 %v5422
    %6669 = vmatmul.bf16.gmra.mxu0 %v3253
    %v6670 = vpop.f32.mrf.mxu0
    %v6671 = vadd.f32 %v6658, %v6670
    %v6672 = vpop.f32.mrf.mxu0
    %6673 = vdwg.mxu0
    %6674 = vmatpush.bf16.msra.mxu0 %v5527
    %6675 = vmatpush.bf16.msra.mxu0 %v5520
    %6676 = vmatpush.bf16.msra.mxu0 %v5513
    %6677 = vmatpush.bf16.msra.mxu0 %v5506
    %6678 = vmatpush.bf16.msra.mxu0 %v5499
    %6679 = vmatpush.bf16.msra.mxu0 %v5492
    %6680 = vmatpush.bf16.msra.mxu0 %v5485
    %6681 = vmatpush.bf16.msra.mxu0 %v5478
    %6682 = vmatmul.bf16.gmra.mxu0 %v3254
    %v6683 = vpop.f32.mrf.mxu0
    %v6684 = vadd.f32 %v6671, %v6683
    %v6685 = vpop.f32.mrf.mxu0
    %6686 = vdwg.mxu0
    %6687 = vmatpush.bf16.msra.mxu0 %v5583
    %6688 = vmatpush.bf16.msra.mxu0 %v5576
    %6689 = vmatpush.bf16.msra.mxu0 %v5569
    %6690 = vmatpush.bf16.msra.mxu0 %v5562
    %6691 = vmatpush.bf16.msra.mxu0 %v5555
    %6692 = vmatpush.bf16.msra.mxu0 %v5548
    %6693 = vmatpush.bf16.msra.mxu0 %v5541
    %6694 = vmatpush.bf16.msra.mxu0 %v5534
    %6695 = vmatmul.bf16.gmra.mxu0 %v3255
    %v6696 = vpop.f32.mrf.mxu0
    %v6697 = vadd.f32 %v6684, %v6696
    %v6698 = vpop.f32.mrf.mxu0
    %6699 = vdwg.mxu0
    %6700 = vmatpush.bf16.msra.mxu0 %v5639
    %6701 = vmatpush.bf16.msra.mxu0 %v5632
    %6702 = vmatpush.bf16.msra.mxu0 %v5625
    %6703 = vmatpush.bf16.msra.mxu0 %v5618
    %6704 = vmatpush.bf16.msra.mxu0 %v5611
    %6705 = vmatpush.bf16.msra.mxu0 %v5604
    %6706 = vmatpush.bf16.msra.mxu0 %v5597
    %6707 = vmatpush.bf16.msra.mxu0 %v5590
    %6708 = vmatmul.bf16.gmra.mxu0 %v3256
    %v6709 = vpop.f32.mrf.mxu0
    %v6710 = vadd.f32 %v6697, %v6709
    %v6711 = vpop.f32.mrf.mxu0
    %6712 = vdwg.mxu0
    %6713 = vmatpush.bf16.msra.mxu0 %v5248
    %6714 = vmatpush.bf16.msra.mxu0 %v5241
    %6715 = vmatpush.bf16.msra.mxu0 %v5234
    %6716 = vmatpush.bf16.msra.mxu0 %v5227
    %6717 = vmatpush.bf16.msra.mxu0 %v5220
    %6718 = vmatpush.bf16.msra.mxu0 %v5213
    %6719 = vmatpush.bf16.msra.mxu0 %v5206
    %6720 = vmatpush.bf16.msra.mxu0 %v5199
    %6721 = vmatmul.bf16.gmra.mxu0 %v3249
    %v6722 = vpop.f32.mrf.mxu0
    %v6723 = vadd.f32 %v3777, %v6722
    %v6724 = vpop.f32.mrf.mxu0
    %6725 = vdwg.mxu0
    %6726 = vmatpush.bf16.msra.mxu0 %v5304
    %6727 = vmatpush.bf16.msra.mxu0 %v5297
    %6728 = vmatpush.bf16.msra.mxu0 %v5290
    %6729 = vmatpush.bf16.msra.mxu0 %v5283
    %6730 = vmatpush.bf16.msra.mxu0 %v5276
    %6731 = vmatpush.bf16.msra.mxu0 %v5269
    %6732 = vmatpush.bf16.msra.mxu0 %v5262
    %6733 = vmatpush.bf16.msra.mxu0 %v5255
    %6734 = vmatmul.bf16.gmra.mxu0 %v3250
    %v6735 = vpop.f32.mrf.mxu0
    %v6736 = vadd.f32 %v6723, %v6735
    %v6737 = vpop.f32.mrf.mxu0
    %6738 = vdwg.mxu0
    %6739 = vmatpush.bf16.msra.mxu0 %v5360
    %6740 = vmatpush.bf16.msra.mxu0 %v5353
    %6741 = vmatpush.bf16.msra.mxu0 %v5346
    %6742 = vmatpush.bf16.msra.mxu0 %v5339
    %6743 = vmatpush.bf16.msra.mxu0 %v5332
    %6744 = vmatpush.bf16.msra.mxu0 %v5325
    %6745 = vmatpush.bf16.msra.mxu0 %v5318
    %6746 = vmatpush.bf16.msra.mxu0 %v5311
    %6747 = vmatmul.bf16.gmra.mxu0 %v3251
    %v6748 = vpop.f32.mrf.mxu0
    %v6749 = vadd.f32 %v6736, %v6748
    %v6750 = vpop.f32.mrf.mxu0
    %6751 = vdwg.mxu0
    %6752 = vmatpush.bf16.msra.mxu0 %v5416
    %6753 = vmatpush.bf16.msra.mxu0 %v5409
    %6754 = vmatpush.bf16.msra.mxu0 %v5402
    %6755 = vmatpush.bf16.msra.mxu0 %v5395
    %6756 = vmatpush.bf16.msra.mxu0 %v5388
    %6757 = vmatpush.bf16.msra.mxu0 %v5381
    %6758 = vmatpush.bf16.msra.mxu0 %v5374
    %6759 = vmatpush.bf16.msra.mxu0 %v5367
    %6760 = vmatmul.bf16.gmra.mxu0 %v3252
    %v6761 = vpop.f32.mrf.mxu0
    %v6762 = vadd.f32 %v6749, %v6761
    %v6763 = vpop.f32.mrf.mxu0
    %6764 = vdwg.mxu0
    %6765 = vmatpush.bf16.msra.mxu0 %v5472
    %6766 = vmatpush.bf16.msra.mxu0 %v5465
    %6767 = vmatpush.bf16.msra.mxu0 %v5458
    %6768 = vmatpush.bf16.msra.mxu0 %v5451
    %6769 = vmatpush.bf16.msra.mxu0 %v5444
    %6770 = vmatpush.bf16.msra.mxu0 %v5437
    %6771 = vmatpush.bf16.msra.mxu0 %v5430
    %6772 = vmatpush.bf16.msra.mxu0 %v5423
    %6773 = vmatmul.bf16.gmra.mxu0 %v3253
    %v6774 = vpop.f32.mrf.mxu0
    %v6775 = vadd.f32 %v6762, %v6774
    %v6776 = vpop.f32.mrf.mxu0
    %6777 = vdwg.mxu0
    %6778 = vmatpush.bf16.msra.mxu0 %v5528
    %6779 = vmatpush.bf16.msra.mxu0 %v5521
    %6780 = vmatpush.bf16.msra.mxu0 %v5514
    %6781 = vmatpush.bf16.msra.mxu0 %v5507
    %6782 = vmatpush.bf16.msra.mxu0 %v5500
    %6783 = vmatpush.bf16.msra.mxu0 %v5493
    %6784 = vmatpush.bf16.msra.mxu0 %v5486
    %6785 = vmatpush.bf16.msra.mxu0 %v5479
    %6786 = vmatmul.bf16.gmra.mxu0 %v3254
    %v6787 = vpop.f32.mrf.mxu0
    %v6788 = vadd.f32 %v6775, %v6787
    %v6789 = vpop.f32.mrf.mxu0
    %6790 = vdwg.mxu0
    %6791 = vmatpush.bf16.msra.mxu0 %v5584
    %6792 = vmatpush.bf16.msra.mxu0 %v5577
    %6793 = vmatpush.bf16.msra.mxu0 %v5570
    %6794 = vmatpush.bf16.msra.mxu0 %v5563
    %6795 = vmatpush.bf16.msra.mxu0 %v5556
    %6796 = vmatpush.bf16.msra.mxu0 %v5549
    %6797 = vmatpush.bf16.msra.mxu0 %v5542
    %6798 = vmatpush.bf16.msra.mxu0 %v5535
    %6799 = vmatmul.bf16.gmra.mxu0 %v3255
    %v6800 = vpop.f32.mrf.mxu0
    %v6801 = vadd.f32 %v6788, %v6800
    %v6802 = vpop.f32.mrf.mxu0
    %6803 = vdwg.mxu0
    %6804 = vmatpush.bf16.msra.mxu0 %v5640
    %6805 = vmatpush.bf16.msra.mxu0 %v5633
    %6806 = vmatpush.bf16.msra.mxu0 %v5626
    %6807 = vmatpush.bf16.msra.mxu0 %v5619
    %6808 = vmatpush.bf16.msra.mxu0 %v5612
    %6809 = vmatpush.bf16.msra.mxu0 %v5605
    %6810 = vmatpush.bf16.msra.mxu0 %v5598
    %6811 = vmatpush.bf16.msra.mxu0 %v5591
    %6812 = vmatmul.bf16.gmra.mxu0 %v3256
    %v6813 = vpop.f32.mrf.mxu0
    %v6814 = vadd.f32 %v6801, %v6813
    %v6815 = vpop.f32.mrf.mxu0
    %6816 = vdwg.mxu0
    %v6817 = vtanh.pop %v6190
    %v6818 = vtanh.pop %v6294
    %v6819 = vtanh.pop %v6398
    %v6820 = vtanh.pop %v6502
    %v6821 = vtanh.pop %v6606
    %v6822 = vtanh.pop %v6710
    %v6823 = vtanh.pop %v6814
    %6824 = vst [vmem:[#allocation17] sm:$0xff] %v6817
    %6825 = vst [vmem:[#allocation17 + $0x8] sm:$0xff] %v6818
    %6826 = vst [vmem:[#allocation17 + $0x10] sm:$0xff] %v6819
    %6827 = vst [vmem:[#allocation17 + $0x18] sm:$0xff] %v6820
    %6828 = vst [vmem:[#allocation17 + $0x20] sm:$0xff] %v6821
    %6829 = vst [vmem:[#allocation17 + $0x28] sm:$0xff] %v6822
    %6830 = vst [vmem:[#allocation17 + $0x30] sm:$0xff] %v6823
    // Predicated region
    $region74: #{tpu_custom_call.1} parent=1 // pred_check
      _
    $region75: #{tpu_custom_call.1} parent=1 // pred_check_branch
      %6832 = sbr.rel (0) target = $region77
    $region76: #{tpu_custom_call.1} parent=1 // pred_region
      %6834 = vsyncadd [#allocation4], 0
      %s6836 = sshll.u32 [#allocation17], 4
      %s6837 = int_to_ptr.vmem [resolvable:$true] %s6836
      %s6838 = sshll.u32 %s9, 4
      %s6839 = int_to_ptr.hbm [resolvable:$true] %s6838
      %6841 = dma.vmem_to_hbm [thread:$0]  %s6837, 896, %s6839, [#allocation4]
    $region77: #{tpu_custom_call.1} parent=1 // pred_fallthru
      _
    // Predicated region
    $region78: #{tpu_custom_call.1} parent=1 // pred_check
      _
    $region79: #{tpu_custom_call.1} parent=1 // pred_check_branch
      %6843 = sbr.rel (0) target = $region81
    $region80: #{tpu_custom_call.1} parent=1 // pred_region
      %6845 = dma.done [#allocation4], 896
    $region81: #{tpu_custom_call.1} parent=1 // pred_fallthru
      _
    %6846 = vsyncpa [#allocation3], 1
    %6847 = vsyncpa [#allocation6], 1
    %6848 = vsyncpa [#allocation9], 1
    %6849 = vsyncpa [#allocation12], 1
    %6850 = vsyncpa [#allocation15], 1
    %6851 = vsyncpa [#allocation4], 1

</llo_original>
